<compile_context>
chip_gen: v7x
topology: tpu7x:2x2x1
jax: 0.10.0
libtpu: 0.0.40
codegen_flags: <defaults>
</compile_context>

<pallas_src>
import functools

import jax
import jax.numpy as jnp
import numpy as np
from jax import lax
from jax.experimental import pallas as pl
from jax.experimental.pallas import tpu as pltpu


def _round_up(x, m):
    return ((x + m - 1) // m) * m


def _sigmoid(x):
    # tanh goes to the EUP (own VLIW slot) -> cheaper than an exact f32 divide.
    return 0.5 * (jnp.tanh(0.5 * x) + 1.0)


def _gates_to_hc(gates, c_prev, hp):
    """gates: (B, 4*hp) lane-aligned; returns (h, c) of shape (B, hp)."""
    i = _sigmoid(gates[:, 0 * hp:1 * hp])
    f = _sigmoid(gates[:, 1 * hp:2 * hp])
    g = jnp.tanh(gates[:, 2 * hp:3 * hp])
    o = _sigmoid(gates[:, 3 * hp:4 * hp])
    c = f * c_prev + i * g
    h = o * jnp.tanh(c)
    return h, c


def _encoder_kernel(
    gx1_ref,    # (T, Bp, 4*H1p)  precomputed x@W_ih1 + b1 (layer-1 input proj)
    whh1_ref,   # (H1p, 4*H1p)    layer-1 recurrent weights (row/gate padded)
    w2cat_ref,  # (H1p+H2p, 4*H2p) stacked [W_ih2 ; W_hh2]  (row/gate padded)
    b2_ref,     # (1, 4*H2p)      b_ih2 + b_hh2 (gate padded)
    out_ref,    # (Bp, H2p)       final hidden state of layer 2
    *, seq_len, h1p, h2p,
):
    bp = out_ref.shape[0]

    # Loop-invariant values: read once, stay in vregs across the unrolled loop.
    whh1 = whh1_ref[...]
    w2cat = w2cat_ref[...]
    b2 = jnp.broadcast_to(b2_ref[...], (bp, 4 * h2p))

    def body(t, carry):
        h1, c1, h2, c2 = carry

        # ---- layer 1: only the recurrent matmul is on the critical path ----
        gates1 = gx1_ref[t] + jnp.dot(h1, whh1, preferred_element_type=jnp.float32)
        h1, c1 = _gates_to_hc(gates1, c1, h1p)

        # ---- layer 2: single fused matmul over [h1 | h2_prev] ----
        x2 = jnp.concatenate([h1, h2], axis=-1)          # (Bp, H1p + H2p)
        gates2 = jnp.dot(x2, w2cat, preferred_element_type=jnp.float32) + b2
        h2, c2 = _gates_to_hc(gates2, c2, h2p)

        return h1, c1, h2, c2

    zeros = lambda n: jnp.zeros((bp, n), jnp.float32)
    carry0 = (zeros(h1p), zeros(h1p), zeros(h2p), zeros(h2p))
    _, _, h2, _ = lax.fori_loop(0, seq_len, body, carry0, unroll=True)

    out_ref[...] = h2


def _pad_gate_cols(w, h, hp):
    """(K, 4*h) -> (K, 4*hp): pad each gate's column block to hp lanes (zeros)."""
    k = w.shape[0]
    w4 = w.reshape(k, 4, h)
    w4 = jnp.pad(w4, ((0, 0), (0, 0), (0, hp - h)))
    return w4.reshape(k, 4 * hp)


def encoder_forward(x, params, *, embedding_dim):
    """x: (batch, seq_len, n_features) f32; returns (batch, embedding_dim)."""
    batch, seq_len, n_features = x.shape
    h1, h2 = 2 * embedding_dim, embedding_dim
    h1p = _round_up(h1, 128)
    h2p = _round_up(h2, 128)
    bp = _round_up(batch, 8)

    # ---- lay out / pad weights (lane-aligned gate blocks, padded K rows) ----
    wih1 = _pad_gate_cols(params["wih1"], h1, h1p)                      # (F, 4*H1p)
    whh1 = _pad_gate_cols(params["whh1"], h1, h1p)                      # (H1, 4*H1p)
    whh1 = jnp.pad(whh1, ((0, h1p - h1), (0, 0)))                       # (H1p, 4*H1p)
    b1 = _pad_gate_cols(params["b1"], h1, h1p)                          # (1, 4*H1p)

    wih2 = _pad_gate_cols(params["wih2"], h2, h2p)                      # (H1, 4*H2p)
    wih2 = jnp.pad(wih2, ((0, h1p - h1), (0, 0)))                       # (H1p, 4*H2p)
    whh2 = _pad_gate_cols(params["whh2"], h2, h2p)                      # (H2, 4*H2p)
    whh2 = jnp.pad(whh2, ((0, h2p - h2), (0, 0)))                       # (H2p, 4*H2p)
    w2cat = jnp.concatenate([wih2, whh2], axis=0)                       # (H1p+H2p, 4*H2p)
    b2 = _pad_gate_cols(params["b2"], h2, h2p)                          # (1, 4*H2p)

    # ---- time-major, batch-padded input; hoisted layer-1 input projection ----
    x_tm = jnp.transpose(x, (1, 0, 2)).astype(jnp.float32)              # (T, B, F)
    x_tm = jnp.pad(x_tm, ((0, 0), (0, bp - batch), (0, 0)))             # (T, Bp, F)
    gx1 = jnp.einsum("tbf,fg->tbg", x_tm, wih1,
                     preferred_element_type=jnp.float32) + b1[None]     # (T, Bp, 4*H1p)

    kernel = functools.partial(_encoder_kernel, seq_len=seq_len, h1p=h1p, h2p=h2p)
    vmem = pl.BlockSpec(memory_space=pltpu.MemorySpace.VMEM)

    out = pl.pallas_call(
        kernel,
        out_shape=jax.ShapeDtypeStruct((bp, h2p), jnp.float32),
        in_specs=[vmem, vmem, vmem, vmem],
        out_specs=vmem,
    )(gx1, whh1, w2cat, b2)

    return out[:batch, :h2]


def init_params(key, n_features, embedding_dim):
    """Deterministic synthetic params, PyTorch LSTM-style uniform init."""
    hidden1 = 2 * embedding_dim
    hidden2 = embedding_dim
    keys = jax.random.split(key, 8)

    def u(k, shape, bound):
        return jax.random.uniform(k, shape, jnp.float32, -bound, bound)

    bnd1 = 1.0 / np.sqrt(hidden1)
    bnd2 = 1.0 / np.sqrt(hidden2)

    # PyTorch stores weight_ih as (4*H, in); we pre-transpose to (in, 4*H).
    wih1 = u(keys[0], (4 * hidden1, n_features), bnd1).T
    whh1 = u(keys[1], (4 * hidden1, hidden1), bnd1).T
    b1 = (u(keys[2], (4 * hidden1,), bnd1) + u(keys[3], (4 * hidden1,), bnd1))[None, :]
    wih2 = u(keys[4], (4 * hidden2, hidden1), bnd2).T
    whh2 = u(keys[5], (4 * hidden2, hidden2), bnd2).T
    b2 = (u(keys[6], (4 * hidden2,), bnd2) + u(keys[7], (4 * hidden2,), bnd2))[None, :]

    return dict(wih1=wih1, whh1=whh1, b1=b1, wih2=wih2, whh2=whh2, b2=b2)


def encoder_reference(x, params, *, embedding_dim):
    """Pure-JAX reference of the same two-LSTM encoder, for validation."""
    batch, seq_len, _ = x.shape
    hidden1, hidden2 = 2 * embedding_dim, embedding_dim

    def cell(x_t, h_prev, c_prev, w_ih, w_hh, b, hidden):
        gates = x_t @ w_ih + h_prev @ w_hh + b
        i = jax.nn.sigmoid(gates[:, 0 * hidden:1 * hidden])
        f = jax.nn.sigmoid(gates[:, 1 * hidden:2 * hidden])
        g = jnp.tanh(gates[:, 2 * hidden:3 * hidden])
        o = jax.nn.sigmoid(gates[:, 3 * hidden:4 * hidden])
        c = f * c_prev + i * g
        h = o * jnp.tanh(c)
        return h, c

    def step(carry, x_t):
        h1, c1, h2, c2 = carry
        h1, c1 = cell(x_t, h1, c1, params["wih1"], params["whh1"], params["b1"], hidden1)
        h2, c2 = cell(h1, h2, c2, params["wih2"], params["whh2"], params["b2"], hidden2)
        return (h1, c1, h2, c2), None

    zeros = lambda h: jnp.zeros((batch, h), jnp.float32)
    carry = (zeros(hidden1), zeros(hidden1), zeros(hidden2), zeros(hidden2))
    x_tm = jnp.transpose(x, (1, 0, 2)).astype(jnp.float32)
    (h1, c1, h2, c2), _ = lax.scan(step, carry, x_tm)
    return h2  # == hidden_n.reshape(-1, embedding_dim) for num_layers=1


if __name__ == "__main__":
    batch, seq_len, n_features, embedding_dim = 2, 8, 4, 32

    key = jax.random.PRNGKey(0)
    k_x, k_p = jax.random.split(key)
    x = jax.random.normal(k_x, (batch, seq_len, n_features), jnp.float32)
    params = init_params(k_p, n_features, embedding_dim)

    out = encoder_forward(x, params, embedding_dim=embedding_dim)
    out = jax.block_until_ready(out)

    ref = encoder_reference(x, params, embedding_dim=embedding_dim)
    np.testing.assert_allclose(np.asarray(out), np.asarray(ref), atol=2e-4, rtol=2e-4)
    assert out.shape == (batch, embedding_dim)

    print("KERNEL_OK")
</pallas_src>

<mosaic_0001>
module attributes {stable_mosaic.version = 11 : i64} {
  func.func @_encoder_kernel(%arg0: memref<8x8x512xf32, #tpu.memory_space<vmem>>, %arg1: memref<128x512xf32, #tpu.memory_space<vmem>>, %arg2: memref<256x512xf32, #tpu.memory_space<vmem>>, %arg3: memref<1x512xf32, #tpu.memory_space<vmem>>, %arg4: memref<8x128xf32, #tpu.memory_space<vmem>>) attributes {dimension_semantics = [], scalar_prefetch = 0 : i64, scratch_operands = 0 : i64, tpu.core_type = #tpu.core_type<tc>} {
    %c0 = arith.constant 0 : index
    %c0_0 = arith.constant 0 : index
    %0 = vector.load %arg1[%c0, %c0_0] : memref<128x512xf32, #tpu.memory_space<vmem>>, vector<128x512xf32>
    %c0_1 = arith.constant 0 : index
    %c0_2 = arith.constant 0 : index
    %1 = vector.load %arg2[%c0_1, %c0_2] : memref<256x512xf32, #tpu.memory_space<vmem>>, vector<256x512xf32>
    %c0_3 = arith.constant 0 : index
    %c0_4 = arith.constant 0 : index
    %2 = vector.load %arg3[%c0_3, %c0_4] : memref<1x512xf32, #tpu.memory_space<vmem>>, vector<1x512xf32>
    %3 = vector.shape_cast %2 : vector<1x512xf32> to vector<1x512xf32>
    %4 = vector.broadcast %3 : vector<1x512xf32> to vector<8x512xf32>
    %cst = arith.constant 0.000000e+00 : f32
    %5 = vector.broadcast %cst : f32 to vector<8x128xf32>
    %cst_5 = arith.constant 0.000000e+00 : f32
    %6 = vector.broadcast %cst_5 : f32 to vector<8x128xf32>
    %cst_6 = arith.constant 0.000000e+00 : f32
    %7 = vector.broadcast %cst_6 : f32 to vector<8x128xf32>
    %cst_7 = arith.constant 0.000000e+00 : f32
    %8 = vector.broadcast %cst_7 : f32 to vector<8x128xf32>
    %c0_i32 = arith.constant 0 : i32
    %9 = arith.index_cast %c0_i32 : i32 to index
    %c0_8 = arith.constant 0 : index
    %c0_9 = arith.constant 0 : index
    %10 = vector.load %arg0[%9, %c0_8, %c0_9] : memref<8x8x512xf32, #tpu.memory_space<vmem>>, vector<1x8x512xf32>
    %11 = vector.shape_cast %10 : vector<1x8x512xf32> to vector<8x512xf32>
    %cst_10 = arith.constant dense<0.000000e+00> : vector<8x512xf32>
    %12 = tpu.matmul %5, %0, %cst_10 {dimension_numbers = #tpu.dot_dimension_numbers<[1], [0], [0], [1], [0, 0, 1, 1], [], []>} : vector<8x128xf32>, vector<128x512xf32>, vector<8x512xf32> -> vector<8x512xf32>
    %13 = arith.addf %11, %12 : vector<8x512xf32>
    %14 = vector.extract_strided_slice %13 {offsets = [0, 0], sizes = [8, 128], strides = [1, 1]} : vector<8x512xf32> to vector<8x128xf32>
    %cst_11 = arith.constant 5.000000e-01 : f32
    %15 = vector.broadcast %cst_11 : f32 to vector<8x128xf32>
    %16 = arith.mulf %15, %14 : vector<8x128xf32>
    %17 = math.tanh %16 : vector<8x128xf32>
    %cst_12 = arith.constant 1.000000e+00 : f32
    %18 = vector.broadcast %cst_12 : f32 to vector<8x128xf32>
    %19 = arith.addf %17, %18 : vector<8x128xf32>
    %cst_13 = arith.constant 5.000000e-01 : f32
    %20 = vector.broadcast %cst_13 : f32 to vector<8x128xf32>
    %21 = arith.mulf %20, %19 : vector<8x128xf32>
    %22 = vector.extract_strided_slice %13 {offsets = [0, 128], sizes = [8, 128], strides = [1, 1]} : vector<8x512xf32> to vector<8x128xf32>
    %cst_14 = arith.constant 5.000000e-01 : f32
    %23 = vector.broadcast %cst_14 : f32 to vector<8x128xf32>
    %24 = arith.mulf %23, %22 : vector<8x128xf32>
    %25 = math.tanh %24 : vector<8x128xf32>
    %cst_15 = arith.constant 1.000000e+00 : f32
    %26 = vector.broadcast %cst_15 : f32 to vector<8x128xf32>
    %27 = arith.addf %25, %26 : vector<8x128xf32>
    %cst_16 = arith.constant 5.000000e-01 : f32
    %28 = vector.broadcast %cst_16 : f32 to vector<8x128xf32>
    %29 = arith.mulf %28, %27 : vector<8x128xf32>
    %30 = vector.extract_strided_slice %13 {offsets = [0, 256], sizes = [8, 128], strides = [1, 1]} : vector<8x512xf32> to vector<8x128xf32>
    %31 = math.tanh %30 : vector<8x128xf32>
    %32 = vector.extract_strided_slice %13 {offsets = [0, 384], sizes = [8, 128], strides = [1, 1]} : vector<8x512xf32> to vector<8x128xf32>
    %cst_17 = arith.constant 5.000000e-01 : f32
    %33 = vector.broadcast %cst_17 : f32 to vector<8x128xf32>
    %34 = arith.mulf %33, %32 : vector<8x128xf32>
    %35 = math.tanh %34 : vector<8x128xf32>
    %cst_18 = arith.constant 1.000000e+00 : f32
    %36 = vector.broadcast %cst_18 : f32 to vector<8x128xf32>
    %37 = arith.addf %35, %36 : vector<8x128xf32>
    %cst_19 = arith.constant 5.000000e-01 : f32
    %38 = vector.broadcast %cst_19 : f32 to vector<8x128xf32>
    %39 = arith.mulf %38, %37 : vector<8x128xf32>
    %40 = arith.mulf %29, %6 : vector<8x128xf32>
    %41 = arith.mulf %21, %31 : vector<8x128xf32>
    %42 = arith.addf %40, %41 : vector<8x128xf32>
    %43 = math.tanh %42 : vector<8x128xf32>
    %44 = arith.mulf %39, %43 : vector<8x128xf32>
    %45 = tpu.concatenate %44, %7 in 1 : vector<8x128xf32>, vector<8x128xf32> -> vector<8x256xf32>
    %cst_20 = arith.constant dense<0.000000e+00> : vector<8x512xf32>
    %46 = tpu.matmul %45, %1, %cst_20 {dimension_numbers = #tpu.dot_dimension_numbers<[1], [0], [0], [1], [0, 0, 1, 1], [], []>} : vector<8x256xf32>, vector<256x512xf32>, vector<8x512xf32> -> vector<8x512xf32>
    %47 = arith.addf %46, %4 : vector<8x512xf32>
    %48 = vector.extract_strided_slice %47 {offsets = [0, 0], sizes = [8, 128], strides = [1, 1]} : vector<8x512xf32> to vector<8x128xf32>
    %cst_21 = arith.constant 5.000000e-01 : f32
    %49 = vector.broadcast %cst_21 : f32 to vector<8x128xf32>
    %50 = arith.mulf %49, %48 : vector<8x128xf32>
    %51 = math.tanh %50 : vector<8x128xf32>
    %cst_22 = arith.constant 1.000000e+00 : f32
    %52 = vector.broadcast %cst_22 : f32 to vector<8x128xf32>
    %53 = arith.addf %51, %52 : vector<8x128xf32>
    %cst_23 = arith.constant 5.000000e-01 : f32
    %54 = vector.broadcast %cst_23 : f32 to vector<8x128xf32>
    %55 = arith.mulf %54, %53 : vector<8x128xf32>
    %56 = vector.extract_strided_slice %47 {offsets = [0, 128], sizes = [8, 128], strides = [1, 1]} : vector<8x512xf32> to vector<8x128xf32>
    %cst_24 = arith.constant 5.000000e-01 : f32
    %57 = vector.broadcast %cst_24 : f32 to vector<8x128xf32>
    %58 = arith.mulf %57, %56 : vector<8x128xf32>
    %59 = math.tanh %58 : vector<8x128xf32>
    %cst_25 = arith.constant 1.000000e+00 : f32
    %60 = vector.broadcast %cst_25 : f32 to vector<8x128xf32>
    %61 = arith.addf %59, %60 : vector<8x128xf32>
    %cst_26 = arith.constant 5.000000e-01 : f32
    %62 = vector.broadcast %cst_26 : f32 to vector<8x128xf32>
    %63 = arith.mulf %62, %61 : vector<8x128xf32>
    %64 = vector.extract_strided_slice %47 {offsets = [0, 256], sizes = [8, 128], strides = [1, 1]} : vector<8x512xf32> to vector<8x128xf32>
    %65 = math.tanh %64 : vector<8x128xf32>
    %66 = vector.extract_strided_slice %47 {offsets = [0, 384], sizes = [8, 128], strides = [1, 1]} : vector<8x512xf32> to vector<8x128xf32>
    %cst_27 = arith.constant 5.000000e-01 : f32
    %67 = vector.broadcast %cst_27 : f32 to vector<8x128xf32>
    %68 = arith.mulf %67, %66 : vector<8x128xf32>
    %69 = math.tanh %68 : vector<8x128xf32>
    %cst_28 = arith.constant 1.000000e+00 : f32
    %70 = vector.broadcast %cst_28 : f32 to vector<8x128xf32>
    %71 = arith.addf %69, %70 : vector<8x128xf32>
    %cst_29 = arith.constant 5.000000e-01 : f32
    %72 = vector.broadcast %cst_29 : f32 to vector<8x128xf32>
    %73 = arith.mulf %72, %71 : vector<8x128xf32>
    %74 = arith.mulf %63, %8 : vector<8x128xf32>
    %75 = arith.mulf %55, %65 : vector<8x128xf32>
    %76 = arith.addf %74, %75 : vector<8x128xf32>
    %77 = math.tanh %76 : vector<8x128xf32>
    %78 = arith.mulf %73, %77 : vector<8x128xf32>
    %c1_i32 = arith.constant 1 : i32
    %79 = arith.index_cast %c1_i32 : i32 to index
    %c0_30 = arith.constant 0 : index
    %c0_31 = arith.constant 0 : index
    %80 = vector.load %arg0[%79, %c0_30, %c0_31] : memref<8x8x512xf32, #tpu.memory_space<vmem>>, vector<1x8x512xf32>
    %81 = vector.shape_cast %80 : vector<1x8x512xf32> to vector<8x512xf32>
    %cst_32 = arith.constant dense<0.000000e+00> : vector<8x512xf32>
    %82 = tpu.matmul %44, %0, %cst_32 {dimension_numbers = #tpu.dot_dimension_numbers<[1], [0], [0], [1], [0, 0, 1, 1], [], []>} : vector<8x128xf32>, vector<128x512xf32>, vector<8x512xf32> -> vector<8x512xf32>
    %83 = arith.addf %81, %82 : vector<8x512xf32>
    %84 = vector.extract_strided_slice %83 {offsets = [0, 0], sizes = [8, 128], strides = [1, 1]} : vector<8x512xf32> to vector<8x128xf32>
    %cst_33 = arith.constant 5.000000e-01 : f32
    %85 = vector.broadcast %cst_33 : f32 to vector<8x128xf32>
    %86 = arith.mulf %85, %84 : vector<8x128xf32>
    %87 = math.tanh %86 : vector<8x128xf32>
    %cst_34 = arith.constant 1.000000e+00 : f32
    %88 = vector.broadcast %cst_34 : f32 to vector<8x128xf32>
    %89 = arith.addf %87, %88 : vector<8x128xf32>
    %cst_35 = arith.constant 5.000000e-01 : f32
    %90 = vector.broadcast %cst_35 : f32 to vector<8x128xf32>
    %91 = arith.mulf %90, %89 : vector<8x128xf32>
    %92 = vector.extract_strided_slice %83 {offsets = [0, 128], sizes = [8, 128], strides = [1, 1]} : vector<8x512xf32> to vector<8x128xf32>
    %cst_36 = arith.constant 5.000000e-01 : f32
    %93 = vector.broadcast %cst_36 : f32 to vector<8x128xf32>
    %94 = arith.mulf %93, %92 : vector<8x128xf32>
    %95 = math.tanh %94 : vector<8x128xf32>
    %cst_37 = arith.constant 1.000000e+00 : f32
    %96 = vector.broadcast %cst_37 : f32 to vector<8x128xf32>
    %97 = arith.addf %95, %96 : vector<8x128xf32>
    %cst_38 = arith.constant 5.000000e-01 : f32
    %98 = vector.broadcast %cst_38 : f32 to vector<8x128xf32>
    %99 = arith.mulf %98, %97 : vector<8x128xf32>
    %100 = vector.extract_strided_slice %83 {offsets = [0, 256], sizes = [8, 128], strides = [1, 1]} : vector<8x512xf32> to vector<8x128xf32>
    %101 = math.tanh %100 : vector<8x128xf32>
    %102 = vector.extract_strided_slice %83 {offsets = [0, 384], sizes = [8, 128], strides = [1, 1]} : vector<8x512xf32> to vector<8x128xf32>
    %cst_39 = arith.constant 5.000000e-01 : f32
    %103 = vector.broadcast %cst_39 : f32 to vector<8x128xf32>
    %104 = arith.mulf %103, %102 : vector<8x128xf32>
    %105 = math.tanh %104 : vector<8x128xf32>
    %cst_40 = arith.constant 1.000000e+00 : f32
    %106 = vector.broadcast %cst_40 : f32 to vector<8x128xf32>
    %107 = arith.addf %105, %106 : vector<8x128xf32>
    %cst_41 = arith.constant 5.000000e-01 : f32
    %108 = vector.broadcast %cst_41 : f32 to vector<8x128xf32>
    %109 = arith.mulf %108, %107 : vector<8x128xf32>
    %110 = arith.mulf %99, %42 : vector<8x128xf32>
    %111 = arith.mulf %91, %101 : vector<8x128xf32>
    %112 = arith.addf %110, %111 : vector<8x128xf32>
    %113 = math.tanh %112 : vector<8x128xf32>
    %114 = arith.mulf %109, %113 : vector<8x128xf32>
    %115 = tpu.concatenate %114, %78 in 1 : vector<8x128xf32>, vector<8x128xf32> -> vector<8x256xf32>
    %cst_42 = arith.constant dense<0.000000e+00> : vector<8x512xf32>
    %116 = tpu.matmul %115, %1, %cst_42 {dimension_numbers = #tpu.dot_dimension_numbers<[1], [0], [0], [1], [0, 0, 1, 1], [], []>} : vector<8x256xf32>, vector<256x512xf32>, vector<8x512xf32> -> vector<8x512xf32>
    %117 = arith.addf %116, %4 : vector<8x512xf32>
    %118 = vector.extract_strided_slice %117 {offsets = [0, 0], sizes = [8, 128], strides = [1, 1]} : vector<8x512xf32> to vector<8x128xf32>
    %cst_43 = arith.constant 5.000000e-01 : f32
    %119 = vector.broadcast %cst_43 : f32 to vector<8x128xf32>
    %120 = arith.mulf %119, %118 : vector<8x128xf32>
    %121 = math.tanh %120 : vector<8x128xf32>
    %cst_44 = arith.constant 1.000000e+00 : f32
    %122 = vector.broadcast %cst_44 : f32 to vector<8x128xf32>
    %123 = arith.addf %121, %122 : vector<8x128xf32>
    %cst_45 = arith.constant 5.000000e-01 : f32
    %124 = vector.broadcast %cst_45 : f32 to vector<8x128xf32>
    %125 = arith.mulf %124, %123 : vector<8x128xf32>
    %126 = vector.extract_strided_slice %117 {offsets = [0, 128], sizes = [8, 128], strides = [1, 1]} : vector<8x512xf32> to vector<8x128xf32>
    %cst_46 = arith.constant 5.000000e-01 : f32
    %127 = vector.broadcast %cst_46 : f32 to vector<8x128xf32>
    %128 = arith.mulf %127, %126 : vector<8x128xf32>
    %129 = math.tanh %128 : vector<8x128xf32>
    %cst_47 = arith.constant 1.000000e+00 : f32
    %130 = vector.broadcast %cst_47 : f32 to vector<8x128xf32>
    %131 = arith.addf %129, %130 : vector<8x128xf32>
    %cst_48 = arith.constant 5.000000e-01 : f32
    %132 = vector.broadcast %cst_48 : f32 to vector<8x128xf32>
    %133 = arith.mulf %132, %131 : vector<8x128xf32>
    %134 = vector.extract_strided_slice %117 {offsets = [0, 256], sizes = [8, 128], strides = [1, 1]} : vector<8x512xf32> to vector<8x128xf32>
    %135 = math.tanh %134 : vector<8x128xf32>
    %136 = vector.extract_strided_slice %117 {offsets = [0, 384], sizes = [8, 128], strides = [1, 1]} : vector<8x512xf32> to vector<8x128xf32>
    %cst_49 = arith.constant 5.000000e-01 : f32
    %137 = vector.broadcast %cst_49 : f32 to vector<8x128xf32>
    %138 = arith.mulf %137, %136 : vector<8x128xf32>
    %139 = math.tanh %138 : vector<8x128xf32>
    %cst_50 = arith.constant 1.000000e+00 : f32
    %140 = vector.broadcast %cst_50 : f32 to vector<8x128xf32>
    %141 = arith.addf %139, %140 : vector<8x128xf32>
    %cst_51 = arith.constant 5.000000e-01 : f32
    %142 = vector.broadcast %cst_51 : f32 to vector<8x128xf32>
    %143 = arith.mulf %142, %141 : vector<8x128xf32>
    %144 = arith.mulf %133, %76 : vector<8x128xf32>
    %145 = arith.mulf %125, %135 : vector<8x128xf32>
    %146 = arith.addf %144, %145 : vector<8x128xf32>
    %147 = math.tanh %146 : vector<8x128xf32>
    %148 = arith.mulf %143, %147 : vector<8x128xf32>
    %c2_i32 = arith.constant 2 : i32
    %149 = arith.index_cast %c2_i32 : i32 to index
    %c0_52 = arith.constant 0 : index
    %c0_53 = arith.constant 0 : index
    %150 = vector.load %arg0[%149, %c0_52, %c0_53] : memref<8x8x512xf32, #tpu.memory_space<vmem>>, vector<1x8x512xf32>
    %151 = vector.shape_cast %150 : vector<1x8x512xf32> to vector<8x512xf32>
    %cst_54 = arith.constant dense<0.000000e+00> : vector<8x512xf32>
    %152 = tpu.matmul %114, %0, %cst_54 {dimension_numbers = #tpu.dot_dimension_numbers<[1], [0], [0], [1], [0, 0, 1, 1], [], []>} : vector<8x128xf32>, vector<128x512xf32>, vector<8x512xf32> -> vector<8x512xf32>
    %153 = arith.addf %151, %152 : vector<8x512xf32>
    %154 = vector.extract_strided_slice %153 {offsets = [0, 0], sizes = [8, 128], strides = [1, 1]} : vector<8x512xf32> to vector<8x128xf32>
    %cst_55 = arith.constant 5.000000e-01 : f32
    %155 = vector.broadcast %cst_55 : f32 to vector<8x128xf32>
    %156 = arith.mulf %155, %154 : vector<8x128xf32>
    %157 = math.tanh %156 : vector<8x128xf32>
    %cst_56 = arith.constant 1.000000e+00 : f32
    %158 = vector.broadcast %cst_56 : f32 to vector<8x128xf32>
    %159 = arith.addf %157, %158 : vector<8x128xf32>
    %cst_57 = arith.constant 5.000000e-01 : f32
    %160 = vector.broadcast %cst_57 : f32 to vector<8x128xf32>
    %161 = arith.mulf %160, %159 : vector<8x128xf32>
    %162 = vector.extract_strided_slice %153 {offsets = [0, 128], sizes = [8, 128], strides = [1, 1]} : vector<8x512xf32> to vector<8x128xf32>
    %cst_58 = arith.constant 5.000000e-01 : f32
    %163 = vector.broadcast %cst_58 : f32 to vector<8x128xf32>
    %164 = arith.mulf %163, %162 : vector<8x128xf32>
    %165 = math.tanh %164 : vector<8x128xf32>
    %cst_59 = arith.constant 1.000000e+00 : f32
    %166 = vector.broadcast %cst_59 : f32 to vector<8x128xf32>
    %167 = arith.addf %165, %166 : vector<8x128xf32>
    %cst_60 = arith.constant 5.000000e-01 : f32
    %168 = vector.broadcast %cst_60 : f32 to vector<8x128xf32>
    %169 = arith.mulf %168, %167 : vector<8x128xf32>
    %170 = vector.extract_strided_slice %153 {offsets = [0, 256], sizes = [8, 128], strides = [1, 1]} : vector<8x512xf32> to vector<8x128xf32>
    %171 = math.tanh %170 : vector<8x128xf32>
    %172 = vector.extract_strided_slice %153 {offsets = [0, 384], sizes = [8, 128], strides = [1, 1]} : vector<8x512xf32> to vector<8x128xf32>
    %cst_61 = arith.constant 5.000000e-01 : f32
    %173 = vector.broadcast %cst_61 : f32 to vector<8x128xf32>
    %174 = arith.mulf %173, %172 : vector<8x128xf32>
    %175 = math.tanh %174 : vector<8x128xf32>
    %cst_62 = arith.constant 1.000000e+00 : f32
    %176 = vector.broadcast %cst_62 : f32 to vector<8x128xf32>
    %177 = arith.addf %175, %176 : vector<8x128xf32>
    %cst_63 = arith.constant 5.000000e-01 : f32
    %178 = vector.broadcast %cst_63 : f32 to vector<8x128xf32>
    %179 = arith.mulf %178, %177 : vector<8x128xf32>
    %180 = arith.mulf %169, %112 : vector<8x128xf32>
    %181 = arith.mulf %161, %171 : vector<8x128xf32>
    %182 = arith.addf %180, %181 : vector<8x128xf32>
    %183 = math.tanh %182 : vector<8x128xf32>
    %184 = arith.mulf %179, %183 : vector<8x128xf32>
    %185 = tpu.concatenate %184, %148 in 1 : vector<8x128xf32>, vector<8x128xf32> -> vector<8x256xf32>
    %cst_64 = arith.constant dense<0.000000e+00> : vector<8x512xf32>
    %186 = tpu.matmul %185, %1, %cst_64 {dimension_numbers = #tpu.dot_dimension_numbers<[1], [0], [0], [1], [0, 0, 1, 1], [], []>} : vector<8x256xf32>, vector<256x512xf32>, vector<8x512xf32> -> vector<8x512xf32>
    %187 = arith.addf %186, %4 : vector<8x512xf32>
    %188 = vector.extract_strided_slice %187 {offsets = [0, 0], sizes = [8, 128], strides = [1, 1]} : vector<8x512xf32> to vector<8x128xf32>
    %cst_65 = arith.constant 5.000000e-01 : f32
    %189 = vector.broadcast %cst_65 : f32 to vector<8x128xf32>
    %190 = arith.mulf %189, %188 : vector<8x128xf32>
    %191 = math.tanh %190 : vector<8x128xf32>
    %cst_66 = arith.constant 1.000000e+00 : f32
    %192 = vector.broadcast %cst_66 : f32 to vector<8x128xf32>
    %193 = arith.addf %191, %192 : vector<8x128xf32>
    %cst_67 = arith.constant 5.000000e-01 : f32
    %194 = vector.broadcast %cst_67 : f32 to vector<8x128xf32>
    %195 = arith.mulf %194, %193 : vector<8x128xf32>
    %196 = vector.extract_strided_slice %187 {offsets = [0, 128], sizes = [8, 128], strides = [1, 1]} : vector<8x512xf32> to vector<8x128xf32>
    %cst_68 = arith.constant 5.000000e-01 : f32
    %197 = vector.broadcast %cst_68 : f32 to vector<8x128xf32>
    %198 = arith.mulf %197, %196 : vector<8x128xf32>
    %199 = math.tanh %198 : vector<8x128xf32>
    %cst_69 = arith.constant 1.000000e+00 : f32
    %200 = vector.broadcast %cst_69 : f32 to vector<8x128xf32>
    %201 = arith.addf %199, %200 : vector<8x128xf32>
    %cst_70 = arith.constant 5.000000e-01 : f32
    %202 = vector.broadcast %cst_70 : f32 to vector<8x128xf32>
    %203 = arith.mulf %202, %201 : vector<8x128xf32>
    %204 = vector.extract_strided_slice %187 {offsets = [0, 256], sizes = [8, 128], strides = [1, 1]} : vector<8x512xf32> to vector<8x128xf32>
    %205 = math.tanh %204 : vector<8x128xf32>
    %206 = vector.extract_strided_slice %187 {offsets = [0, 384], sizes = [8, 128], strides = [1, 1]} : vector<8x512xf32> to vector<8x128xf32>
    %cst_71 = arith.constant 5.000000e-01 : f32
    %207 = vector.broadcast %cst_71 : f32 to vector<8x128xf32>
    %208 = arith.mulf %207, %206 : vector<8x128xf32>
    %209 = math.tanh %208 : vector<8x128xf32>
    %cst_72 = arith.constant 1.000000e+00 : f32
    %210 = vector.broadcast %cst_72 : f32 to vector<8x128xf32>
    %211 = arith.addf %209, %210 : vector<8x128xf32>
    %cst_73 = arith.constant 5.000000e-01 : f32
    %212 = vector.broadcast %cst_73 : f32 to vector<8x128xf32>
    %213 = arith.mulf %212, %211 : vector<8x128xf32>
    %214 = arith.mulf %203, %146 : vector<8x128xf32>
    %215 = arith.mulf %195, %205 : vector<8x128xf32>
    %216 = arith.addf %214, %215 : vector<8x128xf32>
    %217 = math.tanh %216 : vector<8x128xf32>
    %218 = arith.mulf %213, %217 : vector<8x128xf32>
    %c3_i32 = arith.constant 3 : i32
    %219 = arith.index_cast %c3_i32 : i32 to index
    %c0_74 = arith.constant 0 : index
    %c0_75 = arith.constant 0 : index
    %220 = vector.load %arg0[%219, %c0_74, %c0_75] : memref<8x8x512xf32, #tpu.memory_space<vmem>>, vector<1x8x512xf32>
    %221 = vector.shape_cast %220 : vector<1x8x512xf32> to vector<8x512xf32>
    %cst_76 = arith.constant dense<0.000000e+00> : vector<8x512xf32>
    %222 = tpu.matmul %184, %0, %cst_76 {dimension_numbers = #tpu.dot_dimension_numbers<[1], [0], [0], [1], [0, 0, 1, 1], [], []>} : vector<8x128xf32>, vector<128x512xf32>, vector<8x512xf32> -> vector<8x512xf32>
    %223 = arith.addf %221, %222 : vector<8x512xf32>
    %224 = vector.extract_strided_slice %223 {offsets = [0, 0], sizes = [8, 128], strides = [1, 1]} : vector<8x512xf32> to vector<8x128xf32>
    %cst_77 = arith.constant 5.000000e-01 : f32
    %225 = vector.broadcast %cst_77 : f32 to vector<8x128xf32>
    %226 = arith.mulf %225, %224 : vector<8x128xf32>
    %227 = math.tanh %226 : vector<8x128xf32>
    %cst_78 = arith.constant 1.000000e+00 : f32
    %228 = vector.broadcast %cst_78 : f32 to vector<8x128xf32>
    %229 = arith.addf %227, %228 : vector<8x128xf32>
    %cst_79 = arith.constant 5.000000e-01 : f32
    %230 = vector.broadcast %cst_79 : f32 to vector<8x128xf32>
    %231 = arith.mulf %230, %229 : vector<8x128xf32>
    %232 = vector.extract_strided_slice %223 {offsets = [0, 128], sizes = [8, 128], strides = [1, 1]} : vector<8x512xf32> to vector<8x128xf32>
    %cst_80 = arith.constant 5.000000e-01 : f32
    %233 = vector.broadcast %cst_80 : f32 to vector<8x128xf32>
    %234 = arith.mulf %233, %232 : vector<8x128xf32>
    %235 = math.tanh %234 : vector<8x128xf32>
    %cst_81 = arith.constant 1.000000e+00 : f32
    %236 = vector.broadcast %cst_81 : f32 to vector<8x128xf32>
    %237 = arith.addf %235, %236 : vector<8x128xf32>
    %cst_82 = arith.constant 5.000000e-01 : f32
    %238 = vector.broadcast %cst_82 : f32 to vector<8x128xf32>
    %239 = arith.mulf %238, %237 : vector<8x128xf32>
    %240 = vector.extract_strided_slice %223 {offsets = [0, 256], sizes = [8, 128], strides = [1, 1]} : vector<8x512xf32> to vector<8x128xf32>
    %241 = math.tanh %240 : vector<8x128xf32>
    %242 = vector.extract_strided_slice %223 {offsets = [0, 384], sizes = [8, 128], strides = [1, 1]} : vector<8x512xf32> to vector<8x128xf32>
    %cst_83 = arith.constant 5.000000e-01 : f32
    %243 = vector.broadcast %cst_83 : f32 to vector<8x128xf32>
    %244 = arith.mulf %243, %242 : vector<8x128xf32>
    %245 = math.tanh %244 : vector<8x128xf32>
    %cst_84 = arith.constant 1.000000e+00 : f32
    %246 = vector.broadcast %cst_84 : f32 to vector<8x128xf32>
    %247 = arith.addf %245, %246 : vector<8x128xf32>
    %cst_85 = arith.constant 5.000000e-01 : f32
    %248 = vector.broadcast %cst_85 : f32 to vector<8x128xf32>
    %249 = arith.mulf %248, %247 : vector<8x128xf32>
    %250 = arith.mulf %239, %182 : vector<8x128xf32>
    %251 = arith.mulf %231, %241 : vector<8x128xf32>
    %252 = arith.addf %250, %251 : vector<8x128xf32>
    %253 = math.tanh %252 : vector<8x128xf32>
    %254 = arith.mulf %249, %253 : vector<8x128xf32>
    %255 = tpu.concatenate %254, %218 in 1 : vector<8x128xf32>, vector<8x128xf32> -> vector<8x256xf32>
    %cst_86 = arith.constant dense<0.000000e+00> : vector<8x512xf32>
    %256 = tpu.matmul %255, %1, %cst_86 {dimension_numbers = #tpu.dot_dimension_numbers<[1], [0], [0], [1], [0, 0, 1, 1], [], []>} : vector<8x256xf32>, vector<256x512xf32>, vector<8x512xf32> -> vector<8x512xf32>
    %257 = arith.addf %256, %4 : vector<8x512xf32>
    %258 = vector.extract_strided_slice %257 {offsets = [0, 0], sizes = [8, 128], strides = [1, 1]} : vector<8x512xf32> to vector<8x128xf32>
    %cst_87 = arith.constant 5.000000e-01 : f32
    %259 = vector.broadcast %cst_87 : f32 to vector<8x128xf32>
    %260 = arith.mulf %259, %258 : vector<8x128xf32>
    %261 = math.tanh %260 : vector<8x128xf32>
    %cst_88 = arith.constant 1.000000e+00 : f32
    %262 = vector.broadcast %cst_88 : f32 to vector<8x128xf32>
    %263 = arith.addf %261, %262 : vector<8x128xf32>
    %cst_89 = arith.constant 5.000000e-01 : f32
    %264 = vector.broadcast %cst_89 : f32 to vector<8x128xf32>
    %265 = arith.mulf %264, %263 : vector<8x128xf32>
    %266 = vector.extract_strided_slice %257 {offsets = [0, 128], sizes = [8, 128], strides = [1, 1]} : vector<8x512xf32> to vector<8x128xf32>
    %cst_90 = arith.constant 5.000000e-01 : f32
    %267 = vector.broadcast %cst_90 : f32 to vector<8x128xf32>
    %268 = arith.mulf %267, %266 : vector<8x128xf32>
    %269 = math.tanh %268 : vector<8x128xf32>
    %cst_91 = arith.constant 1.000000e+00 : f32
    %270 = vector.broadcast %cst_91 : f32 to vector<8x128xf32>
    %271 = arith.addf %269, %270 : vector<8x128xf32>
    %cst_92 = arith.constant 5.000000e-01 : f32
    %272 = vector.broadcast %cst_92 : f32 to vector<8x128xf32>
    %273 = arith.mulf %272, %271 : vector<8x128xf32>
    %274 = vector.extract_strided_slice %257 {offsets = [0, 256], sizes = [8, 128], strides = [1, 1]} : vector<8x512xf32> to vector<8x128xf32>
    %275 = math.tanh %274 : vector<8x128xf32>
    %276 = vector.extract_strided_slice %257 {offsets = [0, 384], sizes = [8, 128], strides = [1, 1]} : vector<8x512xf32> to vector<8x128xf32>
    %cst_93 = arith.constant 5.000000e-01 : f32
    %277 = vector.broadcast %cst_93 : f32 to vector<8x128xf32>
    %278 = arith.mulf %277, %276 : vector<8x128xf32>
    %279 = math.tanh %278 : vector<8x128xf32>
    %cst_94 = arith.constant 1.000000e+00 : f32
    %280 = vector.broadcast %cst_94 : f32 to vector<8x128xf32>
    %281 = arith.addf %279, %280 : vector<8x128xf32>
    %cst_95 = arith.constant 5.000000e-01 : f32
    %282 = vector.broadcast %cst_95 : f32 to vector<8x128xf32>
    %283 = arith.mulf %282, %281 : vector<8x128xf32>
    %284 = arith.mulf %273, %216 : vector<8x128xf32>
    %285 = arith.mulf %265, %275 : vector<8x128xf32>
    %286 = arith.addf %284, %285 : vector<8x128xf32>
    %287 = math.tanh %286 : vector<8x128xf32>
    %288 = arith.mulf %283, %287 : vector<8x128xf32>
    %c4_i32 = arith.constant 4 : i32
    %289 = arith.index_cast %c4_i32 : i32 to index
    %c0_96 = arith.constant 0 : index
    %c0_97 = arith.constant 0 : index
    %290 = vector.load %arg0[%289, %c0_96, %c0_97] : memref<8x8x512xf32, #tpu.memory_space<vmem>>, vector<1x8x512xf32>
    %291 = vector.shape_cast %290 : vector<1x8x512xf32> to vector<8x512xf32>
    %cst_98 = arith.constant dense<0.000000e+00> : vector<8x512xf32>
    %292 = tpu.matmul %254, %0, %cst_98 {dimension_numbers = #tpu.dot_dimension_numbers<[1], [0], [0], [1], [0, 0, 1, 1], [], []>} : vector<8x128xf32>, vector<128x512xf32>, vector<8x512xf32> -> vector<8x512xf32>
    %293 = arith.addf %291, %292 : vector<8x512xf32>
    %294 = vector.extract_strided_slice %293 {offsets = [0, 0], sizes = [8, 128], strides = [1, 1]} : vector<8x512xf32> to vector<8x128xf32>
    %cst_99 = arith.constant 5.000000e-01 : f32
    %295 = vector.broadcast %cst_99 : f32 to vector<8x128xf32>
    %296 = arith.mulf %295, %294 : vector<8x128xf32>
    %297 = math.tanh %296 : vector<8x128xf32>
    %cst_100 = arith.constant 1.000000e+00 : f32
    %298 = vector.broadcast %cst_100 : f32 to vector<8x128xf32>
    %299 = arith.addf %297, %298 : vector<8x128xf32>
    %cst_101 = arith.constant 5.000000e-01 : f32
    %300 = vector.broadcast %cst_101 : f32 to vector<8x128xf32>
    %301 = arith.mulf %300, %299 : vector<8x128xf32>
    %302 = vector.extract_strided_slice %293 {offsets = [0, 128], sizes = [8, 128], strides = [1, 1]} : vector<8x512xf32> to vector<8x128xf32>
    %cst_102 = arith.constant 5.000000e-01 : f32
    %303 = vector.broadcast %cst_102 : f32 to vector<8x128xf32>
    %304 = arith.mulf %303, %302 : vector<8x128xf32>
    %305 = math.tanh %304 : vector<8x128xf32>
    %cst_103 = arith.constant 1.000000e+00 : f32
    %306 = vector.broadcast %cst_103 : f32 to vector<8x128xf32>
    %307 = arith.addf %305, %306 : vector<8x128xf32>
    %cst_104 = arith.constant 5.000000e-01 : f32
    %308 = vector.broadcast %cst_104 : f32 to vector<8x128xf32>
    %309 = arith.mulf %308, %307 : vector<8x128xf32>
    %310 = vector.extract_strided_slice %293 {offsets = [0, 256], sizes = [8, 128], strides = [1, 1]} : vector<8x512xf32> to vector<8x128xf32>
    %311 = math.tanh %310 : vector<8x128xf32>
    %312 = vector.extract_strided_slice %293 {offsets = [0, 384], sizes = [8, 128], strides = [1, 1]} : vector<8x512xf32> to vector<8x128xf32>
    %cst_105 = arith.constant 5.000000e-01 : f32
    %313 = vector.broadcast %cst_105 : f32 to vector<8x128xf32>
    %314 = arith.mulf %313, %312 : vector<8x128xf32>
    %315 = math.tanh %314 : vector<8x128xf32>
    %cst_106 = arith.constant 1.000000e+00 : f32
    %316 = vector.broadcast %cst_106 : f32 to vector<8x128xf32>
    %317 = arith.addf %315, %316 : vector<8x128xf32>
    %cst_107 = arith.constant 5.000000e-01 : f32
    %318 = vector.broadcast %cst_107 : f32 to vector<8x128xf32>
    %319 = arith.mulf %318, %317 : vector<8x128xf32>
    %320 = arith.mulf %309, %252 : vector<8x128xf32>
    %321 = arith.mulf %301, %311 : vector<8x128xf32>
    %322 = arith.addf %320, %321 : vector<8x128xf32>
    %323 = math.tanh %322 : vector<8x128xf32>
    %324 = arith.mulf %319, %323 : vector<8x128xf32>
    %325 = tpu.concatenate %324, %288 in 1 : vector<8x128xf32>, vector<8x128xf32> -> vector<8x256xf32>
    %cst_108 = arith.constant dense<0.000000e+00> : vector<8x512xf32>
    %326 = tpu.matmul %325, %1, %cst_108 {dimension_numbers = #tpu.dot_dimension_numbers<[1], [0], [0], [1], [0, 0, 1, 1], [], []>} : vector<8x256xf32>, vector<256x512xf32>, vector<8x512xf32> -> vector<8x512xf32>
    %327 = arith.addf %326, %4 : vector<8x512xf32>
    %328 = vector.extract_strided_slice %327 {offsets = [0, 0], sizes = [8, 128], strides = [1, 1]} : vector<8x512xf32> to vector<8x128xf32>
    %cst_109 = arith.constant 5.000000e-01 : f32
    %329 = vector.broadcast %cst_109 : f32 to vector<8x128xf32>
    %330 = arith.mulf %329, %328 : vector<8x128xf32>
    %331 = math.tanh %330 : vector<8x128xf32>
    %cst_110 = arith.constant 1.000000e+00 : f32
    %332 = vector.broadcast %cst_110 : f32 to vector<8x128xf32>
    %333 = arith.addf %331, %332 : vector<8x128xf32>
    %cst_111 = arith.constant 5.000000e-01 : f32
    %334 = vector.broadcast %cst_111 : f32 to vector<8x128xf32>
    %335 = arith.mulf %334, %333 : vector<8x128xf32>
    %336 = vector.extract_strided_slice %327 {offsets = [0, 128], sizes = [8, 128], strides = [1, 1]} : vector<8x512xf32> to vector<8x128xf32>
    %cst_112 = arith.constant 5.000000e-01 : f32
    %337 = vector.broadcast %cst_112 : f32 to vector<8x128xf32>
    %338 = arith.mulf %337, %336 : vector<8x128xf32>
    %339 = math.tanh %338 : vector<8x128xf32>
    %cst_113 = arith.constant 1.000000e+00 : f32
    %340 = vector.broadcast %cst_113 : f32 to vector<8x128xf32>
    %341 = arith.addf %339, %340 : vector<8x128xf32>
    %cst_114 = arith.constant 5.000000e-01 : f32
    %342 = vector.broadcast %cst_114 : f32 to vector<8x128xf32>
    %343 = arith.mulf %342, %341 : vector<8x128xf32>
    %344 = vector.extract_strided_slice %327 {offsets = [0, 256], sizes = [8, 128], strides = [1, 1]} : vector<8x512xf32> to vector<8x128xf32>
    %345 = math.tanh %344 : vector<8x128xf32>
    %346 = vector.extract_strided_slice %327 {offsets = [0, 384], sizes = [8, 128], strides = [1, 1]} : vector<8x512xf32> to vector<8x128xf32>
    %cst_115 = arith.constant 5.000000e-01 : f32
    %347 = vector.broadcast %cst_115 : f32 to vector<8x128xf32>
    %348 = arith.mulf %347, %346 : vector<8x128xf32>
    %349 = math.tanh %348 : vector<8x128xf32>
    %cst_116 = arith.constant 1.000000e+00 : f32
    %350 = vector.broadcast %cst_116 : f32 to vector<8x128xf32>
    %351 = arith.addf %349, %350 : vector<8x128xf32>
    %cst_117 = arith.constant 5.000000e-01 : f32
    %352 = vector.broadcast %cst_117 : f32 to vector<8x128xf32>
    %353 = arith.mulf %352, %351 : vector<8x128xf32>
    %354 = arith.mulf %343, %286 : vector<8x128xf32>
    %355 = arith.mulf %335, %345 : vector<8x128xf32>
    %356 = arith.addf %354, %355 : vector<8x128xf32>
    %357 = math.tanh %356 : vector<8x128xf32>
    %358 = arith.mulf %353, %357 : vector<8x128xf32>
    %c5_i32 = arith.constant 5 : i32
    %359 = arith.index_cast %c5_i32 : i32 to index
    %c0_118 = arith.constant 0 : index
    %c0_119 = arith.constant 0 : index
    %360 = vector.load %arg0[%359, %c0_118, %c0_119] : memref<8x8x512xf32, #tpu.memory_space<vmem>>, vector<1x8x512xf32>
    %361 = vector.shape_cast %360 : vector<1x8x512xf32> to vector<8x512xf32>
    %cst_120 = arith.constant dense<0.000000e+00> : vector<8x512xf32>
    %362 = tpu.matmul %324, %0, %cst_120 {dimension_numbers = #tpu.dot_dimension_numbers<[1], [0], [0], [1], [0, 0, 1, 1], [], []>} : vector<8x128xf32>, vector<128x512xf32>, vector<8x512xf32> -> vector<8x512xf32>
    %363 = arith.addf %361, %362 : vector<8x512xf32>
    %364 = vector.extract_strided_slice %363 {offsets = [0, 0], sizes = [8, 128], strides = [1, 1]} : vector<8x512xf32> to vector<8x128xf32>
    %cst_121 = arith.constant 5.000000e-01 : f32
    %365 = vector.broadcast %cst_121 : f32 to vector<8x128xf32>
    %366 = arith.mulf %365, %364 : vector<8x128xf32>
    %367 = math.tanh %366 : vector<8x128xf32>
    %cst_122 = arith.constant 1.000000e+00 : f32
    %368 = vector.broadcast %cst_122 : f32 to vector<8x128xf32>
    %369 = arith.addf %367, %368 : vector<8x128xf32>
    %cst_123 = arith.constant 5.000000e-01 : f32
    %370 = vector.broadcast %cst_123 : f32 to vector<8x128xf32>
    %371 = arith.mulf %370, %369 : vector<8x128xf32>
    %372 = vector.extract_strided_slice %363 {offsets = [0, 128], sizes = [8, 128], strides = [1, 1]} : vector<8x512xf32> to vector<8x128xf32>
    %cst_124 = arith.constant 5.000000e-01 : f32
    %373 = vector.broadcast %cst_124 : f32 to vector<8x128xf32>
    %374 = arith.mulf %373, %372 : vector<8x128xf32>
    %375 = math.tanh %374 : vector<8x128xf32>
    %cst_125 = arith.constant 1.000000e+00 : f32
    %376 = vector.broadcast %cst_125 : f32 to vector<8x128xf32>
    %377 = arith.addf %375, %376 : vector<8x128xf32>
    %cst_126 = arith.constant 5.000000e-01 : f32
    %378 = vector.broadcast %cst_126 : f32 to vector<8x128xf32>
    %379 = arith.mulf %378, %377 : vector<8x128xf32>
    %380 = vector.extract_strided_slice %363 {offsets = [0, 256], sizes = [8, 128], strides = [1, 1]} : vector<8x512xf32> to vector<8x128xf32>
    %381 = math.tanh %380 : vector<8x128xf32>
    %382 = vector.extract_strided_slice %363 {offsets = [0, 384], sizes = [8, 128], strides = [1, 1]} : vector<8x512xf32> to vector<8x128xf32>
    %cst_127 = arith.constant 5.000000e-01 : f32
    %383 = vector.broadcast %cst_127 : f32 to vector<8x128xf32>
    %384 = arith.mulf %383, %382 : vector<8x128xf32>
    %385 = math.tanh %384 : vector<8x128xf32>
    %cst_128 = arith.constant 1.000000e+00 : f32
    %386 = vector.broadcast %cst_128 : f32 to vector<8x128xf32>
    %387 = arith.addf %385, %386 : vector<8x128xf32>
    %cst_129 = arith.constant 5.000000e-01 : f32
    %388 = vector.broadcast %cst_129 : f32 to vector<8x128xf32>
    %389 = arith.mulf %388, %387 : vector<8x128xf32>
    %390 = arith.mulf %379, %322 : vector<8x128xf32>
    %391 = arith.mulf %371, %381 : vector<8x128xf32>
    %392 = arith.addf %390, %391 : vector<8x128xf32>
    %393 = math.tanh %392 : vector<8x128xf32>
    %394 = arith.mulf %389, %393 : vector<8x128xf32>
    %395 = tpu.concatenate %394, %358 in 1 : vector<8x128xf32>, vector<8x128xf32> -> vector<8x256xf32>
    %cst_130 = arith.constant dense<0.000000e+00> : vector<8x512xf32>
    %396 = tpu.matmul %395, %1, %cst_130 {dimension_numbers = #tpu.dot_dimension_numbers<[1], [0], [0], [1], [0, 0, 1, 1], [], []>} : vector<8x256xf32>, vector<256x512xf32>, vector<8x512xf32> -> vector<8x512xf32>
    %397 = arith.addf %396, %4 : vector<8x512xf32>
    %398 = vector.extract_strided_slice %397 {offsets = [0, 0], sizes = [8, 128], strides = [1, 1]} : vector<8x512xf32> to vector<8x128xf32>
    %cst_131 = arith.constant 5.000000e-01 : f32
    %399 = vector.broadcast %cst_131 : f32 to vector<8x128xf32>
    %400 = arith.mulf %399, %398 : vector<8x128xf32>
    %401 = math.tanh %400 : vector<8x128xf32>
    %cst_132 = arith.constant 1.000000e+00 : f32
    %402 = vector.broadcast %cst_132 : f32 to vector<8x128xf32>
    %403 = arith.addf %401, %402 : vector<8x128xf32>
    %cst_133 = arith.constant 5.000000e-01 : f32
    %404 = vector.broadcast %cst_133 : f32 to vector<8x128xf32>
    %405 = arith.mulf %404, %403 : vector<8x128xf32>
    %406 = vector.extract_strided_slice %397 {offsets = [0, 128], sizes = [8, 128], strides = [1, 1]} : vector<8x512xf32> to vector<8x128xf32>
    %cst_134 = arith.constant 5.000000e-01 : f32
    %407 = vector.broadcast %cst_134 : f32 to vector<8x128xf32>
    %408 = arith.mulf %407, %406 : vector<8x128xf32>
    %409 = math.tanh %408 : vector<8x128xf32>
    %cst_135 = arith.constant 1.000000e+00 : f32
    %410 = vector.broadcast %cst_135 : f32 to vector<8x128xf32>
    %411 = arith.addf %409, %410 : vector<8x128xf32>
    %cst_136 = arith.constant 5.000000e-01 : f32
    %412 = vector.broadcast %cst_136 : f32 to vector<8x128xf32>
    %413 = arith.mulf %412, %411 : vector<8x128xf32>
    %414 = vector.extract_strided_slice %397 {offsets = [0, 256], sizes = [8, 128], strides = [1, 1]} : vector<8x512xf32> to vector<8x128xf32>
    %415 = math.tanh %414 : vector<8x128xf32>
    %416 = vector.extract_strided_slice %397 {offsets = [0, 384], sizes = [8, 128], strides = [1, 1]} : vector<8x512xf32> to vector<8x128xf32>
    %cst_137 = arith.constant 5.000000e-01 : f32
    %417 = vector.broadcast %cst_137 : f32 to vector<8x128xf32>
    %418 = arith.mulf %417, %416 : vector<8x128xf32>
    %419 = math.tanh %418 : vector<8x128xf32>
    %cst_138 = arith.constant 1.000000e+00 : f32
    %420 = vector.broadcast %cst_138 : f32 to vector<8x128xf32>
    %421 = arith.addf %419, %420 : vector<8x128xf32>
    %cst_139 = arith.constant 5.000000e-01 : f32
    %422 = vector.broadcast %cst_139 : f32 to vector<8x128xf32>
    %423 = arith.mulf %422, %421 : vector<8x128xf32>
    %424 = arith.mulf %413, %356 : vector<8x128xf32>
    %425 = arith.mulf %405, %415 : vector<8x128xf32>
    %426 = arith.addf %424, %425 : vector<8x128xf32>
    %427 = math.tanh %426 : vector<8x128xf32>
    %428 = arith.mulf %423, %427 : vector<8x128xf32>
    %c6_i32 = arith.constant 6 : i32
    %429 = arith.index_cast %c6_i32 : i32 to index
    %c0_140 = arith.constant 0 : index
    %c0_141 = arith.constant 0 : index
    %430 = vector.load %arg0[%429, %c0_140, %c0_141] : memref<8x8x512xf32, #tpu.memory_space<vmem>>, vector<1x8x512xf32>
    %431 = vector.shape_cast %430 : vector<1x8x512xf32> to vector<8x512xf32>
    %cst_142 = arith.constant dense<0.000000e+00> : vector<8x512xf32>
    %432 = tpu.matmul %394, %0, %cst_142 {dimension_numbers = #tpu.dot_dimension_numbers<[1], [0], [0], [1], [0, 0, 1, 1], [], []>} : vector<8x128xf32>, vector<128x512xf32>, vector<8x512xf32> -> vector<8x512xf32>
    %433 = arith.addf %431, %432 : vector<8x512xf32>
    %434 = vector.extract_strided_slice %433 {offsets = [0, 0], sizes = [8, 128], strides = [1, 1]} : vector<8x512xf32> to vector<8x128xf32>
    %cst_143 = arith.constant 5.000000e-01 : f32
    %435 = vector.broadcast %cst_143 : f32 to vector<8x128xf32>
    %436 = arith.mulf %435, %434 : vector<8x128xf32>
    %437 = math.tanh %436 : vector<8x128xf32>
    %cst_144 = arith.constant 1.000000e+00 : f32
    %438 = vector.broadcast %cst_144 : f32 to vector<8x128xf32>
    %439 = arith.addf %437, %438 : vector<8x128xf32>
    %cst_145 = arith.constant 5.000000e-01 : f32
    %440 = vector.broadcast %cst_145 : f32 to vector<8x128xf32>
    %441 = arith.mulf %440, %439 : vector<8x128xf32>
    %442 = vector.extract_strided_slice %433 {offsets = [0, 128], sizes = [8, 128], strides = [1, 1]} : vector<8x512xf32> to vector<8x128xf32>
    %cst_146 = arith.constant 5.000000e-01 : f32
    %443 = vector.broadcast %cst_146 : f32 to vector<8x128xf32>
    %444 = arith.mulf %443, %442 : vector<8x128xf32>
    %445 = math.tanh %444 : vector<8x128xf32>
    %cst_147 = arith.constant 1.000000e+00 : f32
    %446 = vector.broadcast %cst_147 : f32 to vector<8x128xf32>
    %447 = arith.addf %445, %446 : vector<8x128xf32>
    %cst_148 = arith.constant 5.000000e-01 : f32
    %448 = vector.broadcast %cst_148 : f32 to vector<8x128xf32>
    %449 = arith.mulf %448, %447 : vector<8x128xf32>
    %450 = vector.extract_strided_slice %433 {offsets = [0, 256], sizes = [8, 128], strides = [1, 1]} : vector<8x512xf32> to vector<8x128xf32>
    %451 = math.tanh %450 : vector<8x128xf32>
    %452 = vector.extract_strided_slice %433 {offsets = [0, 384], sizes = [8, 128], strides = [1, 1]} : vector<8x512xf32> to vector<8x128xf32>
    %cst_149 = arith.constant 5.000000e-01 : f32
    %453 = vector.broadcast %cst_149 : f32 to vector<8x128xf32>
    %454 = arith.mulf %453, %452 : vector<8x128xf32>
    %455 = math.tanh %454 : vector<8x128xf32>
    %cst_150 = arith.constant 1.000000e+00 : f32
    %456 = vector.broadcast %cst_150 : f32 to vector<8x128xf32>
    %457 = arith.addf %455, %456 : vector<8x128xf32>
    %cst_151 = arith.constant 5.000000e-01 : f32
    %458 = vector.broadcast %cst_151 : f32 to vector<8x128xf32>
    %459 = arith.mulf %458, %457 : vector<8x128xf32>
    %460 = arith.mulf %449, %392 : vector<8x128xf32>
    %461 = arith.mulf %441, %451 : vector<8x128xf32>
    %462 = arith.addf %460, %461 : vector<8x128xf32>
    %463 = math.tanh %462 : vector<8x128xf32>
    %464 = arith.mulf %459, %463 : vector<8x128xf32>
    %465 = tpu.concatenate %464, %428 in 1 : vector<8x128xf32>, vector<8x128xf32> -> vector<8x256xf32>
    %cst_152 = arith.constant dense<0.000000e+00> : vector<8x512xf32>
    %466 = tpu.matmul %465, %1, %cst_152 {dimension_numbers = #tpu.dot_dimension_numbers<[1], [0], [0], [1], [0, 0, 1, 1], [], []>} : vector<8x256xf32>, vector<256x512xf32>, vector<8x512xf32> -> vector<8x512xf32>
    %467 = arith.addf %466, %4 : vector<8x512xf32>
    %468 = vector.extract_strided_slice %467 {offsets = [0, 0], sizes = [8, 128], strides = [1, 1]} : vector<8x512xf32> to vector<8x128xf32>
    %cst_153 = arith.constant 5.000000e-01 : f32
    %469 = vector.broadcast %cst_153 : f32 to vector<8x128xf32>
    %470 = arith.mulf %469, %468 : vector<8x128xf32>
    %471 = math.tanh %470 : vector<8x128xf32>
    %cst_154 = arith.constant 1.000000e+00 : f32
    %472 = vector.broadcast %cst_154 : f32 to vector<8x128xf32>
    %473 = arith.addf %471, %472 : vector<8x128xf32>
    %cst_155 = arith.constant 5.000000e-01 : f32
    %474 = vector.broadcast %cst_155 : f32 to vector<8x128xf32>
    %475 = arith.mulf %474, %473 : vector<8x128xf32>
    %476 = vector.extract_strided_slice %467 {offsets = [0, 128], sizes = [8, 128], strides = [1, 1]} : vector<8x512xf32> to vector<8x128xf32>
    %cst_156 = arith.constant 5.000000e-01 : f32
    %477 = vector.broadcast %cst_156 : f32 to vector<8x128xf32>
    %478 = arith.mulf %477, %476 : vector<8x128xf32>
    %479 = math.tanh %478 : vector<8x128xf32>
    %cst_157 = arith.constant 1.000000e+00 : f32
    %480 = vector.broadcast %cst_157 : f32 to vector<8x128xf32>
    %481 = arith.addf %479, %480 : vector<8x128xf32>
    %cst_158 = arith.constant 5.000000e-01 : f32
    %482 = vector.broadcast %cst_158 : f32 to vector<8x128xf32>
    %483 = arith.mulf %482, %481 : vector<8x128xf32>
    %484 = vector.extract_strided_slice %467 {offsets = [0, 256], sizes = [8, 128], strides = [1, 1]} : vector<8x512xf32> to vector<8x128xf32>
    %485 = math.tanh %484 : vector<8x128xf32>
    %486 = vector.extract_strided_slice %467 {offsets = [0, 384], sizes = [8, 128], strides = [1, 1]} : vector<8x512xf32> to vector<8x128xf32>
    %cst_159 = arith.constant 5.000000e-01 : f32
    %487 = vector.broadcast %cst_159 : f32 to vector<8x128xf32>
    %488 = arith.mulf %487, %486 : vector<8x128xf32>
    %489 = math.tanh %488 : vector<8x128xf32>
    %cst_160 = arith.constant 1.000000e+00 : f32
    %490 = vector.broadcast %cst_160 : f32 to vector<8x128xf32>
    %491 = arith.addf %489, %490 : vector<8x128xf32>
    %cst_161 = arith.constant 5.000000e-01 : f32
    %492 = vector.broadcast %cst_161 : f32 to vector<8x128xf32>
    %493 = arith.mulf %492, %491 : vector<8x128xf32>
    %494 = arith.mulf %483, %426 : vector<8x128xf32>
    %495 = arith.mulf %475, %485 : vector<8x128xf32>
    %496 = arith.addf %494, %495 : vector<8x128xf32>
    %497 = math.tanh %496 : vector<8x128xf32>
    %498 = arith.mulf %493, %497 : vector<8x128xf32>
    %c7_i32 = arith.constant 7 : i32
    %499 = arith.index_cast %c7_i32 : i32 to index
    %c0_162 = arith.constant 0 : index
    %c0_163 = arith.constant 0 : index
    %500 = vector.load %arg0[%499, %c0_162, %c0_163] : memref<8x8x512xf32, #tpu.memory_space<vmem>>, vector<1x8x512xf32>
    %501 = vector.shape_cast %500 : vector<1x8x512xf32> to vector<8x512xf32>
    %cst_164 = arith.constant dense<0.000000e+00> : vector<8x512xf32>
    %502 = tpu.matmul %464, %0, %cst_164 {dimension_numbers = #tpu.dot_dimension_numbers<[1], [0], [0], [1], [0, 0, 1, 1], [], []>} : vector<8x128xf32>, vector<128x512xf32>, vector<8x512xf32> -> vector<8x512xf32>
    %503 = arith.addf %501, %502 : vector<8x512xf32>
    %504 = vector.extract_strided_slice %503 {offsets = [0, 0], sizes = [8, 128], strides = [1, 1]} : vector<8x512xf32> to vector<8x128xf32>
    %cst_165 = arith.constant 5.000000e-01 : f32
    %505 = vector.broadcast %cst_165 : f32 to vector<8x128xf32>
    %506 = arith.mulf %505, %504 : vector<8x128xf32>
    %507 = math.tanh %506 : vector<8x128xf32>
    %cst_166 = arith.constant 1.000000e+00 : f32
    %508 = vector.broadcast %cst_166 : f32 to vector<8x128xf32>
    %509 = arith.addf %507, %508 : vector<8x128xf32>
    %cst_167 = arith.constant 5.000000e-01 : f32
    %510 = vector.broadcast %cst_167 : f32 to vector<8x128xf32>
    %511 = arith.mulf %510, %509 : vector<8x128xf32>
    %512 = vector.extract_strided_slice %503 {offsets = [0, 128], sizes = [8, 128], strides = [1, 1]} : vector<8x512xf32> to vector<8x128xf32>
    %cst_168 = arith.constant 5.000000e-01 : f32
    %513 = vector.broadcast %cst_168 : f32 to vector<8x128xf32>
    %514 = arith.mulf %513, %512 : vector<8x128xf32>
    %515 = math.tanh %514 : vector<8x128xf32>
    %cst_169 = arith.constant 1.000000e+00 : f32
    %516 = vector.broadcast %cst_169 : f32 to vector<8x128xf32>
    %517 = arith.addf %515, %516 : vector<8x128xf32>
    %cst_170 = arith.constant 5.000000e-01 : f32
    %518 = vector.broadcast %cst_170 : f32 to vector<8x128xf32>
    %519 = arith.mulf %518, %517 : vector<8x128xf32>
    %520 = vector.extract_strided_slice %503 {offsets = [0, 256], sizes = [8, 128], strides = [1, 1]} : vector<8x512xf32> to vector<8x128xf32>
    %521 = math.tanh %520 : vector<8x128xf32>
    %522 = vector.extract_strided_slice %503 {offsets = [0, 384], sizes = [8, 128], strides = [1, 1]} : vector<8x512xf32> to vector<8x128xf32>
    %cst_171 = arith.constant 5.000000e-01 : f32
    %523 = vector.broadcast %cst_171 : f32 to vector<8x128xf32>
    %524 = arith.mulf %523, %522 : vector<8x128xf32>
    %525 = math.tanh %524 : vector<8x128xf32>
    %cst_172 = arith.constant 1.000000e+00 : f32
    %526 = vector.broadcast %cst_172 : f32 to vector<8x128xf32>
    %527 = arith.addf %525, %526 : vector<8x128xf32>
    %cst_173 = arith.constant 5.000000e-01 : f32
    %528 = vector.broadcast %cst_173 : f32 to vector<8x128xf32>
    %529 = arith.mulf %528, %527 : vector<8x128xf32>
    %530 = arith.mulf %519, %462 : vector<8x128xf32>
    %531 = arith.mulf %511, %521 : vector<8x128xf32>
    %532 = arith.addf %530, %531 : vector<8x128xf32>
    %533 = math.tanh %532 : vector<8x128xf32>
    %534 = arith.mulf %529, %533 : vector<8x128xf32>
    %535 = tpu.concatenate %534, %498 in 1 : vector<8x128xf32>, vector<8x128xf32> -> vector<8x256xf32>
    %cst_174 = arith.constant dense<0.000000e+00> : vector<8x512xf32>
    %536 = tpu.matmul %535, %1, %cst_174 {dimension_numbers = #tpu.dot_dimension_numbers<[1], [0], [0], [1], [0, 0, 1, 1], [], []>} : vector<8x256xf32>, vector<256x512xf32>, vector<8x512xf32> -> vector<8x512xf32>
    %537 = arith.addf %536, %4 : vector<8x512xf32>
    %538 = vector.extract_strided_slice %537 {offsets = [0, 0], sizes = [8, 128], strides = [1, 1]} : vector<8x512xf32> to vector<8x128xf32>
    %cst_175 = arith.constant 5.000000e-01 : f32
    %539 = vector.broadcast %cst_175 : f32 to vector<8x128xf32>
    %540 = arith.mulf %539, %538 : vector<8x128xf32>
    %541 = math.tanh %540 : vector<8x128xf32>
    %cst_176 = arith.constant 1.000000e+00 : f32
    %542 = vector.broadcast %cst_176 : f32 to vector<8x128xf32>
    %543 = arith.addf %541, %542 : vector<8x128xf32>
    %cst_177 = arith.constant 5.000000e-01 : f32
    %544 = vector.broadcast %cst_177 : f32 to vector<8x128xf32>
    %545 = arith.mulf %544, %543 : vector<8x128xf32>
    %546 = vector.extract_strided_slice %537 {offsets = [0, 128], sizes = [8, 128], strides = [1, 1]} : vector<8x512xf32> to vector<8x128xf32>
    %cst_178 = arith.constant 5.000000e-01 : f32
    %547 = vector.broadcast %cst_178 : f32 to vector<8x128xf32>
    %548 = arith.mulf %547, %546 : vector<8x128xf32>
    %549 = math.tanh %548 : vector<8x128xf32>
    %cst_179 = arith.constant 1.000000e+00 : f32
    %550 = vector.broadcast %cst_179 : f32 to vector<8x128xf32>
    %551 = arith.addf %549, %550 : vector<8x128xf32>
    %cst_180 = arith.constant 5.000000e-01 : f32
    %552 = vector.broadcast %cst_180 : f32 to vector<8x128xf32>
    %553 = arith.mulf %552, %551 : vector<8x128xf32>
    %554 = vector.extract_strided_slice %537 {offsets = [0, 256], sizes = [8, 128], strides = [1, 1]} : vector<8x512xf32> to vector<8x128xf32>
    %555 = math.tanh %554 : vector<8x128xf32>
    %556 = vector.extract_strided_slice %537 {offsets = [0, 384], sizes = [8, 128], strides = [1, 1]} : vector<8x512xf32> to vector<8x128xf32>
    %cst_181 = arith.constant 5.000000e-01 : f32
    %557 = vector.broadcast %cst_181 : f32 to vector<8x128xf32>
    %558 = arith.mulf %557, %556 : vector<8x128xf32>
    %559 = math.tanh %558 : vector<8x128xf32>
    %cst_182 = arith.constant 1.000000e+00 : f32
    %560 = vector.broadcast %cst_182 : f32 to vector<8x128xf32>
    %561 = arith.addf %559, %560 : vector<8x128xf32>
    %cst_183 = arith.constant 5.000000e-01 : f32
    %562 = vector.broadcast %cst_183 : f32 to vector<8x128xf32>
    %563 = arith.mulf %562, %561 : vector<8x128xf32>
    %564 = arith.mulf %553, %496 : vector<8x128xf32>
    %565 = arith.mulf %545, %555 : vector<8x128xf32>
    %566 = arith.addf %564, %565 : vector<8x128xf32>
    %567 = math.tanh %566 : vector<8x128xf32>
    %568 = arith.mulf %563, %567 : vector<8x128xf32>
    %c8_i32 = arith.constant 8 : i32
    %c0_184 = arith.constant 0 : index
    %c0_185 = arith.constant 0 : index
    %569 = vector.load %arg4[%c0_184, %c0_185] : memref<8x128xf32, #tpu.memory_space<vmem>>, vector<8x128xf32>
    tpu.vector_store %arg4[%c0_184, %c0_185], %568 {strides = array<i32>} : memref<8x128xf32, #tpu.memory_space<vmem>>, vector<8x128xf32>,
    return
  }
}

</mosaic_0001>

<llo_original>
// kernel: tpu_custom_call.1
$region0: #{tpu_custom_call.1}
  #allocation0 [shape = 'u32[]', space=smem, size = 0x4, offset = 0x4, fixed_abs, tag = 'smem constant byte address 0x4 - core index']
  #allocation1 [shape = 'u32[144,128]{1,0:T(1,128)}', space=vmem, size = 0x12000, scoped, tag = 'internal scratch']
  %s0 = inlined_call_operand.hbm [shape: f32[8,8,512], index: 0, kind: input, shape index: {}]
  %s1 = inlined_call_operand.hbm [shape: f32[128,512], index: 1, kind: input, shape index: {}]
  %s2 = inlined_call_operand.hbm [shape: f32[256,512], index: 2, kind: input, shape index: {}]
  %s3 = inlined_call_operand.vmem [shape: f32[1,512], index: 3, kind: input, shape index: {}]
  %s4 = inlined_call_operand.hbm [shape: f32[8,128], index: 4, kind: output, shape index: {}]
  %s5 = sld [smem:[#allocation0]]
  $region38: #{tpu_custom_call.1} parent=0
    _
  %s7 = ssub.s32 1, %s5
  %s8 = scalar_select 0, %s7, %s5
  $region1: #{tpu_custom_call.1} parent=0
    #allocation2 [shape = 'u8[131072]{0}', space=vmem, size = 0x20000, scoped, tag = 'input window, operand 0, single buffered']
    #allocation3 [shape = 's32[1]{0}', space=sflag, size = 0x4, scoped, tag = 'scoped memory for tpu_custom_call.1']
    #allocation4 [shape = 's32[1]{0}', space=sflag, size = 0x4, scoped, tag = 'scoped memory for tpu_custom_call.1']
    #allocation5 [shape = 'u8[262144]{0}', space=vmem, size = 0x40000, scoped, tag = 'input window, operand 1, single buffered']
    #allocation6 [shape = 's32[1]{0}', space=sflag, size = 0x4, scoped, tag = 'scoped memory for tpu_custom_call.1']
    #allocation7 [shape = 'u8[524288]{0}', space=vmem, size = 0x80000, scoped, tag = 'input window, operand 2, single buffered']
    #allocation8 [shape = 'u8[4096]{0}', space=vmem, size = 0x1000, scoped, tag = 'output window, operand 0, single buffered']
    %9 = vsyncpa [#allocation3], 0
    %10 = vsyncpa [#allocation6], 0
    %11 = vsyncpa [#allocation4], 0
    // Predicated region
    $region2: #{tpu_custom_call.1} parent=1 // pred_check
      _
    $region3: #{tpu_custom_call.1} parent=1 // pred_check_branch
      %13 = sbr.rel (0) target = $region5
    $region4: #{tpu_custom_call.1} parent=1 // pred_region
      %s15 = ssub.s32 4096, 4096
      %16 = vsyncadd [#allocation3], %s15
      %s17 = sshll.u32 [#allocation2], 4
      %s18 = int_to_ptr.vmem [resolvable:$true] %s17
      %23 = dma.hbm_to_vmem [thread:$0]  %s0, 4096, %s18, [#allocation3], 512, 512, 32
    $region5: #{tpu_custom_call.1} parent=1 // pred_fallthru
      _
    // Predicated region
    $region6: #{tpu_custom_call.1} parent=1 // pred_check
      _
    $region7: #{tpu_custom_call.1} parent=1 // pred_check_branch
      %25 = sbr.rel (0) target = $region9
    $region8: #{tpu_custom_call.1} parent=1 // pred_region
      %s27 = ssub.s32 8192, 8192
      %28 = vsyncadd [#allocation6], %s27
      %s29 = sshll.u32 [#allocation5], 4
      %s30 = int_to_ptr.vmem [resolvable:$true] %s29
      %35 = dma.hbm_to_vmem [thread:$0]  %s1, 8192, %s30, [#allocation6], 512, 512, 32
    $region9: #{tpu_custom_call.1} parent=1 // pred_fallthru
      _
    // Predicated region
    $region10: #{tpu_custom_call.1} parent=1 // pred_check
      _
    $region11: #{tpu_custom_call.1} parent=1 // pred_check_branch
      %37 = sbr.rel (0) target = $region13
    $region12: #{tpu_custom_call.1} parent=1 // pred_region
      %s39 = ssub.s32 16384, 16384
      %40 = vsyncadd [#allocation6], %s39
      %s41 = sshll.u32 [#allocation7], 4
      %s42 = int_to_ptr.vmem [resolvable:$true] %s41
      %47 = dma.hbm_to_vmem [thread:$0]  %s2, 16384, %s42, [#allocation6], 512, 512, 32
    $region13: #{tpu_custom_call.1} parent=1 // pred_fallthru
      _
    // Predicated region
    $region14: #{tpu_custom_call.1} parent=1 // pred_check
      _
    $region15: #{tpu_custom_call.1} parent=1 // pred_check_branch
      %49 = sbr.rel (0) target = $region17
    $region16: #{tpu_custom_call.1} parent=1 // pred_region
      _
    $region17: #{tpu_custom_call.1} parent=1 // pred_fallthru
      _
    // Predicated region
    $region18: #{tpu_custom_call.1} parent=1 // pred_check
      _
    $region19: #{tpu_custom_call.1} parent=1 // pred_check_branch
      %51 = sbr.rel (0) target = $region21
    $region20: #{tpu_custom_call.1} parent=1 // pred_region
      %52 = dma.done [#allocation3], 4096
    $region21: #{tpu_custom_call.1} parent=1 // pred_fallthru
      _
    // Predicated region
    $region22: #{tpu_custom_call.1} parent=1 // pred_check
      _
    $region23: #{tpu_custom_call.1} parent=1 // pred_check_branch
      %54 = sbr.rel (0) target = $region25
    $region24: #{tpu_custom_call.1} parent=1 // pred_region
      %55 = dma.done [#allocation6], 8192
    $region25: #{tpu_custom_call.1} parent=1 // pred_fallthru
      _
    // Predicated region
    $region26: #{tpu_custom_call.1} parent=1 // pred_check
      _
    $region27: #{tpu_custom_call.1} parent=1 // pred_check_branch
      %57 = sbr.rel (0) target = $region29
    $region28: #{tpu_custom_call.1} parent=1 // pred_region
      %58 = dma.done [#allocation6], 16384
    $region29: #{tpu_custom_call.1} parent=1 // pred_fallthru
      _
    %v59 = vld [vmem:[#allocation5] sm:$0xff]
    %v60 = vld [vmem:[#allocation5 + $0x8] sm:$0xff]
    %v61 = vld [vmem:[#allocation5 + $0x10] sm:$0xff]
    %v62 = vld [vmem:[#allocation5 + $0x18] sm:$0xff]
    %v63 = vld [vmem:[#allocation5 + $0x20] sm:$0xff]
    %v64 = vld [vmem:[#allocation5 + $0x28] sm:$0xff]
    %v65 = vld [vmem:[#allocation5 + $0x30] sm:$0xff]
    %v66 = vld [vmem:[#allocation5 + $0x38] sm:$0xff]
    %v67 = vld [vmem:[#allocation5 + $0x40] sm:$0xff]
    %v68 = vld [vmem:[#allocation5 + $0x48] sm:$0xff]
    %v69 = vld [vmem:[#allocation5 + $0x50] sm:$0xff]
    %v70 = vld [vmem:[#allocation5 + $0x58] sm:$0xff]
    %v71 = vld [vmem:[#allocation5 + $0x60] sm:$0xff]
    %v72 = vld [vmem:[#allocation5 + $0x68] sm:$0xff]
    %v73 = vld [vmem:[#allocation5 + $0x70] sm:$0xff]
    %v74 = vld [vmem:[#allocation5 + $0x78] sm:$0xff]
    %v75 = vld [vmem:[#allocation5 + $0x80] sm:$0xff]
    %v76 = vld [vmem:[#allocation5 + $0x88] sm:$0xff]
    %v77 = vld [vmem:[#allocation5 + $0x90] sm:$0xff]
    %v78 = vld [vmem:[#allocation5 + $0x98] sm:$0xff]
    %v79 = vld [vmem:[#allocation5 + $0xa0] sm:$0xff]
    %v80 = vld [vmem:[#allocation5 + $0xa8] sm:$0xff]
    %v81 = vld [vmem:[#allocation5 + $0xb0] sm:$0xff]
    %v82 = vld [vmem:[#allocation5 + $0xb8] sm:$0xff]
    %v83 = vld [vmem:[#allocation5 + $0xc0] sm:$0xff]
    %v84 = vld [vmem:[#allocation5 + $0xc8] sm:$0xff]
    %v85 = vld [vmem:[#allocation5 + $0xd0] sm:$0xff]
    %v86 = vld [vmem:[#allocation5 + $0xd8] sm:$0xff]
    %v87 = vld [vmem:[#allocation5 + $0xe0] sm:$0xff]
    %v88 = vld [vmem:[#allocation5 + $0xe8] sm:$0xff]
    %v89 = vld [vmem:[#allocation5 + $0xf0] sm:$0xff]
    %v90 = vld [vmem:[#allocation5 + $0xf8] sm:$0xff]
    %v91 = vld [vmem:[#allocation5 + $0x100] sm:$0xff]
    %v92 = vld [vmem:[#allocation5 + $0x108] sm:$0xff]
    %v93 = vld [vmem:[#allocation5 + $0x110] sm:$0xff]
    %v94 = vld [vmem:[#allocation5 + $0x118] sm:$0xff]
    %v95 = vld [vmem:[#allocation5 + $0x120] sm:$0xff]
    %v96 = vld [vmem:[#allocation5 + $0x128] sm:$0xff]
    %v97 = vld [vmem:[#allocation5 + $0x130] sm:$0xff]
    %v98 = vld [vmem:[#allocation5 + $0x138] sm:$0xff]
    %v99 = vld [vmem:[#allocation5 + $0x140] sm:$0xff]
    %v100 = vld [vmem:[#allocation5 + $0x148] sm:$0xff]
    %v101 = vld [vmem:[#allocation5 + $0x150] sm:$0xff]
    %v102 = vld [vmem:[#allocation5 + $0x158] sm:$0xff]
    %v103 = vld [vmem:[#allocation5 + $0x160] sm:$0xff]
    %v104 = vld [vmem:[#allocation5 + $0x168] sm:$0xff]
    %v105 = vld [vmem:[#allocation5 + $0x170] sm:$0xff]
    %v106 = vld [vmem:[#allocation5 + $0x178] sm:$0xff]
    %v107 = vld [vmem:[#allocation5 + $0x180] sm:$0xff]
    %v108 = vld [vmem:[#allocation5 + $0x188] sm:$0xff]
    %v109 = vld [vmem:[#allocation5 + $0x190] sm:$0xff]
    %v110 = vld [vmem:[#allocation5 + $0x198] sm:$0xff]
    %v111 = vld [vmem:[#allocation5 + $0x1a0] sm:$0xff]
    %v112 = vld [vmem:[#allocation5 + $0x1a8] sm:$0xff]
    %v113 = vld [vmem:[#allocation5 + $0x1b0] sm:$0xff]
    %v114 = vld [vmem:[#allocation5 + $0x1b8] sm:$0xff]
    %v115 = vld [vmem:[#allocation5 + $0x1c0] sm:$0xff]
    %v116 = vld [vmem:[#allocation5 + $0x1c8] sm:$0xff]
    %v117 = vld [vmem:[#allocation5 + $0x1d0] sm:$0xff]
    %v118 = vld [vmem:[#allocation5 + $0x1d8] sm:$0xff]
    %v119 = vld [vmem:[#allocation5 + $0x1e0] sm:$0xff]
    %v120 = vld [vmem:[#allocation5 + $0x1e8] sm:$0xff]
    %v121 = vld [vmem:[#allocation5 + $0x1f0] sm:$0xff]
    %v122 = vld [vmem:[#allocation5 + $0x1f8] sm:$0xff]
    %v123 = vld [vmem:[#allocation7] sm:$0xff]
    %v124 = vld [vmem:[#allocation7 + $0x8] sm:$0xff]
    %v125 = vld [vmem:[#allocation7 + $0x10] sm:$0xff]
    %v126 = vld [vmem:[#allocation7 + $0x18] sm:$0xff]
    %v127 = vld [vmem:[#allocation7 + $0x20] sm:$0xff]
    %v128 = vld [vmem:[#allocation7 + $0x28] sm:$0xff]
    %v129 = vld [vmem:[#allocation7 + $0x30] sm:$0xff]
    %v130 = vld [vmem:[#allocation7 + $0x38] sm:$0xff]
    %v131 = vld [vmem:[#allocation7 + $0x40] sm:$0xff]
    %v132 = vld [vmem:[#allocation7 + $0x48] sm:$0xff]
    %v133 = vld [vmem:[#allocation7 + $0x50] sm:$0xff]
    %v134 = vld [vmem:[#allocation7 + $0x58] sm:$0xff]
    %v135 = vld [vmem:[#allocation7 + $0x60] sm:$0xff]
    %v136 = vld [vmem:[#allocation7 + $0x68] sm:$0xff]
    %v137 = vld [vmem:[#allocation7 + $0x70] sm:$0xff]
    %v138 = vld [vmem:[#allocation7 + $0x78] sm:$0xff]
    %v139 = vld [vmem:[#allocation7 + $0x80] sm:$0xff]
    %v140 = vld [vmem:[#allocation7 + $0x88] sm:$0xff]
    %v141 = vld [vmem:[#allocation7 + $0x90] sm:$0xff]
    %v142 = vld [vmem:[#allocation7 + $0x98] sm:$0xff]
    %v143 = vld [vmem:[#allocation7 + $0xa0] sm:$0xff]
    %v144 = vld [vmem:[#allocation7 + $0xa8] sm:$0xff]
    %v145 = vld [vmem:[#allocation7 + $0xb0] sm:$0xff]
    %v146 = vld [vmem:[#allocation7 + $0xb8] sm:$0xff]
    %v147 = vld [vmem:[#allocation7 + $0xc0] sm:$0xff]
    %v148 = vld [vmem:[#allocation7 + $0xc8] sm:$0xff]
    %v149 = vld [vmem:[#allocation7 + $0xd0] sm:$0xff]
    %v150 = vld [vmem:[#allocation7 + $0xd8] sm:$0xff]
    %v151 = vld [vmem:[#allocation7 + $0xe0] sm:$0xff]
    %v152 = vld [vmem:[#allocation7 + $0xe8] sm:$0xff]
    %v153 = vld [vmem:[#allocation7 + $0xf0] sm:$0xff]
    %v154 = vld [vmem:[#allocation7 + $0xf8] sm:$0xff]
    %v155 = vld [vmem:[#allocation7 + $0x100] sm:$0xff]
    %v156 = vld [vmem:[#allocation7 + $0x108] sm:$0xff]
    %v157 = vld [vmem:[#allocation7 + $0x110] sm:$0xff]
    %v158 = vld [vmem:[#allocation7 + $0x118] sm:$0xff]
    %v159 = vld [vmem:[#allocation7 + $0x120] sm:$0xff]
    %v160 = vld [vmem:[#allocation7 + $0x128] sm:$0xff]
    %v161 = vld [vmem:[#allocation7 + $0x130] sm:$0xff]
    %v162 = vld [vmem:[#allocation7 + $0x138] sm:$0xff]
    %v163 = vld [vmem:[#allocation7 + $0x140] sm:$0xff]
    %v164 = vld [vmem:[#allocation7 + $0x148] sm:$0xff]
    %v165 = vld [vmem:[#allocation7 + $0x150] sm:$0xff]
    %v166 = vld [vmem:[#allocation7 + $0x158] sm:$0xff]
    %v167 = vld [vmem:[#allocation7 + $0x160] sm:$0xff]
    %v168 = vld [vmem:[#allocation7 + $0x168] sm:$0xff]
    %v169 = vld [vmem:[#allocation7 + $0x170] sm:$0xff]
    %v170 = vld [vmem:[#allocation7 + $0x178] sm:$0xff]
    %v171 = vld [vmem:[#allocation7 + $0x180] sm:$0xff]
    %v172 = vld [vmem:[#allocation7 + $0x188] sm:$0xff]
    %v173 = vld [vmem:[#allocation7 + $0x190] sm:$0xff]
    %v174 = vld [vmem:[#allocation7 + $0x198] sm:$0xff]
    %v175 = vld [vmem:[#allocation7 + $0x1a0] sm:$0xff]
    %v176 = vld [vmem:[#allocation7 + $0x1a8] sm:$0xff]
    %v177 = vld [vmem:[#allocation7 + $0x1b0] sm:$0xff]
    %v178 = vld [vmem:[#allocation7 + $0x1b8] sm:$0xff]
    %v179 = vld [vmem:[#allocation7 + $0x1c0] sm:$0xff]
    %v180 = vld [vmem:[#allocation7 + $0x1c8] sm:$0xff]
    %v181 = vld [vmem:[#allocation7 + $0x1d0] sm:$0xff]
    %v182 = vld [vmem:[#allocation7 + $0x1d8] sm:$0xff]
    %v183 = vld [vmem:[#allocation7 + $0x1e0] sm:$0xff]
    %v184 = vld [vmem:[#allocation7 + $0x1e8] sm:$0xff]
    %v185 = vld [vmem:[#allocation7 + $0x1f0] sm:$0xff]
    %v186 = vld [vmem:[#allocation7 + $0x1f8] sm:$0xff]
    %v187 = vld [vmem:[#allocation7 + $0x200] sm:$0xff]
    %v188 = vld [vmem:[#allocation7 + $0x208] sm:$0xff]
    %v189 = vld [vmem:[#allocation7 + $0x210] sm:$0xff]
    %v190 = vld [vmem:[#allocation7 + $0x218] sm:$0xff]
    %v191 = vld [vmem:[#allocation7 + $0x220] sm:$0xff]
    %v192 = vld [vmem:[#allocation7 + $0x228] sm:$0xff]
    %v193 = vld [vmem:[#allocation7 + $0x230] sm:$0xff]
    %v194 = vld [vmem:[#allocation7 + $0x238] sm:$0xff]
    %v195 = vld [vmem:[#allocation7 + $0x240] sm:$0xff]
    %v196 = vld [vmem:[#allocation7 + $0x248] sm:$0xff]
    %v197 = vld [vmem:[#allocation7 + $0x250] sm:$0xff]
    %v198 = vld [vmem:[#allocation7 + $0x258] sm:$0xff]
    %v199 = vld [vmem:[#allocation7 + $0x260] sm:$0xff]
    %v200 = vld [vmem:[#allocation7 + $0x268] sm:$0xff]
    %v201 = vld [vmem:[#allocation7 + $0x270] sm:$0xff]
    %v202 = vld [vmem:[#allocation7 + $0x278] sm:$0xff]
    %v203 = vld [vmem:[#allocation7 + $0x280] sm:$0xff]
    %v204 = vld [vmem:[#allocation7 + $0x288] sm:$0xff]
    %v205 = vld [vmem:[#allocation7 + $0x290] sm:$0xff]
    %v206 = vld [vmem:[#allocation7 + $0x298] sm:$0xff]
    %v207 = vld [vmem:[#allocation7 + $0x2a0] sm:$0xff]
    %v208 = vld [vmem:[#allocation7 + $0x2a8] sm:$0xff]
    %v209 = vld [vmem:[#allocation7 + $0x2b0] sm:$0xff]
    %v210 = vld [vmem:[#allocation7 + $0x2b8] sm:$0xff]
    %v211 = vld [vmem:[#allocation7 + $0x2c0] sm:$0xff]
    %v212 = vld [vmem:[#allocation7 + $0x2c8] sm:$0xff]
    %v213 = vld [vmem:[#allocation7 + $0x2d0] sm:$0xff]
    %v214 = vld [vmem:[#allocation7 + $0x2d8] sm:$0xff]
    %v215 = vld [vmem:[#allocation7 + $0x2e0] sm:$0xff]
    %v216 = vld [vmem:[#allocation7 + $0x2e8] sm:$0xff]
    %v217 = vld [vmem:[#allocation7 + $0x2f0] sm:$0xff]
    %v218 = vld [vmem:[#allocation7 + $0x2f8] sm:$0xff]
    %v219 = vld [vmem:[#allocation7 + $0x300] sm:$0xff]
    %v220 = vld [vmem:[#allocation7 + $0x308] sm:$0xff]
    %v221 = vld [vmem:[#allocation7 + $0x310] sm:$0xff]
    %v222 = vld [vmem:[#allocation7 + $0x318] sm:$0xff]
    %v223 = vld [vmem:[#allocation7 + $0x320] sm:$0xff]
    %v224 = vld [vmem:[#allocation7 + $0x328] sm:$0xff]
    %v225 = vld [vmem:[#allocation7 + $0x330] sm:$0xff]
    %v226 = vld [vmem:[#allocation7 + $0x338] sm:$0xff]
    %v227 = vld [vmem:[#allocation7 + $0x340] sm:$0xff]
    %v228 = vld [vmem:[#allocation7 + $0x348] sm:$0xff]
    %v229 = vld [vmem:[#allocation7 + $0x350] sm:$0xff]
    %v230 = vld [vmem:[#allocation7 + $0x358] sm:$0xff]
    %v231 = vld [vmem:[#allocation7 + $0x360] sm:$0xff]
    %v232 = vld [vmem:[#allocation7 + $0x368] sm:$0xff]
    %v233 = vld [vmem:[#allocation7 + $0x370] sm:$0xff]
    %v234 = vld [vmem:[#allocation7 + $0x378] sm:$0xff]
    %v235 = vld [vmem:[#allocation7 + $0x380] sm:$0xff]
    %v236 = vld [vmem:[#allocation7 + $0x388] sm:$0xff]
    %v237 = vld [vmem:[#allocation7 + $0x390] sm:$0xff]
    %v238 = vld [vmem:[#allocation7 + $0x398] sm:$0xff]
    %v239 = vld [vmem:[#allocation7 + $0x3a0] sm:$0xff]
    %v240 = vld [vmem:[#allocation7 + $0x3a8] sm:$0xff]
    %v241 = vld [vmem:[#allocation7 + $0x3b0] sm:$0xff]
    %v242 = vld [vmem:[#allocation7 + $0x3b8] sm:$0xff]
    %v243 = vld [vmem:[#allocation7 + $0x3c0] sm:$0xff]
    %v244 = vld [vmem:[#allocation7 + $0x3c8] sm:$0xff]
    %v245 = vld [vmem:[#allocation7 + $0x3d0] sm:$0xff]
    %v246 = vld [vmem:[#allocation7 + $0x3d8] sm:$0xff]
    %v247 = vld [vmem:[#allocation7 + $0x3e0] sm:$0xff]
    %v248 = vld [vmem:[#allocation7 + $0x3e8] sm:$0xff]
    %v249 = vld [vmem:[#allocation7 + $0x3f0] sm:$0xff]
    %v250 = vld [vmem:[#allocation7 + $0x3f8] sm:$0xff]
    %v251 = vld [vmem:[%s3] sm:$0xf]
    %v253 = vlaneseq
    %v254 = vshrl.u32 %v253, 7
    %v255 = vsub.s32 0, %v254
    %v256 = vrot.slane %v251, %v255
    %v257 = vlaneseq
    %v258 = vshrl.u32 %v257, 7
    %v259 = vsub.s32 1, %v258
    %v260 = vrot.slane %v251, %v259
    %v261 = vlaneseq
    %v262 = vshrl.u32 %v261, 7
    %v263 = vsub.s32 2, %v262
    %v264 = vrot.slane %v251, %v263
    %v265 = vlaneseq
    %v266 = vshrl.u32 %v265, 7
    %v267 = vsub.s32 3, %v266
    %v268 = vrot.slane %v251, %v267
    %v273 = vld [vmem:[#allocation2] sm:$0xff]
    %v274 = vld [vmem:[#allocation2 + $0x8] sm:$0xff]
    %v275 = vld [vmem:[#allocation2 + $0x10] sm:$0xff]
    %v276 = vld [vmem:[#allocation2 + $0x18] sm:$0xff]
    %277 = vmatprep.subr.mxu0 %v60
    %278 = vmatpush1.msra.mxu0 %v59
    %279 = vmatprep.subr.mxu0 %v64
    %280 = vmatpush1.msra.mxu0 %v63
    %281 = vmatprep.subr.mxu0 %v68
    %282 = vmatpush1.msra.mxu0 %v67
    %283 = vmatprep.subr.mxu0 %v72
    %284 = vmatpush1.msra.mxu0 %v71
    %285 = vmatprep.subr.mxu0 %v76
    %286 = vmatpush1.msra.mxu0 %v75
    %287 = vmatprep.subr.mxu0 %v80
    %288 = vmatpush1.msra.mxu0 %v79
    %289 = vmatprep.subr.mxu0 %v84
    %290 = vmatpush1.msra.mxu0 %v83
    %291 = vmatprep.subr.mxu0 %v88
    %292 = vmatpush1.msra.mxu0 %v87
    %293 = vmatprep.subr.mxu0 %v92
    %294 = vmatpush1.msra.mxu0 %v91
    %295 = vmatprep.subr.mxu0 %v96
    %296 = vmatpush1.msra.mxu0 %v95
    %297 = vmatprep.subr.mxu0 %v100
    %298 = vmatpush1.msra.mxu0 %v99
    %299 = vmatprep.subr.mxu0 %v104
    %300 = vmatpush1.msra.mxu0 %v103
    %301 = vmatprep.subr.mxu0 %v108
    %302 = vmatpush1.msra.mxu0 %v107
    %303 = vmatprep.subr.mxu0 %v112
    %304 = vmatpush1.msra.mxu0 %v111
    %305 = vmatprep.subr.mxu0 %v116
    %306 = vmatpush1.msra.mxu0 %v115
    %307 = vmatprep.subr.mxu0 %v120
    %308 = vmatpush1.msra.mxu0 %v119
    %309 = vmatprep.subr.mxu0 0.0
    %310 = vmatpush1.msra.mxu0 0.0
    %311 = vmatprep.subr.mxu0 0.0
    %312 = vmatpush1.msra.mxu0 0.0
    %313 = vmatprep.subr.mxu0 0.0
    %314 = vmatpush1.msra.mxu0 0.0
    %315 = vmatprep.subr.mxu0 0.0
    %316 = vmatpush1.msra.mxu0 0.0
    %317 = vmatprep.subr.mxu0 0.0
    %318 = vmatpush1.msra.mxu0 0.0
    %319 = vmatprep.subr.mxu0 0.0
    %320 = vmatpush1.msra.mxu0 0.0
    %321 = vmatprep.subr.mxu0 0.0
    %322 = vmatpush1.msra.mxu0 0.0
    %323 = vmatprep.subr.mxu0 0.0
    %324 = vmatpush1.msra.mxu0 0.0
    %325 = vmatprep.subr.mxu0 0.0
    %326 = vmatpush1.msra.mxu0 0.0
    %327 = vmatprep.subr.mxu0 0.0
    %328 = vmatpush1.msra.mxu0 0.0
    %329 = vmatprep.subr.mxu0 0.0
    %330 = vmatpush1.msra.mxu0 0.0
    %331 = vmatprep.subr.mxu0 0.0
    %332 = vmatpush1.msra.mxu0 0.0
    %333 = vmatprep.subr.mxu0 0.0
    %334 = vmatpush1.msra.mxu0 0.0
    %335 = vmatprep.subr.mxu0 0.0
    %336 = vmatpush1.msra.mxu0 0.0
    %337 = vmatprep.subr.mxu0 0.0
    %338 = vmatpush1.msra.mxu0 0.0
    %339 = vmatprep.subr.mxu0 0.0
    %340 = vmatpush1.msra.mxu0 0.0
    %341 = vmatprep.mubr.f32.mxu0 0.0
    %342 = vmatmul.mubr.f32.gmra.mrb[0].mxu0 0.0
    %v343 = vpop.f32.mrb[0].mxu0
    %v344 = vadd.f32 0.0, %v343
    %v345 = vpop.f32.mrb[0].mxu0
    %v346 = vadd.f32 0.0, %v345
    %347 = vdwg.mxu0
    %348 = vmatprep.subr.mxu0 %v62
    %349 = vmatpush1.msra.mxu0 %v61
    %350 = vmatprep.subr.mxu0 %v66
    %351 = vmatpush1.msra.mxu0 %v65
    %352 = vmatprep.subr.mxu0 %v70
    %353 = vmatpush1.msra.mxu0 %v69
    %354 = vmatprep.subr.mxu0 %v74
    %355 = vmatpush1.msra.mxu0 %v73
    %356 = vmatprep.subr.mxu0 %v78
    %357 = vmatpush1.msra.mxu0 %v77
    %358 = vmatprep.subr.mxu0 %v82
    %359 = vmatpush1.msra.mxu0 %v81
    %360 = vmatprep.subr.mxu0 %v86
    %361 = vmatpush1.msra.mxu0 %v85
    %362 = vmatprep.subr.mxu0 %v90
    %363 = vmatpush1.msra.mxu0 %v89
    %364 = vmatprep.subr.mxu0 %v94
    %365 = vmatpush1.msra.mxu0 %v93
    %366 = vmatprep.subr.mxu0 %v98
    %367 = vmatpush1.msra.mxu0 %v97
    %368 = vmatprep.subr.mxu0 %v102
    %369 = vmatpush1.msra.mxu0 %v101
    %370 = vmatprep.subr.mxu0 %v106
    %371 = vmatpush1.msra.mxu0 %v105
    %372 = vmatprep.subr.mxu0 %v110
    %373 = vmatpush1.msra.mxu0 %v109
    %374 = vmatprep.subr.mxu0 %v114
    %375 = vmatpush1.msra.mxu0 %v113
    %376 = vmatprep.subr.mxu0 %v118
    %377 = vmatpush1.msra.mxu0 %v117
    %378 = vmatprep.subr.mxu0 %v122
    %379 = vmatpush1.msra.mxu0 %v121
    %380 = vmatprep.subr.mxu0 0.0
    %381 = vmatpush1.msra.mxu0 0.0
    %382 = vmatprep.subr.mxu0 0.0
    %383 = vmatpush1.msra.mxu0 0.0
    %384 = vmatprep.subr.mxu0 0.0
    %385 = vmatpush1.msra.mxu0 0.0
    %386 = vmatprep.subr.mxu0 0.0
    %387 = vmatpush1.msra.mxu0 0.0
    %388 = vmatprep.subr.mxu0 0.0
    %389 = vmatpush1.msra.mxu0 0.0
    %390 = vmatprep.subr.mxu0 0.0
    %391 = vmatpush1.msra.mxu0 0.0
    %392 = vmatprep.subr.mxu0 0.0
    %393 = vmatpush1.msra.mxu0 0.0
    %394 = vmatprep.subr.mxu0 0.0
    %395 = vmatpush1.msra.mxu0 0.0
    %396 = vmatprep.subr.mxu0 0.0
    %397 = vmatpush1.msra.mxu0 0.0
    %398 = vmatprep.subr.mxu0 0.0
    %399 = vmatpush1.msra.mxu0 0.0
    %400 = vmatprep.subr.mxu0 0.0
    %401 = vmatpush1.msra.mxu0 0.0
    %402 = vmatprep.subr.mxu0 0.0
    %403 = vmatpush1.msra.mxu0 0.0
    %404 = vmatprep.subr.mxu0 0.0
    %405 = vmatpush1.msra.mxu0 0.0
    %406 = vmatprep.subr.mxu0 0.0
    %407 = vmatpush1.msra.mxu0 0.0
    %408 = vmatprep.subr.mxu0 0.0
    %409 = vmatpush1.msra.mxu0 0.0
    %410 = vmatprep.subr.mxu0 0.0
    %411 = vmatpush1.msra.mxu0 0.0
    %412 = vmatprep.mubr.f32.mxu0 0.0
    %413 = vmatmul.mubr.f32.gmra.mrb[0].mxu0 0.0
    %v414 = vpop.f32.mrb[0].mxu0
    %v415 = vadd.f32 0.0, %v414
    %v416 = vpop.f32.mrb[0].mxu0
    %v417 = vadd.f32 0.0, %v416
    %418 = vdwg.mxu0
    %v419 = vadd.f32 %v273, %v344
    %v420 = vadd.f32 %v274, %v346
    %v421 = vadd.f32 %v275, %v415
    %v422 = vadd.f32 %v276, %v417
    %v423 = vmul.f32 %v419, 0.5
    %v424 = vtanh.pop %v423
    %v425 = vadd.f32 %v424, 1.0
    %v426 = vmul.f32 %v425, 0.5
    %v427 = vmul.f32 %v420, 0.5
    %v428 = vtanh.pop %v427
    %v429 = vadd.f32 %v428, 1.0
    %v430 = vmul.f32 %v429, 0.5
    %v431 = vtanh.pop %v421
    %v432 = vmul.f32 %v422, 0.5
    %v433 = vtanh.pop %v432
    %v434 = vadd.f32 %v433, 1.0
    %v435 = vmul.f32 %v434, 0.5
    %v436 = vmul.f32 %v430, 0.0
    %v437 = vmul.f32 %v426, %v431
    %v438 = vadd.f32 %v436, %v437
    %v439 = vtanh.pop %v438
    %v440 = vmul.f32 %v435, %v439
    %441 = vmatprep.subr.mxu0 %v124
    %442 = vmatpush1.msra.mxu0 %v123
    %443 = vmatprep.subr.mxu0 %v128
    %444 = vmatpush1.msra.mxu0 %v127
    %445 = vmatprep.subr.mxu0 %v132
    %446 = vmatpush1.msra.mxu0 %v131
    %447 = vmatprep.subr.mxu0 %v136
    %448 = vmatpush1.msra.mxu0 %v135
    %449 = vmatprep.subr.mxu0 %v140
    %450 = vmatpush1.msra.mxu0 %v139
    %451 = vmatprep.subr.mxu0 %v144
    %452 = vmatpush1.msra.mxu0 %v143
    %453 = vmatprep.subr.mxu0 %v148
    %454 = vmatpush1.msra.mxu0 %v147
    %455 = vmatprep.subr.mxu0 %v152
    %456 = vmatpush1.msra.mxu0 %v151
    %457 = vmatprep.subr.mxu0 %v156
    %458 = vmatpush1.msra.mxu0 %v155
    %459 = vmatprep.subr.mxu0 %v160
    %460 = vmatpush1.msra.mxu0 %v159
    %461 = vmatprep.subr.mxu0 %v164
    %462 = vmatpush1.msra.mxu0 %v163
    %463 = vmatprep.subr.mxu0 %v168
    %464 = vmatpush1.msra.mxu0 %v167
    %465 = vmatprep.subr.mxu0 %v172
    %466 = vmatpush1.msra.mxu0 %v171
    %467 = vmatprep.subr.mxu0 %v176
    %468 = vmatpush1.msra.mxu0 %v175
    %469 = vmatprep.subr.mxu0 %v180
    %470 = vmatpush1.msra.mxu0 %v179
    %471 = vmatprep.subr.mxu0 %v184
    %472 = vmatpush1.msra.mxu0 %v183
    %473 = vmatprep.subr.mxu0 %v188
    %474 = vmatpush1.msra.mxu0 %v187
    %475 = vmatprep.subr.mxu0 %v192
    %476 = vmatpush1.msra.mxu0 %v191
    %477 = vmatprep.subr.mxu0 %v196
    %478 = vmatpush1.msra.mxu0 %v195
    %479 = vmatprep.subr.mxu0 %v200
    %480 = vmatpush1.msra.mxu0 %v199
    %481 = vmatprep.subr.mxu0 %v204
    %482 = vmatpush1.msra.mxu0 %v203
    %483 = vmatprep.subr.mxu0 %v208
    %484 = vmatpush1.msra.mxu0 %v207
    %485 = vmatprep.subr.mxu0 %v212
    %486 = vmatpush1.msra.mxu0 %v211
    %487 = vmatprep.subr.mxu0 %v216
    %488 = vmatpush1.msra.mxu0 %v215
    %489 = vmatprep.subr.mxu0 %v220
    %490 = vmatpush1.msra.mxu0 %v219
    %491 = vmatprep.subr.mxu0 %v224
    %492 = vmatpush1.msra.mxu0 %v223
    %493 = vmatprep.subr.mxu0 %v228
    %494 = vmatpush1.msra.mxu0 %v227
    %495 = vmatprep.subr.mxu0 %v232
    %496 = vmatpush1.msra.mxu0 %v231
    %497 = vmatprep.subr.mxu0 %v236
    %498 = vmatpush1.msra.mxu0 %v235
    %499 = vmatprep.subr.mxu0 %v240
    %500 = vmatpush1.msra.mxu0 %v239
    %501 = vmatprep.subr.mxu0 %v244
    %502 = vmatpush1.msra.mxu0 %v243
    %503 = vmatprep.subr.mxu0 %v248
    %504 = vmatpush1.msra.mxu0 %v247
    %505 = vmatprep.mubr.f32.mxu0 0.0
    %506 = vmatmul.mubr.f32.gmra.mrb[0].mxu0 %v440
    %v507 = vpop.f32.mrb[0].mxu0
    %v508 = vadd.f32 %v256, %v507
    %v509 = vpop.f32.mrb[0].mxu0
    %v510 = vadd.f32 %v260, %v509
    %511 = vdwg.mxu0
    %512 = vmatprep.subr.mxu0 %v126
    %513 = vmatpush1.msra.mxu0 %v125
    %514 = vmatprep.subr.mxu0 %v130
    %515 = vmatpush1.msra.mxu0 %v129
    %516 = vmatprep.subr.mxu0 %v134
    %517 = vmatpush1.msra.mxu0 %v133
    %518 = vmatprep.subr.mxu0 %v138
    %519 = vmatpush1.msra.mxu0 %v137
    %520 = vmatprep.subr.mxu0 %v142
    %521 = vmatpush1.msra.mxu0 %v141
    %522 = vmatprep.subr.mxu0 %v146
    %523 = vmatpush1.msra.mxu0 %v145
    %524 = vmatprep.subr.mxu0 %v150
    %525 = vmatpush1.msra.mxu0 %v149
    %526 = vmatprep.subr.mxu0 %v154
    %527 = vmatpush1.msra.mxu0 %v153
    %528 = vmatprep.subr.mxu0 %v158
    %529 = vmatpush1.msra.mxu0 %v157
    %530 = vmatprep.subr.mxu0 %v162
    %531 = vmatpush1.msra.mxu0 %v161
    %532 = vmatprep.subr.mxu0 %v166
    %533 = vmatpush1.msra.mxu0 %v165
    %534 = vmatprep.subr.mxu0 %v170
    %535 = vmatpush1.msra.mxu0 %v169
    %536 = vmatprep.subr.mxu0 %v174
    %537 = vmatpush1.msra.mxu0 %v173
    %538 = vmatprep.subr.mxu0 %v178
    %539 = vmatpush1.msra.mxu0 %v177
    %540 = vmatprep.subr.mxu0 %v182
    %541 = vmatpush1.msra.mxu0 %v181
    %542 = vmatprep.subr.mxu0 %v186
    %543 = vmatpush1.msra.mxu0 %v185
    %544 = vmatprep.subr.mxu0 %v190
    %545 = vmatpush1.msra.mxu0 %v189
    %546 = vmatprep.subr.mxu0 %v194
    %547 = vmatpush1.msra.mxu0 %v193
    %548 = vmatprep.subr.mxu0 %v198
    %549 = vmatpush1.msra.mxu0 %v197
    %550 = vmatprep.subr.mxu0 %v202
    %551 = vmatpush1.msra.mxu0 %v201
    %552 = vmatprep.subr.mxu0 %v206
    %553 = vmatpush1.msra.mxu0 %v205
    %554 = vmatprep.subr.mxu0 %v210
    %555 = vmatpush1.msra.mxu0 %v209
    %556 = vmatprep.subr.mxu0 %v214
    %557 = vmatpush1.msra.mxu0 %v213
    %558 = vmatprep.subr.mxu0 %v218
    %559 = vmatpush1.msra.mxu0 %v217
    %560 = vmatprep.subr.mxu0 %v222
    %561 = vmatpush1.msra.mxu0 %v221
    %562 = vmatprep.subr.mxu0 %v226
    %563 = vmatpush1.msra.mxu0 %v225
    %564 = vmatprep.subr.mxu0 %v230
    %565 = vmatpush1.msra.mxu0 %v229
    %566 = vmatprep.subr.mxu0 %v234
    %567 = vmatpush1.msra.mxu0 %v233
    %568 = vmatprep.subr.mxu0 %v238
    %569 = vmatpush1.msra.mxu0 %v237
    %570 = vmatprep.subr.mxu0 %v242
    %571 = vmatpush1.msra.mxu0 %v241
    %572 = vmatprep.subr.mxu0 %v246
    %573 = vmatpush1.msra.mxu0 %v245
    %574 = vmatprep.subr.mxu0 %v250
    %575 = vmatpush1.msra.mxu0 %v249
    %576 = vmatprep.mubr.f32.mxu0 0.0
    %577 = vmatmul.mubr.f32.gmra.mrb[0].mxu0 %v440
    %v578 = vpop.f32.mrb[0].mxu0
    %v579 = vadd.f32 %v264, %v578
    %v580 = vpop.f32.mrb[0].mxu0
    %v581 = vadd.f32 %v268, %v580
    %582 = vdwg.mxu0
    %v583 = vmul.f32 %v508, 0.5
    %v584 = vtanh.pop %v583
    %v585 = vadd.f32 %v584, 1.0
    %v586 = vmul.f32 %v585, 0.5
    %v587 = vmul.f32 %v510, 0.5
    %v588 = vtanh.pop %v587
    %v589 = vadd.f32 %v588, 1.0
    %v590 = vmul.f32 %v589, 0.5
    %v591 = vtanh.pop %v579
    %v592 = vmul.f32 %v581, 0.5
    %v593 = vtanh.pop %v592
    %v594 = vadd.f32 %v593, 1.0
    %v595 = vmul.f32 %v594, 0.5
    %v596 = vmul.f32 %v590, 0.0
    %v597 = vmul.f32 %v586, %v591
    %v598 = vadd.f32 %v596, %v597
    %v599 = vtanh.pop %v598
    %v600 = vmul.f32 %v595, %v599
    %s601 = scalar_lea.vmem [#allocation2], 32
    %v602 = vld [vmem:[%s601] sm:$0xff]
    %v603 = vld [vmem:[%s601 + $0x8] sm:$0xff]
    %v604 = vld [vmem:[%s601 + $0x10] sm:$0xff]
    %v605 = vld [vmem:[%s601 + $0x18] sm:$0xff]
    %606 = vmatprep.subr.mxu0 %v60
    %607 = vmatpush1.msra.mxu0 %v59
    %608 = vmatprep.subr.mxu0 %v64
    %609 = vmatpush1.msra.mxu0 %v63
    %610 = vmatprep.subr.mxu0 %v68
    %611 = vmatpush1.msra.mxu0 %v67
    %612 = vmatprep.subr.mxu0 %v72
    %613 = vmatpush1.msra.mxu0 %v71
    %614 = vmatprep.subr.mxu0 %v76
    %615 = vmatpush1.msra.mxu0 %v75
    %616 = vmatprep.subr.mxu0 %v80
    %617 = vmatpush1.msra.mxu0 %v79
    %618 = vmatprep.subr.mxu0 %v84
    %619 = vmatpush1.msra.mxu0 %v83
    %620 = vmatprep.subr.mxu0 %v88
    %621 = vmatpush1.msra.mxu0 %v87
    %622 = vmatprep.subr.mxu0 %v92
    %623 = vmatpush1.msra.mxu0 %v91
    %624 = vmatprep.subr.mxu0 %v96
    %625 = vmatpush1.msra.mxu0 %v95
    %626 = vmatprep.subr.mxu0 %v100
    %627 = vmatpush1.msra.mxu0 %v99
    %628 = vmatprep.subr.mxu0 %v104
    %629 = vmatpush1.msra.mxu0 %v103
    %630 = vmatprep.subr.mxu0 %v108
    %631 = vmatpush1.msra.mxu0 %v107
    %632 = vmatprep.subr.mxu0 %v112
    %633 = vmatpush1.msra.mxu0 %v111
    %634 = vmatprep.subr.mxu0 %v116
    %635 = vmatpush1.msra.mxu0 %v115
    %636 = vmatprep.subr.mxu0 %v120
    %637 = vmatpush1.msra.mxu0 %v119
    %638 = vmatprep.subr.mxu0 0.0
    %639 = vmatpush1.msra.mxu0 0.0
    %640 = vmatprep.subr.mxu0 0.0
    %641 = vmatpush1.msra.mxu0 0.0
    %642 = vmatprep.subr.mxu0 0.0
    %643 = vmatpush1.msra.mxu0 0.0
    %644 = vmatprep.subr.mxu0 0.0
    %645 = vmatpush1.msra.mxu0 0.0
    %646 = vmatprep.subr.mxu0 0.0
    %647 = vmatpush1.msra.mxu0 0.0
    %648 = vmatprep.subr.mxu0 0.0
    %649 = vmatpush1.msra.mxu0 0.0
    %650 = vmatprep.subr.mxu0 0.0
    %651 = vmatpush1.msra.mxu0 0.0
    %652 = vmatprep.subr.mxu0 0.0
    %653 = vmatpush1.msra.mxu0 0.0
    %654 = vmatprep.subr.mxu0 0.0
    %655 = vmatpush1.msra.mxu0 0.0
    %656 = vmatprep.subr.mxu0 0.0
    %657 = vmatpush1.msra.mxu0 0.0
    %658 = vmatprep.subr.mxu0 0.0
    %659 = vmatpush1.msra.mxu0 0.0
    %660 = vmatprep.subr.mxu0 0.0
    %661 = vmatpush1.msra.mxu0 0.0
    %662 = vmatprep.subr.mxu0 0.0
    %663 = vmatpush1.msra.mxu0 0.0
    %664 = vmatprep.subr.mxu0 0.0
    %665 = vmatpush1.msra.mxu0 0.0
    %666 = vmatprep.subr.mxu0 0.0
    %667 = vmatpush1.msra.mxu0 0.0
    %668 = vmatprep.subr.mxu0 0.0
    %669 = vmatpush1.msra.mxu0 0.0
    %670 = vmatprep.mubr.f32.mxu0 0.0
    %671 = vmatmul.mubr.f32.gmra.mrb[0].mxu0 %v440
    %v672 = vpop.f32.mrb[0].mxu0
    %v673 = vadd.f32 0.0, %v672
    %v674 = vpop.f32.mrb[0].mxu0
    %v675 = vadd.f32 0.0, %v674
    %676 = vdwg.mxu0
    %677 = vmatprep.subr.mxu0 %v62
    %678 = vmatpush1.msra.mxu0 %v61
    %679 = vmatprep.subr.mxu0 %v66
    %680 = vmatpush1.msra.mxu0 %v65
    %681 = vmatprep.subr.mxu0 %v70
    %682 = vmatpush1.msra.mxu0 %v69
    %683 = vmatprep.subr.mxu0 %v74
    %684 = vmatpush1.msra.mxu0 %v73
    %685 = vmatprep.subr.mxu0 %v78
    %686 = vmatpush1.msra.mxu0 %v77
    %687 = vmatprep.subr.mxu0 %v82
    %688 = vmatpush1.msra.mxu0 %v81
    %689 = vmatprep.subr.mxu0 %v86
    %690 = vmatpush1.msra.mxu0 %v85
    %691 = vmatprep.subr.mxu0 %v90
    %692 = vmatpush1.msra.mxu0 %v89
    %693 = vmatprep.subr.mxu0 %v94
    %694 = vmatpush1.msra.mxu0 %v93
    %695 = vmatprep.subr.mxu0 %v98
    %696 = vmatpush1.msra.mxu0 %v97
    %697 = vmatprep.subr.mxu0 %v102
    %698 = vmatpush1.msra.mxu0 %v101
    %699 = vmatprep.subr.mxu0 %v106
    %700 = vmatpush1.msra.mxu0 %v105
    %701 = vmatprep.subr.mxu0 %v110
    %702 = vmatpush1.msra.mxu0 %v109
    %703 = vmatprep.subr.mxu0 %v114
    %704 = vmatpush1.msra.mxu0 %v113
    %705 = vmatprep.subr.mxu0 %v118
    %706 = vmatpush1.msra.mxu0 %v117
    %707 = vmatprep.subr.mxu0 %v122
    %708 = vmatpush1.msra.mxu0 %v121
    %709 = vmatprep.subr.mxu0 0.0
    %710 = vmatpush1.msra.mxu0 0.0
    %711 = vmatprep.subr.mxu0 0.0
    %712 = vmatpush1.msra.mxu0 0.0
    %713 = vmatprep.subr.mxu0 0.0
    %714 = vmatpush1.msra.mxu0 0.0
    %715 = vmatprep.subr.mxu0 0.0
    %716 = vmatpush1.msra.mxu0 0.0
    %717 = vmatprep.subr.mxu0 0.0
    %718 = vmatpush1.msra.mxu0 0.0
    %719 = vmatprep.subr.mxu0 0.0
    %720 = vmatpush1.msra.mxu0 0.0
    %721 = vmatprep.subr.mxu0 0.0
    %722 = vmatpush1.msra.mxu0 0.0
    %723 = vmatprep.subr.mxu0 0.0
    %724 = vmatpush1.msra.mxu0 0.0
    %725 = vmatprep.subr.mxu0 0.0
    %726 = vmatpush1.msra.mxu0 0.0
    %727 = vmatprep.subr.mxu0 0.0
    %728 = vmatpush1.msra.mxu0 0.0
    %729 = vmatprep.subr.mxu0 0.0
    %730 = vmatpush1.msra.mxu0 0.0
    %731 = vmatprep.subr.mxu0 0.0
    %732 = vmatpush1.msra.mxu0 0.0
    %733 = vmatprep.subr.mxu0 0.0
    %734 = vmatpush1.msra.mxu0 0.0
    %735 = vmatprep.subr.mxu0 0.0
    %736 = vmatpush1.msra.mxu0 0.0
    %737 = vmatprep.subr.mxu0 0.0
    %738 = vmatpush1.msra.mxu0 0.0
    %739 = vmatprep.subr.mxu0 0.0
    %740 = vmatpush1.msra.mxu0 0.0
    %741 = vmatprep.mubr.f32.mxu0 0.0
    %742 = vmatmul.mubr.f32.gmra.mrb[0].mxu0 %v440
    %v743 = vpop.f32.mrb[0].mxu0
    %v744 = vadd.f32 0.0, %v743
    %v745 = vpop.f32.mrb[0].mxu0
    %v746 = vadd.f32 0.0, %v745
    %747 = vdwg.mxu0
    %v748 = vadd.f32 %v602, %v673
    %v749 = vadd.f32 %v603, %v675
    %v750 = vadd.f32 %v604, %v744
    %v751 = vadd.f32 %v605, %v746
    %v752 = vmul.f32 %v748, 0.5
    %v753 = vtanh.pop %v752
    %v754 = vadd.f32 %v753, 1.0
    %v755 = vmul.f32 %v754, 0.5
    %v756 = vmul.f32 %v749, 0.5
    %v757 = vtanh.pop %v756
    %v758 = vadd.f32 %v757, 1.0
    %v759 = vmul.f32 %v758, 0.5
    %v760 = vtanh.pop %v750
    %v761 = vmul.f32 %v751, 0.5
    %v762 = vtanh.pop %v761
    %v763 = vadd.f32 %v762, 1.0
    %v764 = vmul.f32 %v763, 0.5
    %v765 = vmul.f32 %v759, %v438
    %v766 = vmul.f32 %v755, %v760
    %v767 = vadd.f32 %v765, %v766
    %v768 = vtanh.pop %v767
    %v769 = vmul.f32 %v764, %v768
    %770 = vmatprep.subr.mxu0 %v124
    %771 = vmatpush1.msra.mxu0 %v123
    %772 = vmatprep.subr.mxu0 %v128
    %773 = vmatpush1.msra.mxu0 %v127
    %774 = vmatprep.subr.mxu0 %v132
    %775 = vmatpush1.msra.mxu0 %v131
    %776 = vmatprep.subr.mxu0 %v136
    %777 = vmatpush1.msra.mxu0 %v135
    %778 = vmatprep.subr.mxu0 %v140
    %779 = vmatpush1.msra.mxu0 %v139
    %780 = vmatprep.subr.mxu0 %v144
    %781 = vmatpush1.msra.mxu0 %v143
    %782 = vmatprep.subr.mxu0 %v148
    %783 = vmatpush1.msra.mxu0 %v147
    %784 = vmatprep.subr.mxu0 %v152
    %785 = vmatpush1.msra.mxu0 %v151
    %786 = vmatprep.subr.mxu0 %v156
    %787 = vmatpush1.msra.mxu0 %v155
    %788 = vmatprep.subr.mxu0 %v160
    %789 = vmatpush1.msra.mxu0 %v159
    %790 = vmatprep.subr.mxu0 %v164
    %791 = vmatpush1.msra.mxu0 %v163
    %792 = vmatprep.subr.mxu0 %v168
    %793 = vmatpush1.msra.mxu0 %v167
    %794 = vmatprep.subr.mxu0 %v172
    %795 = vmatpush1.msra.mxu0 %v171
    %796 = vmatprep.subr.mxu0 %v176
    %797 = vmatpush1.msra.mxu0 %v175
    %798 = vmatprep.subr.mxu0 %v180
    %799 = vmatpush1.msra.mxu0 %v179
    %800 = vmatprep.subr.mxu0 %v184
    %801 = vmatpush1.msra.mxu0 %v183
    %802 = vmatprep.subr.mxu0 %v188
    %803 = vmatpush1.msra.mxu0 %v187
    %804 = vmatprep.subr.mxu0 %v192
    %805 = vmatpush1.msra.mxu0 %v191
    %806 = vmatprep.subr.mxu0 %v196
    %807 = vmatpush1.msra.mxu0 %v195
    %808 = vmatprep.subr.mxu0 %v200
    %809 = vmatpush1.msra.mxu0 %v199
    %810 = vmatprep.subr.mxu0 %v204
    %811 = vmatpush1.msra.mxu0 %v203
    %812 = vmatprep.subr.mxu0 %v208
    %813 = vmatpush1.msra.mxu0 %v207
    %814 = vmatprep.subr.mxu0 %v212
    %815 = vmatpush1.msra.mxu0 %v211
    %816 = vmatprep.subr.mxu0 %v216
    %817 = vmatpush1.msra.mxu0 %v215
    %818 = vmatprep.subr.mxu0 %v220
    %819 = vmatpush1.msra.mxu0 %v219
    %820 = vmatprep.subr.mxu0 %v224
    %821 = vmatpush1.msra.mxu0 %v223
    %822 = vmatprep.subr.mxu0 %v228
    %823 = vmatpush1.msra.mxu0 %v227
    %824 = vmatprep.subr.mxu0 %v232
    %825 = vmatpush1.msra.mxu0 %v231
    %826 = vmatprep.subr.mxu0 %v236
    %827 = vmatpush1.msra.mxu0 %v235
    %828 = vmatprep.subr.mxu0 %v240
    %829 = vmatpush1.msra.mxu0 %v239
    %830 = vmatprep.subr.mxu0 %v244
    %831 = vmatpush1.msra.mxu0 %v243
    %832 = vmatprep.subr.mxu0 %v248
    %833 = vmatpush1.msra.mxu0 %v247
    %834 = vmatprep.mubr.f32.mxu0 %v600
    %835 = vmatmul.mubr.f32.gmra.mrb[0].mxu0 %v769
    %v836 = vpop.f32.mrb[0].mxu0
    %v837 = vadd.f32 %v256, %v836
    %v838 = vpop.f32.mrb[0].mxu0
    %v839 = vadd.f32 %v260, %v838
    %840 = vdwg.mxu0
    %841 = vmatprep.subr.mxu0 %v126
    %842 = vmatpush1.msra.mxu0 %v125
    %843 = vmatprep.subr.mxu0 %v130
    %844 = vmatpush1.msra.mxu0 %v129
    %845 = vmatprep.subr.mxu0 %v134
    %846 = vmatpush1.msra.mxu0 %v133
    %847 = vmatprep.subr.mxu0 %v138
    %848 = vmatpush1.msra.mxu0 %v137
    %849 = vmatprep.subr.mxu0 %v142
    %850 = vmatpush1.msra.mxu0 %v141
    %851 = vmatprep.subr.mxu0 %v146
    %852 = vmatpush1.msra.mxu0 %v145
    %853 = vmatprep.subr.mxu0 %v150
    %854 = vmatpush1.msra.mxu0 %v149
    %855 = vmatprep.subr.mxu0 %v154
    %856 = vmatpush1.msra.mxu0 %v153
    %857 = vmatprep.subr.mxu0 %v158
    %858 = vmatpush1.msra.mxu0 %v157
    %859 = vmatprep.subr.mxu0 %v162
    %860 = vmatpush1.msra.mxu0 %v161
    %861 = vmatprep.subr.mxu0 %v166
    %862 = vmatpush1.msra.mxu0 %v165
    %863 = vmatprep.subr.mxu0 %v170
    %864 = vmatpush1.msra.mxu0 %v169
    %865 = vmatprep.subr.mxu0 %v174
    %866 = vmatpush1.msra.mxu0 %v173
    %867 = vmatprep.subr.mxu0 %v178
    %868 = vmatpush1.msra.mxu0 %v177
    %869 = vmatprep.subr.mxu0 %v182
    %870 = vmatpush1.msra.mxu0 %v181
    %871 = vmatprep.subr.mxu0 %v186
    %872 = vmatpush1.msra.mxu0 %v185
    %873 = vmatprep.subr.mxu0 %v190
    %874 = vmatpush1.msra.mxu0 %v189
    %875 = vmatprep.subr.mxu0 %v194
    %876 = vmatpush1.msra.mxu0 %v193
    %877 = vmatprep.subr.mxu0 %v198
    %878 = vmatpush1.msra.mxu0 %v197
    %879 = vmatprep.subr.mxu0 %v202
    %880 = vmatpush1.msra.mxu0 %v201
    %881 = vmatprep.subr.mxu0 %v206
    %882 = vmatpush1.msra.mxu0 %v205
    %883 = vmatprep.subr.mxu0 %v210
    %884 = vmatpush1.msra.mxu0 %v209
    %885 = vmatprep.subr.mxu0 %v214
    %886 = vmatpush1.msra.mxu0 %v213
    %887 = vmatprep.subr.mxu0 %v218
    %888 = vmatpush1.msra.mxu0 %v217
    %889 = vmatprep.subr.mxu0 %v222
    %890 = vmatpush1.msra.mxu0 %v221
    %891 = vmatprep.subr.mxu0 %v226
    %892 = vmatpush1.msra.mxu0 %v225
    %893 = vmatprep.subr.mxu0 %v230
    %894 = vmatpush1.msra.mxu0 %v229
    %895 = vmatprep.subr.mxu0 %v234
    %896 = vmatpush1.msra.mxu0 %v233
    %897 = vmatprep.subr.mxu0 %v238
    %898 = vmatpush1.msra.mxu0 %v237
    %899 = vmatprep.subr.mxu0 %v242
    %900 = vmatpush1.msra.mxu0 %v241
    %901 = vmatprep.subr.mxu0 %v246
    %902 = vmatpush1.msra.mxu0 %v245
    %903 = vmatprep.subr.mxu0 %v250
    %904 = vmatpush1.msra.mxu0 %v249
    %905 = vmatprep.mubr.f32.mxu0 %v600
    %906 = vmatmul.mubr.f32.gmra.mrb[0].mxu0 %v769
    %v907 = vpop.f32.mrb[0].mxu0
    %v908 = vadd.f32 %v264, %v907
    %v909 = vpop.f32.mrb[0].mxu0
    %v910 = vadd.f32 %v268, %v909
    %911 = vdwg.mxu0
    %v912 = vmul.f32 %v837, 0.5
    %v913 = vtanh.pop %v912
    %v914 = vadd.f32 %v913, 1.0
    %v915 = vmul.f32 %v914, 0.5
    %v916 = vmul.f32 %v839, 0.5
    %v917 = vtanh.pop %v916
    %v918 = vadd.f32 %v917, 1.0
    %v919 = vmul.f32 %v918, 0.5
    %v920 = vtanh.pop %v908
    %v921 = vmul.f32 %v910, 0.5
    %v922 = vtanh.pop %v921
    %v923 = vadd.f32 %v922, 1.0
    %v924 = vmul.f32 %v923, 0.5
    %v925 = vmul.f32 %v919, %v598
    %v926 = vmul.f32 %v915, %v920
    %v927 = vadd.f32 %v925, %v926
    %v928 = vtanh.pop %v927
    %v929 = vmul.f32 %v924, %v928
    %s930 = scalar_lea.vmem [#allocation2], 64
    %v931 = vld [vmem:[%s930] sm:$0xff]
    %v932 = vld [vmem:[%s930 + $0x8] sm:$0xff]
    %v933 = vld [vmem:[%s930 + $0x10] sm:$0xff]
    %v934 = vld [vmem:[%s930 + $0x18] sm:$0xff]
    %935 = vmatprep.subr.mxu0 %v60
    %936 = vmatpush1.msra.mxu0 %v59
    %937 = vmatprep.subr.mxu0 %v64
    %938 = vmatpush1.msra.mxu0 %v63
    %939 = vmatprep.subr.mxu0 %v68
    %940 = vmatpush1.msra.mxu0 %v67
    %941 = vmatprep.subr.mxu0 %v72
    %942 = vmatpush1.msra.mxu0 %v71
    %943 = vmatprep.subr.mxu0 %v76
    %944 = vmatpush1.msra.mxu0 %v75
    %945 = vmatprep.subr.mxu0 %v80
    %946 = vmatpush1.msra.mxu0 %v79
    %947 = vmatprep.subr.mxu0 %v84
    %948 = vmatpush1.msra.mxu0 %v83
    %949 = vmatprep.subr.mxu0 %v88
    %950 = vmatpush1.msra.mxu0 %v87
    %951 = vmatprep.subr.mxu0 %v92
    %952 = vmatpush1.msra.mxu0 %v91
    %953 = vmatprep.subr.mxu0 %v96
    %954 = vmatpush1.msra.mxu0 %v95
    %955 = vmatprep.subr.mxu0 %v100
    %956 = vmatpush1.msra.mxu0 %v99
    %957 = vmatprep.subr.mxu0 %v104
    %958 = vmatpush1.msra.mxu0 %v103
    %959 = vmatprep.subr.mxu0 %v108
    %960 = vmatpush1.msra.mxu0 %v107
    %961 = vmatprep.subr.mxu0 %v112
    %962 = vmatpush1.msra.mxu0 %v111
    %963 = vmatprep.subr.mxu0 %v116
    %964 = vmatpush1.msra.mxu0 %v115
    %965 = vmatprep.subr.mxu0 %v120
    %966 = vmatpush1.msra.mxu0 %v119
    %967 = vmatprep.subr.mxu0 0.0
    %968 = vmatpush1.msra.mxu0 0.0
    %969 = vmatprep.subr.mxu0 0.0
    %970 = vmatpush1.msra.mxu0 0.0
    %971 = vmatprep.subr.mxu0 0.0
    %972 = vmatpush1.msra.mxu0 0.0
    %973 = vmatprep.subr.mxu0 0.0
    %974 = vmatpush1.msra.mxu0 0.0
    %975 = vmatprep.subr.mxu0 0.0
    %976 = vmatpush1.msra.mxu0 0.0
    %977 = vmatprep.subr.mxu0 0.0
    %978 = vmatpush1.msra.mxu0 0.0
    %979 = vmatprep.subr.mxu0 0.0
    %980 = vmatpush1.msra.mxu0 0.0
    %981 = vmatprep.subr.mxu0 0.0
    %982 = vmatpush1.msra.mxu0 0.0
    %983 = vmatprep.subr.mxu0 0.0
    %984 = vmatpush1.msra.mxu0 0.0
    %985 = vmatprep.subr.mxu0 0.0
    %986 = vmatpush1.msra.mxu0 0.0
    %987 = vmatprep.subr.mxu0 0.0
    %988 = vmatpush1.msra.mxu0 0.0
    %989 = vmatprep.subr.mxu0 0.0
    %990 = vmatpush1.msra.mxu0 0.0
    %991 = vmatprep.subr.mxu0 0.0
    %992 = vmatpush1.msra.mxu0 0.0
    %993 = vmatprep.subr.mxu0 0.0
    %994 = vmatpush1.msra.mxu0 0.0
    %995 = vmatprep.subr.mxu0 0.0
    %996 = vmatpush1.msra.mxu0 0.0
    %997 = vmatprep.subr.mxu0 0.0
    %998 = vmatpush1.msra.mxu0 0.0
    %999 = vmatprep.mubr.f32.mxu0 0.0
    %1000 = vmatmul.mubr.f32.gmra.mrb[0].mxu0 %v769
    %v1001 = vpop.f32.mrb[0].mxu0
    %v1002 = vadd.f32 0.0, %v1001
    %v1003 = vpop.f32.mrb[0].mxu0
    %v1004 = vadd.f32 0.0, %v1003
    %1005 = vdwg.mxu0
    %1006 = vmatprep.subr.mxu0 %v62
    %1007 = vmatpush1.msra.mxu0 %v61
    %1008 = vmatprep.subr.mxu0 %v66
    %1009 = vmatpush1.msra.mxu0 %v65
    %1010 = vmatprep.subr.mxu0 %v70
    %1011 = vmatpush1.msra.mxu0 %v69
    %1012 = vmatprep.subr.mxu0 %v74
    %1013 = vmatpush1.msra.mxu0 %v73
    %1014 = vmatprep.subr.mxu0 %v78
    %1015 = vmatpush1.msra.mxu0 %v77
    %1016 = vmatprep.subr.mxu0 %v82
    %1017 = vmatpush1.msra.mxu0 %v81
    %1018 = vmatprep.subr.mxu0 %v86
    %1019 = vmatpush1.msra.mxu0 %v85
    %1020 = vmatprep.subr.mxu0 %v90
    %1021 = vmatpush1.msra.mxu0 %v89
    %1022 = vmatprep.subr.mxu0 %v94
    %1023 = vmatpush1.msra.mxu0 %v93
    %1024 = vmatprep.subr.mxu0 %v98
    %1025 = vmatpush1.msra.mxu0 %v97
    %1026 = vmatprep.subr.mxu0 %v102
    %1027 = vmatpush1.msra.mxu0 %v101
    %1028 = vmatprep.subr.mxu0 %v106
    %1029 = vmatpush1.msra.mxu0 %v105
    %1030 = vmatprep.subr.mxu0 %v110
    %1031 = vmatpush1.msra.mxu0 %v109
    %1032 = vmatprep.subr.mxu0 %v114
    %1033 = vmatpush1.msra.mxu0 %v113
    %1034 = vmatprep.subr.mxu0 %v118
    %1035 = vmatpush1.msra.mxu0 %v117
    %1036 = vmatprep.subr.mxu0 %v122
    %1037 = vmatpush1.msra.mxu0 %v121
    %1038 = vmatprep.subr.mxu0 0.0
    %1039 = vmatpush1.msra.mxu0 0.0
    %1040 = vmatprep.subr.mxu0 0.0
    %1041 = vmatpush1.msra.mxu0 0.0
    %1042 = vmatprep.subr.mxu0 0.0
    %1043 = vmatpush1.msra.mxu0 0.0
    %1044 = vmatprep.subr.mxu0 0.0
    %1045 = vmatpush1.msra.mxu0 0.0
    %1046 = vmatprep.subr.mxu0 0.0
    %1047 = vmatpush1.msra.mxu0 0.0
    %1048 = vmatprep.subr.mxu0 0.0
    %1049 = vmatpush1.msra.mxu0 0.0
    %1050 = vmatprep.subr.mxu0 0.0
    %1051 = vmatpush1.msra.mxu0 0.0
    %1052 = vmatprep.subr.mxu0 0.0
    %1053 = vmatpush1.msra.mxu0 0.0
    %1054 = vmatprep.subr.mxu0 0.0
    %1055 = vmatpush1.msra.mxu0 0.0
    %1056 = vmatprep.subr.mxu0 0.0
    %1057 = vmatpush1.msra.mxu0 0.0
    %1058 = vmatprep.subr.mxu0 0.0
    %1059 = vmatpush1.msra.mxu0 0.0
    %1060 = vmatprep.subr.mxu0 0.0
    %1061 = vmatpush1.msra.mxu0 0.0
    %1062 = vmatprep.subr.mxu0 0.0
    %1063 = vmatpush1.msra.mxu0 0.0
    %1064 = vmatprep.subr.mxu0 0.0
    %1065 = vmatpush1.msra.mxu0 0.0
    %1066 = vmatprep.subr.mxu0 0.0
    %1067 = vmatpush1.msra.mxu0 0.0
    %1068 = vmatprep.subr.mxu0 0.0
    %1069 = vmatpush1.msra.mxu0 0.0
    %1070 = vmatprep.mubr.f32.mxu0 0.0
    %1071 = vmatmul.mubr.f32.gmra.mrb[0].mxu0 %v769
    %v1072 = vpop.f32.mrb[0].mxu0
    %v1073 = vadd.f32 0.0, %v1072
    %v1074 = vpop.f32.mrb[0].mxu0
    %v1075 = vadd.f32 0.0, %v1074
    %1076 = vdwg.mxu0
    %v1077 = vadd.f32 %v931, %v1002
    %v1078 = vadd.f32 %v932, %v1004
    %v1079 = vadd.f32 %v933, %v1073
    %v1080 = vadd.f32 %v934, %v1075
    %v1081 = vmul.f32 %v1077, 0.5
    %v1082 = vtanh.pop %v1081
    %v1083 = vadd.f32 %v1082, 1.0
    %v1084 = vmul.f32 %v1083, 0.5
    %v1085 = vmul.f32 %v1078, 0.5
    %v1086 = vtanh.pop %v1085
    %v1087 = vadd.f32 %v1086, 1.0
    %v1088 = vmul.f32 %v1087, 0.5
    %v1089 = vtanh.pop %v1079
    %v1090 = vmul.f32 %v1080, 0.5
    %v1091 = vtanh.pop %v1090
    %v1092 = vadd.f32 %v1091, 1.0
    %v1093 = vmul.f32 %v1092, 0.5
    %v1094 = vmul.f32 %v1088, %v767
    %v1095 = vmul.f32 %v1084, %v1089
    %v1096 = vadd.f32 %v1094, %v1095
    %v1097 = vtanh.pop %v1096
    %v1098 = vmul.f32 %v1093, %v1097
    %1099 = vmatprep.subr.mxu0 %v124
    %1100 = vmatpush1.msra.mxu0 %v123
    %1101 = vmatprep.subr.mxu0 %v128
    %1102 = vmatpush1.msra.mxu0 %v127
    %1103 = vmatprep.subr.mxu0 %v132
    %1104 = vmatpush1.msra.mxu0 %v131
    %1105 = vmatprep.subr.mxu0 %v136
    %1106 = vmatpush1.msra.mxu0 %v135
    %1107 = vmatprep.subr.mxu0 %v140
    %1108 = vmatpush1.msra.mxu0 %v139
    %1109 = vmatprep.subr.mxu0 %v144
    %1110 = vmatpush1.msra.mxu0 %v143
    %1111 = vmatprep.subr.mxu0 %v148
    %1112 = vmatpush1.msra.mxu0 %v147
    %1113 = vmatprep.subr.mxu0 %v152
    %1114 = vmatpush1.msra.mxu0 %v151
    %1115 = vmatprep.subr.mxu0 %v156
    %1116 = vmatpush1.msra.mxu0 %v155
    %1117 = vmatprep.subr.mxu0 %v160
    %1118 = vmatpush1.msra.mxu0 %v159
    %1119 = vmatprep.subr.mxu0 %v164
    %1120 = vmatpush1.msra.mxu0 %v163
    %1121 = vmatprep.subr.mxu0 %v168
    %1122 = vmatpush1.msra.mxu0 %v167
    %1123 = vmatprep.subr.mxu0 %v172
    %1124 = vmatpush1.msra.mxu0 %v171
    %1125 = vmatprep.subr.mxu0 %v176
    %1126 = vmatpush1.msra.mxu0 %v175
    %1127 = vmatprep.subr.mxu0 %v180
    %1128 = vmatpush1.msra.mxu0 %v179
    %1129 = vmatprep.subr.mxu0 %v184
    %1130 = vmatpush1.msra.mxu0 %v183
    %1131 = vmatprep.subr.mxu0 %v188
    %1132 = vmatpush1.msra.mxu0 %v187
    %1133 = vmatprep.subr.mxu0 %v192
    %1134 = vmatpush1.msra.mxu0 %v191
    %1135 = vmatprep.subr.mxu0 %v196
    %1136 = vmatpush1.msra.mxu0 %v195
    %1137 = vmatprep.subr.mxu0 %v200
    %1138 = vmatpush1.msra.mxu0 %v199
    %1139 = vmatprep.subr.mxu0 %v204
    %1140 = vmatpush1.msra.mxu0 %v203
    %1141 = vmatprep.subr.mxu0 %v208
    %1142 = vmatpush1.msra.mxu0 %v207
    %1143 = vmatprep.subr.mxu0 %v212
    %1144 = vmatpush1.msra.mxu0 %v211
    %1145 = vmatprep.subr.mxu0 %v216
    %1146 = vmatpush1.msra.mxu0 %v215
    %1147 = vmatprep.subr.mxu0 %v220
    %1148 = vmatpush1.msra.mxu0 %v219
    %1149 = vmatprep.subr.mxu0 %v224
    %1150 = vmatpush1.msra.mxu0 %v223
    %1151 = vmatprep.subr.mxu0 %v228
    %1152 = vmatpush1.msra.mxu0 %v227
    %1153 = vmatprep.subr.mxu0 %v232
    %1154 = vmatpush1.msra.mxu0 %v231
    %1155 = vmatprep.subr.mxu0 %v236
    %1156 = vmatpush1.msra.mxu0 %v235
    %1157 = vmatprep.subr.mxu0 %v240
    %1158 = vmatpush1.msra.mxu0 %v239
    %1159 = vmatprep.subr.mxu0 %v244
    %1160 = vmatpush1.msra.mxu0 %v243
    %1161 = vmatprep.subr.mxu0 %v248
    %1162 = vmatpush1.msra.mxu0 %v247
    %1163 = vmatprep.mubr.f32.mxu0 %v929
    %1164 = vmatmul.mubr.f32.gmra.mrb[0].mxu0 %v1098
    %v1165 = vpop.f32.mrb[0].mxu0
    %v1166 = vadd.f32 %v256, %v1165
    %v1167 = vpop.f32.mrb[0].mxu0
    %v1168 = vadd.f32 %v260, %v1167
    %1169 = vdwg.mxu0
    %1170 = vmatprep.subr.mxu0 %v126
    %1171 = vmatpush1.msra.mxu0 %v125
    %1172 = vmatprep.subr.mxu0 %v130
    %1173 = vmatpush1.msra.mxu0 %v129
    %1174 = vmatprep.subr.mxu0 %v134
    %1175 = vmatpush1.msra.mxu0 %v133
    %1176 = vmatprep.subr.mxu0 %v138
    %1177 = vmatpush1.msra.mxu0 %v137
    %1178 = vmatprep.subr.mxu0 %v142
    %1179 = vmatpush1.msra.mxu0 %v141
    %1180 = vmatprep.subr.mxu0 %v146
    %1181 = vmatpush1.msra.mxu0 %v145
    %1182 = vmatprep.subr.mxu0 %v150
    %1183 = vmatpush1.msra.mxu0 %v149
    %1184 = vmatprep.subr.mxu0 %v154
    %1185 = vmatpush1.msra.mxu0 %v153
    %1186 = vmatprep.subr.mxu0 %v158
    %1187 = vmatpush1.msra.mxu0 %v157
    %1188 = vmatprep.subr.mxu0 %v162
    %1189 = vmatpush1.msra.mxu0 %v161
    %1190 = vmatprep.subr.mxu0 %v166
    %1191 = vmatpush1.msra.mxu0 %v165
    %1192 = vmatprep.subr.mxu0 %v170
    %1193 = vmatpush1.msra.mxu0 %v169
    %1194 = vmatprep.subr.mxu0 %v174
    %1195 = vmatpush1.msra.mxu0 %v173
    %1196 = vmatprep.subr.mxu0 %v178
    %1197 = vmatpush1.msra.mxu0 %v177
    %1198 = vmatprep.subr.mxu0 %v182
    %1199 = vmatpush1.msra.mxu0 %v181
    %1200 = vmatprep.subr.mxu0 %v186
    %1201 = vmatpush1.msra.mxu0 %v185
    %1202 = vmatprep.subr.mxu0 %v190
    %1203 = vmatpush1.msra.mxu0 %v189
    %1204 = vmatprep.subr.mxu0 %v194
    %1205 = vmatpush1.msra.mxu0 %v193
    %1206 = vmatprep.subr.mxu0 %v198
    %1207 = vmatpush1.msra.mxu0 %v197
    %1208 = vmatprep.subr.mxu0 %v202
    %1209 = vmatpush1.msra.mxu0 %v201
    %1210 = vmatprep.subr.mxu0 %v206
    %1211 = vmatpush1.msra.mxu0 %v205
    %1212 = vmatprep.subr.mxu0 %v210
    %1213 = vmatpush1.msra.mxu0 %v209
    %1214 = vmatprep.subr.mxu0 %v214
    %1215 = vmatpush1.msra.mxu0 %v213
    %1216 = vmatprep.subr.mxu0 %v218
    %1217 = vmatpush1.msra.mxu0 %v217
    %1218 = vmatprep.subr.mxu0 %v222
    %1219 = vmatpush1.msra.mxu0 %v221
    %1220 = vmatprep.subr.mxu0 %v226
    %1221 = vmatpush1.msra.mxu0 %v225
    %1222 = vmatprep.subr.mxu0 %v230
    %1223 = vmatpush1.msra.mxu0 %v229
    %1224 = vmatprep.subr.mxu0 %v234
    %1225 = vmatpush1.msra.mxu0 %v233
    %1226 = vmatprep.subr.mxu0 %v238
    %1227 = vmatpush1.msra.mxu0 %v237
    %1228 = vmatprep.subr.mxu0 %v242
    %1229 = vmatpush1.msra.mxu0 %v241
    %1230 = vmatprep.subr.mxu0 %v246
    %1231 = vmatpush1.msra.mxu0 %v245
    %1232 = vmatprep.subr.mxu0 %v250
    %1233 = vmatpush1.msra.mxu0 %v249
    %1234 = vmatprep.mubr.f32.mxu0 %v929
    %1235 = vmatmul.mubr.f32.gmra.mrb[0].mxu0 %v1098
    %v1236 = vpop.f32.mrb[0].mxu0
    %v1237 = vadd.f32 %v264, %v1236
    %v1238 = vpop.f32.mrb[0].mxu0
    %v1239 = vadd.f32 %v268, %v1238
    %1240 = vdwg.mxu0
    %v1241 = vmul.f32 %v1166, 0.5
    %v1242 = vtanh.pop %v1241
    %v1243 = vadd.f32 %v1242, 1.0
    %v1244 = vmul.f32 %v1243, 0.5
    %v1245 = vmul.f32 %v1168, 0.5
    %v1246 = vtanh.pop %v1245
    %v1247 = vadd.f32 %v1246, 1.0
    %v1248 = vmul.f32 %v1247, 0.5
    %v1249 = vtanh.pop %v1237
    %v1250 = vmul.f32 %v1239, 0.5
    %v1251 = vtanh.pop %v1250
    %v1252 = vadd.f32 %v1251, 1.0
    %v1253 = vmul.f32 %v1252, 0.5
    %v1254 = vmul.f32 %v1248, %v927
    %v1255 = vmul.f32 %v1244, %v1249
    %v1256 = vadd.f32 %v1254, %v1255
    %v1257 = vtanh.pop %v1256
    %v1258 = vmul.f32 %v1253, %v1257
    %s1259 = scalar_lea.vmem [#allocation2], 96
    %v1260 = vld [vmem:[%s1259] sm:$0xff]
    %v1261 = vld [vmem:[%s1259 + $0x8] sm:$0xff]
    %v1262 = vld [vmem:[%s1259 + $0x10] sm:$0xff]
    %v1263 = vld [vmem:[%s1259 + $0x18] sm:$0xff]
    %1264 = vmatprep.subr.mxu0 %v60
    %1265 = vmatpush1.msra.mxu0 %v59
    %1266 = vmatprep.subr.mxu0 %v64
    %1267 = vmatpush1.msra.mxu0 %v63
    %1268 = vmatprep.subr.mxu0 %v68
    %1269 = vmatpush1.msra.mxu0 %v67
    %1270 = vmatprep.subr.mxu0 %v72
    %1271 = vmatpush1.msra.mxu0 %v71
    %1272 = vmatprep.subr.mxu0 %v76
    %1273 = vmatpush1.msra.mxu0 %v75
    %1274 = vmatprep.subr.mxu0 %v80
    %1275 = vmatpush1.msra.mxu0 %v79
    %1276 = vmatprep.subr.mxu0 %v84
    %1277 = vmatpush1.msra.mxu0 %v83
    %1278 = vmatprep.subr.mxu0 %v88
    %1279 = vmatpush1.msra.mxu0 %v87
    %1280 = vmatprep.subr.mxu0 %v92
    %1281 = vmatpush1.msra.mxu0 %v91
    %1282 = vmatprep.subr.mxu0 %v96
    %1283 = vmatpush1.msra.mxu0 %v95
    %1284 = vmatprep.subr.mxu0 %v100
    %1285 = vmatpush1.msra.mxu0 %v99
    %1286 = vmatprep.subr.mxu0 %v104
    %1287 = vmatpush1.msra.mxu0 %v103
    %1288 = vmatprep.subr.mxu0 %v108
    %1289 = vmatpush1.msra.mxu0 %v107
    %1290 = vmatprep.subr.mxu0 %v112
    %1291 = vmatpush1.msra.mxu0 %v111
    %1292 = vmatprep.subr.mxu0 %v116
    %1293 = vmatpush1.msra.mxu0 %v115
    %1294 = vmatprep.subr.mxu0 %v120
    %1295 = vmatpush1.msra.mxu0 %v119
    %1296 = vmatprep.subr.mxu0 0.0
    %1297 = vmatpush1.msra.mxu0 0.0
    %1298 = vmatprep.subr.mxu0 0.0
    %1299 = vmatpush1.msra.mxu0 0.0
    %1300 = vmatprep.subr.mxu0 0.0
    %1301 = vmatpush1.msra.mxu0 0.0
    %1302 = vmatprep.subr.mxu0 0.0
    %1303 = vmatpush1.msra.mxu0 0.0
    %1304 = vmatprep.subr.mxu0 0.0
    %1305 = vmatpush1.msra.mxu0 0.0
    %1306 = vmatprep.subr.mxu0 0.0
    %1307 = vmatpush1.msra.mxu0 0.0
    %1308 = vmatprep.subr.mxu0 0.0
    %1309 = vmatpush1.msra.mxu0 0.0
    %1310 = vmatprep.subr.mxu0 0.0
    %1311 = vmatpush1.msra.mxu0 0.0
    %1312 = vmatprep.subr.mxu0 0.0
    %1313 = vmatpush1.msra.mxu0 0.0
    %1314 = vmatprep.subr.mxu0 0.0
    %1315 = vmatpush1.msra.mxu0 0.0
    %1316 = vmatprep.subr.mxu0 0.0
    %1317 = vmatpush1.msra.mxu0 0.0
    %1318 = vmatprep.subr.mxu0 0.0
    %1319 = vmatpush1.msra.mxu0 0.0
    %1320 = vmatprep.subr.mxu0 0.0
    %1321 = vmatpush1.msra.mxu0 0.0
    %1322 = vmatprep.subr.mxu0 0.0
    %1323 = vmatpush1.msra.mxu0 0.0
    %1324 = vmatprep.subr.mxu0 0.0
    %1325 = vmatpush1.msra.mxu0 0.0
    %1326 = vmatprep.subr.mxu0 0.0
    %1327 = vmatpush1.msra.mxu0 0.0
    %1328 = vmatprep.mubr.f32.mxu0 0.0
    %1329 = vmatmul.mubr.f32.gmra.mrb[0].mxu0 %v1098
    %v1330 = vpop.f32.mrb[0].mxu0
    %v1331 = vadd.f32 0.0, %v1330
    %v1332 = vpop.f32.mrb[0].mxu0
    %v1333 = vadd.f32 0.0, %v1332
    %1334 = vdwg.mxu0
    %1335 = vmatprep.subr.mxu0 %v62
    %1336 = vmatpush1.msra.mxu0 %v61
    %1337 = vmatprep.subr.mxu0 %v66
    %1338 = vmatpush1.msra.mxu0 %v65
    %1339 = vmatprep.subr.mxu0 %v70
    %1340 = vmatpush1.msra.mxu0 %v69
    %1341 = vmatprep.subr.mxu0 %v74
    %1342 = vmatpush1.msra.mxu0 %v73
    %1343 = vmatprep.subr.mxu0 %v78
    %1344 = vmatpush1.msra.mxu0 %v77
    %1345 = vmatprep.subr.mxu0 %v82
    %1346 = vmatpush1.msra.mxu0 %v81
    %1347 = vmatprep.subr.mxu0 %v86
    %1348 = vmatpush1.msra.mxu0 %v85
    %1349 = vmatprep.subr.mxu0 %v90
    %1350 = vmatpush1.msra.mxu0 %v89
    %1351 = vmatprep.subr.mxu0 %v94
    %1352 = vmatpush1.msra.mxu0 %v93
    %1353 = vmatprep.subr.mxu0 %v98
    %1354 = vmatpush1.msra.mxu0 %v97
    %1355 = vmatprep.subr.mxu0 %v102
    %1356 = vmatpush1.msra.mxu0 %v101
    %1357 = vmatprep.subr.mxu0 %v106
    %1358 = vmatpush1.msra.mxu0 %v105
    %1359 = vmatprep.subr.mxu0 %v110
    %1360 = vmatpush1.msra.mxu0 %v109
    %1361 = vmatprep.subr.mxu0 %v114
    %1362 = vmatpush1.msra.mxu0 %v113
    %1363 = vmatprep.subr.mxu0 %v118
    %1364 = vmatpush1.msra.mxu0 %v117
    %1365 = vmatprep.subr.mxu0 %v122
    %1366 = vmatpush1.msra.mxu0 %v121
    %1367 = vmatprep.subr.mxu0 0.0
    %1368 = vmatpush1.msra.mxu0 0.0
    %1369 = vmatprep.subr.mxu0 0.0
    %1370 = vmatpush1.msra.mxu0 0.0
    %1371 = vmatprep.subr.mxu0 0.0
    %1372 = vmatpush1.msra.mxu0 0.0
    %1373 = vmatprep.subr.mxu0 0.0
    %1374 = vmatpush1.msra.mxu0 0.0
    %1375 = vmatprep.subr.mxu0 0.0
    %1376 = vmatpush1.msra.mxu0 0.0
    %1377 = vmatprep.subr.mxu0 0.0
    %1378 = vmatpush1.msra.mxu0 0.0
    %1379 = vmatprep.subr.mxu0 0.0
    %1380 = vmatpush1.msra.mxu0 0.0
    %1381 = vmatprep.subr.mxu0 0.0
    %1382 = vmatpush1.msra.mxu0 0.0
    %1383 = vmatprep.subr.mxu0 0.0
    %1384 = vmatpush1.msra.mxu0 0.0
    %1385 = vmatprep.subr.mxu0 0.0
    %1386 = vmatpush1.msra.mxu0 0.0
    %1387 = vmatprep.subr.mxu0 0.0
    %1388 = vmatpush1.msra.mxu0 0.0
    %1389 = vmatprep.subr.mxu0 0.0
    %1390 = vmatpush1.msra.mxu0 0.0
    %1391 = vmatprep.subr.mxu0 0.0
    %1392 = vmatpush1.msra.mxu0 0.0
    %1393 = vmatprep.subr.mxu0 0.0
    %1394 = vmatpush1.msra.mxu0 0.0
    %1395 = vmatprep.subr.mxu0 0.0
    %1396 = vmatpush1.msra.mxu0 0.0
    %1397 = vmatprep.subr.mxu0 0.0
    %1398 = vmatpush1.msra.mxu0 0.0
    %1399 = vmatprep.mubr.f32.mxu0 0.0
    %1400 = vmatmul.mubr.f32.gmra.mrb[0].mxu0 %v1098
    %v1401 = vpop.f32.mrb[0].mxu0
    %v1402 = vadd.f32 0.0, %v1401
    %v1403 = vpop.f32.mrb[0].mxu0
    %v1404 = vadd.f32 0.0, %v1403
    %1405 = vdwg.mxu0
    %v1406 = vadd.f32 %v1260, %v1331
    %v1407 = vadd.f32 %v1261, %v1333
    %v1408 = vadd.f32 %v1262, %v1402
    %v1409 = vadd.f32 %v1263, %v1404
    %v1410 = vmul.f32 %v1406, 0.5
    %v1411 = vtanh.pop %v1410
    %v1412 = vadd.f32 %v1411, 1.0
    %v1413 = vmul.f32 %v1412, 0.5
    %v1414 = vmul.f32 %v1407, 0.5
    %v1415 = vtanh.pop %v1414
    %v1416 = vadd.f32 %v1415, 1.0
    %v1417 = vmul.f32 %v1416, 0.5
    %v1418 = vtanh.pop %v1408
    %v1419 = vmul.f32 %v1409, 0.5
    %v1420 = vtanh.pop %v1419
    %v1421 = vadd.f32 %v1420, 1.0
    %v1422 = vmul.f32 %v1421, 0.5
    %v1423 = vmul.f32 %v1417, %v1096
    %v1424 = vmul.f32 %v1413, %v1418
    %v1425 = vadd.f32 %v1423, %v1424
    %v1426 = vtanh.pop %v1425
    %v1427 = vmul.f32 %v1422, %v1426
    %1428 = vmatprep.subr.mxu0 %v124
    %1429 = vmatpush1.msra.mxu0 %v123
    %1430 = vmatprep.subr.mxu0 %v128
    %1431 = vmatpush1.msra.mxu0 %v127
    %1432 = vmatprep.subr.mxu0 %v132
    %1433 = vmatpush1.msra.mxu0 %v131
    %1434 = vmatprep.subr.mxu0 %v136
    %1435 = vmatpush1.msra.mxu0 %v135
    %1436 = vmatprep.subr.mxu0 %v140
    %1437 = vmatpush1.msra.mxu0 %v139
    %1438 = vmatprep.subr.mxu0 %v144
    %1439 = vmatpush1.msra.mxu0 %v143
    %1440 = vmatprep.subr.mxu0 %v148
    %1441 = vmatpush1.msra.mxu0 %v147
    %1442 = vmatprep.subr.mxu0 %v152
    %1443 = vmatpush1.msra.mxu0 %v151
    %1444 = vmatprep.subr.mxu0 %v156
    %1445 = vmatpush1.msra.mxu0 %v155
    %1446 = vmatprep.subr.mxu0 %v160
    %1447 = vmatpush1.msra.mxu0 %v159
    %1448 = vmatprep.subr.mxu0 %v164
    %1449 = vmatpush1.msra.mxu0 %v163
    %1450 = vmatprep.subr.mxu0 %v168
    %1451 = vmatpush1.msra.mxu0 %v167
    %1452 = vmatprep.subr.mxu0 %v172
    %1453 = vmatpush1.msra.mxu0 %v171
    %1454 = vmatprep.subr.mxu0 %v176
    %1455 = vmatpush1.msra.mxu0 %v175
    %1456 = vmatprep.subr.mxu0 %v180
    %1457 = vmatpush1.msra.mxu0 %v179
    %1458 = vmatprep.subr.mxu0 %v184
    %1459 = vmatpush1.msra.mxu0 %v183
    %1460 = vmatprep.subr.mxu0 %v188
    %1461 = vmatpush1.msra.mxu0 %v187
    %1462 = vmatprep.subr.mxu0 %v192
    %1463 = vmatpush1.msra.mxu0 %v191
    %1464 = vmatprep.subr.mxu0 %v196
    %1465 = vmatpush1.msra.mxu0 %v195
    %1466 = vmatprep.subr.mxu0 %v200
    %1467 = vmatpush1.msra.mxu0 %v199
    %1468 = vmatprep.subr.mxu0 %v204
    %1469 = vmatpush1.msra.mxu0 %v203
    %1470 = vmatprep.subr.mxu0 %v208
    %1471 = vmatpush1.msra.mxu0 %v207
    %1472 = vmatprep.subr.mxu0 %v212
    %1473 = vmatpush1.msra.mxu0 %v211
    %1474 = vmatprep.subr.mxu0 %v216
    %1475 = vmatpush1.msra.mxu0 %v215
    %1476 = vmatprep.subr.mxu0 %v220
    %1477 = vmatpush1.msra.mxu0 %v219
    %1478 = vmatprep.subr.mxu0 %v224
    %1479 = vmatpush1.msra.mxu0 %v223
    %1480 = vmatprep.subr.mxu0 %v228
    %1481 = vmatpush1.msra.mxu0 %v227
    %1482 = vmatprep.subr.mxu0 %v232
    %1483 = vmatpush1.msra.mxu0 %v231
    %1484 = vmatprep.subr.mxu0 %v236
    %1485 = vmatpush1.msra.mxu0 %v235
    %1486 = vmatprep.subr.mxu0 %v240
    %1487 = vmatpush1.msra.mxu0 %v239
    %1488 = vmatprep.subr.mxu0 %v244
    %1489 = vmatpush1.msra.mxu0 %v243
    %1490 = vmatprep.subr.mxu0 %v248
    %1491 = vmatpush1.msra.mxu0 %v247
    %1492 = vmatprep.mubr.f32.mxu0 %v1258
    %1493 = vmatmul.mubr.f32.gmra.mrb[0].mxu0 %v1427
    %v1494 = vpop.f32.mrb[0].mxu0
    %v1495 = vadd.f32 %v256, %v1494
    %v1496 = vpop.f32.mrb[0].mxu0
    %v1497 = vadd.f32 %v260, %v1496
    %1498 = vdwg.mxu0
    %1499 = vmatprep.subr.mxu0 %v126
    %1500 = vmatpush1.msra.mxu0 %v125
    %1501 = vmatprep.subr.mxu0 %v130
    %1502 = vmatpush1.msra.mxu0 %v129
    %1503 = vmatprep.subr.mxu0 %v134
    %1504 = vmatpush1.msra.mxu0 %v133
    %1505 = vmatprep.subr.mxu0 %v138
    %1506 = vmatpush1.msra.mxu0 %v137
    %1507 = vmatprep.subr.mxu0 %v142
    %1508 = vmatpush1.msra.mxu0 %v141
    %1509 = vmatprep.subr.mxu0 %v146
    %1510 = vmatpush1.msra.mxu0 %v145
    %1511 = vmatprep.subr.mxu0 %v150
    %1512 = vmatpush1.msra.mxu0 %v149
    %1513 = vmatprep.subr.mxu0 %v154
    %1514 = vmatpush1.msra.mxu0 %v153
    %1515 = vmatprep.subr.mxu0 %v158
    %1516 = vmatpush1.msra.mxu0 %v157
    %1517 = vmatprep.subr.mxu0 %v162
    %1518 = vmatpush1.msra.mxu0 %v161
    %1519 = vmatprep.subr.mxu0 %v166
    %1520 = vmatpush1.msra.mxu0 %v165
    %1521 = vmatprep.subr.mxu0 %v170
    %1522 = vmatpush1.msra.mxu0 %v169
    %1523 = vmatprep.subr.mxu0 %v174
    %1524 = vmatpush1.msra.mxu0 %v173
    %1525 = vmatprep.subr.mxu0 %v178
    %1526 = vmatpush1.msra.mxu0 %v177
    %1527 = vmatprep.subr.mxu0 %v182
    %1528 = vmatpush1.msra.mxu0 %v181
    %1529 = vmatprep.subr.mxu0 %v186
    %1530 = vmatpush1.msra.mxu0 %v185
    %1531 = vmatprep.subr.mxu0 %v190
    %1532 = vmatpush1.msra.mxu0 %v189
    %1533 = vmatprep.subr.mxu0 %v194
    %1534 = vmatpush1.msra.mxu0 %v193
    %1535 = vmatprep.subr.mxu0 %v198
    %1536 = vmatpush1.msra.mxu0 %v197
    %1537 = vmatprep.subr.mxu0 %v202
    %1538 = vmatpush1.msra.mxu0 %v201
    %1539 = vmatprep.subr.mxu0 %v206
    %1540 = vmatpush1.msra.mxu0 %v205
    %1541 = vmatprep.subr.mxu0 %v210
    %1542 = vmatpush1.msra.mxu0 %v209
    %1543 = vmatprep.subr.mxu0 %v214
    %1544 = vmatpush1.msra.mxu0 %v213
    %1545 = vmatprep.subr.mxu0 %v218
    %1546 = vmatpush1.msra.mxu0 %v217
    %1547 = vmatprep.subr.mxu0 %v222
    %1548 = vmatpush1.msra.mxu0 %v221
    %1549 = vmatprep.subr.mxu0 %v226
    %1550 = vmatpush1.msra.mxu0 %v225
    %1551 = vmatprep.subr.mxu0 %v230
    %1552 = vmatpush1.msra.mxu0 %v229
    %1553 = vmatprep.subr.mxu0 %v234
    %1554 = vmatpush1.msra.mxu0 %v233
    %1555 = vmatprep.subr.mxu0 %v238
    %1556 = vmatpush1.msra.mxu0 %v237
    %1557 = vmatprep.subr.mxu0 %v242
    %1558 = vmatpush1.msra.mxu0 %v241
    %1559 = vmatprep.subr.mxu0 %v246
    %1560 = vmatpush1.msra.mxu0 %v245
    %1561 = vmatprep.subr.mxu0 %v250
    %1562 = vmatpush1.msra.mxu0 %v249
    %1563 = vmatprep.mubr.f32.mxu0 %v1258
    %1564 = vmatmul.mubr.f32.gmra.mrb[0].mxu0 %v1427
    %v1565 = vpop.f32.mrb[0].mxu0
    %v1566 = vadd.f32 %v264, %v1565
    %v1567 = vpop.f32.mrb[0].mxu0
    %v1568 = vadd.f32 %v268, %v1567
    %1569 = vdwg.mxu0
    %v1570 = vmul.f32 %v1495, 0.5
    %v1571 = vtanh.pop %v1570
    %v1572 = vadd.f32 %v1571, 1.0
    %v1573 = vmul.f32 %v1572, 0.5
    %v1574 = vmul.f32 %v1497, 0.5
    %v1575 = vtanh.pop %v1574
    %v1576 = vadd.f32 %v1575, 1.0
    %v1577 = vmul.f32 %v1576, 0.5
    %v1578 = vtanh.pop %v1566
    %v1579 = vmul.f32 %v1568, 0.5
    %v1580 = vtanh.pop %v1579
    %v1581 = vadd.f32 %v1580, 1.0
    %v1582 = vmul.f32 %v1581, 0.5
    %v1583 = vmul.f32 %v1577, %v1256
    %v1584 = vmul.f32 %v1573, %v1578
    %v1585 = vadd.f32 %v1583, %v1584
    %v1586 = vtanh.pop %v1585
    %v1587 = vmul.f32 %v1582, %v1586
    %s1588 = scalar_lea.vmem [#allocation2], 128
    %v1589 = vld [vmem:[%s1588] sm:$0xff]
    %v1590 = vld [vmem:[%s1588 + $0x8] sm:$0xff]
    %v1591 = vld [vmem:[%s1588 + $0x10] sm:$0xff]
    %v1592 = vld [vmem:[%s1588 + $0x18] sm:$0xff]
    %1593 = vmatprep.subr.mxu0 %v60
    %1594 = vmatpush1.msra.mxu0 %v59
    %1595 = vmatprep.subr.mxu0 %v64
    %1596 = vmatpush1.msra.mxu0 %v63
    %1597 = vmatprep.subr.mxu0 %v68
    %1598 = vmatpush1.msra.mxu0 %v67
    %1599 = vmatprep.subr.mxu0 %v72
    %1600 = vmatpush1.msra.mxu0 %v71
    %1601 = vmatprep.subr.mxu0 %v76
    %1602 = vmatpush1.msra.mxu0 %v75
    %1603 = vmatprep.subr.mxu0 %v80
    %1604 = vmatpush1.msra.mxu0 %v79
    %1605 = vmatprep.subr.mxu0 %v84
    %1606 = vmatpush1.msra.mxu0 %v83
    %1607 = vmatprep.subr.mxu0 %v88
    %1608 = vmatpush1.msra.mxu0 %v87
    %1609 = vmatprep.subr.mxu0 %v92
    %1610 = vmatpush1.msra.mxu0 %v91
    %1611 = vmatprep.subr.mxu0 %v96
    %1612 = vmatpush1.msra.mxu0 %v95
    %1613 = vmatprep.subr.mxu0 %v100
    %1614 = vmatpush1.msra.mxu0 %v99
    %1615 = vmatprep.subr.mxu0 %v104
    %1616 = vmatpush1.msra.mxu0 %v103
    %1617 = vmatprep.subr.mxu0 %v108
    %1618 = vmatpush1.msra.mxu0 %v107
    %1619 = vmatprep.subr.mxu0 %v112
    %1620 = vmatpush1.msra.mxu0 %v111
    %1621 = vmatprep.subr.mxu0 %v116
    %1622 = vmatpush1.msra.mxu0 %v115
    %1623 = vmatprep.subr.mxu0 %v120
    %1624 = vmatpush1.msra.mxu0 %v119
    %1625 = vmatprep.subr.mxu0 0.0
    %1626 = vmatpush1.msra.mxu0 0.0
    %1627 = vmatprep.subr.mxu0 0.0
    %1628 = vmatpush1.msra.mxu0 0.0
    %1629 = vmatprep.subr.mxu0 0.0
    %1630 = vmatpush1.msra.mxu0 0.0
    %1631 = vmatprep.subr.mxu0 0.0
    %1632 = vmatpush1.msra.mxu0 0.0
    %1633 = vmatprep.subr.mxu0 0.0
    %1634 = vmatpush1.msra.mxu0 0.0
    %1635 = vmatprep.subr.mxu0 0.0
    %1636 = vmatpush1.msra.mxu0 0.0
    %1637 = vmatprep.subr.mxu0 0.0
    %1638 = vmatpush1.msra.mxu0 0.0
    %1639 = vmatprep.subr.mxu0 0.0
    %1640 = vmatpush1.msra.mxu0 0.0
    %1641 = vmatprep.subr.mxu0 0.0
    %1642 = vmatpush1.msra.mxu0 0.0
    %1643 = vmatprep.subr.mxu0 0.0
    %1644 = vmatpush1.msra.mxu0 0.0
    %1645 = vmatprep.subr.mxu0 0.0
    %1646 = vmatpush1.msra.mxu0 0.0
    %1647 = vmatprep.subr.mxu0 0.0
    %1648 = vmatpush1.msra.mxu0 0.0
    %1649 = vmatprep.subr.mxu0 0.0
    %1650 = vmatpush1.msra.mxu0 0.0
    %1651 = vmatprep.subr.mxu0 0.0
    %1652 = vmatpush1.msra.mxu0 0.0
    %1653 = vmatprep.subr.mxu0 0.0
    %1654 = vmatpush1.msra.mxu0 0.0
    %1655 = vmatprep.subr.mxu0 0.0
    %1656 = vmatpush1.msra.mxu0 0.0
    %1657 = vmatprep.mubr.f32.mxu0 0.0
    %1658 = vmatmul.mubr.f32.gmra.mrb[0].mxu0 %v1427
    %v1659 = vpop.f32.mrb[0].mxu0
    %v1660 = vadd.f32 0.0, %v1659
    %v1661 = vpop.f32.mrb[0].mxu0
    %v1662 = vadd.f32 0.0, %v1661
    %1663 = vdwg.mxu0
    %1664 = vmatprep.subr.mxu0 %v62
    %1665 = vmatpush1.msra.mxu0 %v61
    %1666 = vmatprep.subr.mxu0 %v66
    %1667 = vmatpush1.msra.mxu0 %v65
    %1668 = vmatprep.subr.mxu0 %v70
    %1669 = vmatpush1.msra.mxu0 %v69
    %1670 = vmatprep.subr.mxu0 %v74
    %1671 = vmatpush1.msra.mxu0 %v73
    %1672 = vmatprep.subr.mxu0 %v78
    %1673 = vmatpush1.msra.mxu0 %v77
    %1674 = vmatprep.subr.mxu0 %v82
    %1675 = vmatpush1.msra.mxu0 %v81
    %1676 = vmatprep.subr.mxu0 %v86
    %1677 = vmatpush1.msra.mxu0 %v85
    %1678 = vmatprep.subr.mxu0 %v90
    %1679 = vmatpush1.msra.mxu0 %v89
    %1680 = vmatprep.subr.mxu0 %v94
    %1681 = vmatpush1.msra.mxu0 %v93
    %1682 = vmatprep.subr.mxu0 %v98
    %1683 = vmatpush1.msra.mxu0 %v97
    %1684 = vmatprep.subr.mxu0 %v102
    %1685 = vmatpush1.msra.mxu0 %v101
    %1686 = vmatprep.subr.mxu0 %v106
    %1687 = vmatpush1.msra.mxu0 %v105
    %1688 = vmatprep.subr.mxu0 %v110
    %1689 = vmatpush1.msra.mxu0 %v109
    %1690 = vmatprep.subr.mxu0 %v114
    %1691 = vmatpush1.msra.mxu0 %v113
    %1692 = vmatprep.subr.mxu0 %v118
    %1693 = vmatpush1.msra.mxu0 %v117
    %1694 = vmatprep.subr.mxu0 %v122
    %1695 = vmatpush1.msra.mxu0 %v121
    %1696 = vmatprep.subr.mxu0 0.0
    %1697 = vmatpush1.msra.mxu0 0.0
    %1698 = vmatprep.subr.mxu0 0.0
    %1699 = vmatpush1.msra.mxu0 0.0
    %1700 = vmatprep.subr.mxu0 0.0
    %1701 = vmatpush1.msra.mxu0 0.0
    %1702 = vmatprep.subr.mxu0 0.0
    %1703 = vmatpush1.msra.mxu0 0.0
    %1704 = vmatprep.subr.mxu0 0.0
    %1705 = vmatpush1.msra.mxu0 0.0
    %1706 = vmatprep.subr.mxu0 0.0
    %1707 = vmatpush1.msra.mxu0 0.0
    %1708 = vmatprep.subr.mxu0 0.0
    %1709 = vmatpush1.msra.mxu0 0.0
    %1710 = vmatprep.subr.mxu0 0.0
    %1711 = vmatpush1.msra.mxu0 0.0
    %1712 = vmatprep.subr.mxu0 0.0
    %1713 = vmatpush1.msra.mxu0 0.0
    %1714 = vmatprep.subr.mxu0 0.0
    %1715 = vmatpush1.msra.mxu0 0.0
    %1716 = vmatprep.subr.mxu0 0.0
    %1717 = vmatpush1.msra.mxu0 0.0
    %1718 = vmatprep.subr.mxu0 0.0
    %1719 = vmatpush1.msra.mxu0 0.0
    %1720 = vmatprep.subr.mxu0 0.0
    %1721 = vmatpush1.msra.mxu0 0.0
    %1722 = vmatprep.subr.mxu0 0.0
    %1723 = vmatpush1.msra.mxu0 0.0
    %1724 = vmatprep.subr.mxu0 0.0
    %1725 = vmatpush1.msra.mxu0 0.0
    %1726 = vmatprep.subr.mxu0 0.0
    %1727 = vmatpush1.msra.mxu0 0.0
    %1728 = vmatprep.mubr.f32.mxu0 0.0
    %1729 = vmatmul.mubr.f32.gmra.mrb[0].mxu0 %v1427
    %v1730 = vpop.f32.mrb[0].mxu0
    %v1731 = vadd.f32 0.0, %v1730
    %v1732 = vpop.f32.mrb[0].mxu0
    %v1733 = vadd.f32 0.0, %v1732
    %1734 = vdwg.mxu0
    %v1735 = vadd.f32 %v1589, %v1660
    %v1736 = vadd.f32 %v1590, %v1662
    %v1737 = vadd.f32 %v1591, %v1731
    %v1738 = vadd.f32 %v1592, %v1733
    %v1739 = vmul.f32 %v1735, 0.5
    %v1740 = vtanh.pop %v1739
    %v1741 = vadd.f32 %v1740, 1.0
    %v1742 = vmul.f32 %v1741, 0.5
    %v1743 = vmul.f32 %v1736, 0.5
    %v1744 = vtanh.pop %v1743
    %v1745 = vadd.f32 %v1744, 1.0
    %v1746 = vmul.f32 %v1745, 0.5
    %v1747 = vtanh.pop %v1737
    %v1748 = vmul.f32 %v1738, 0.5
    %v1749 = vtanh.pop %v1748
    %v1750 = vadd.f32 %v1749, 1.0
    %v1751 = vmul.f32 %v1750, 0.5
    %v1752 = vmul.f32 %v1746, %v1425
    %v1753 = vmul.f32 %v1742, %v1747
    %v1754 = vadd.f32 %v1752, %v1753
    %v1755 = vtanh.pop %v1754
    %v1756 = vmul.f32 %v1751, %v1755
    %1757 = vmatprep.subr.mxu0 %v124
    %1758 = vmatpush1.msra.mxu0 %v123
    %1759 = vmatprep.subr.mxu0 %v128
    %1760 = vmatpush1.msra.mxu0 %v127
    %1761 = vmatprep.subr.mxu0 %v132
    %1762 = vmatpush1.msra.mxu0 %v131
    %1763 = vmatprep.subr.mxu0 %v136
    %1764 = vmatpush1.msra.mxu0 %v135
    %1765 = vmatprep.subr.mxu0 %v140
    %1766 = vmatpush1.msra.mxu0 %v139
    %1767 = vmatprep.subr.mxu0 %v144
    %1768 = vmatpush1.msra.mxu0 %v143
    %1769 = vmatprep.subr.mxu0 %v148
    %1770 = vmatpush1.msra.mxu0 %v147
    %1771 = vmatprep.subr.mxu0 %v152
    %1772 = vmatpush1.msra.mxu0 %v151
    %1773 = vmatprep.subr.mxu0 %v156
    %1774 = vmatpush1.msra.mxu0 %v155
    %1775 = vmatprep.subr.mxu0 %v160
    %1776 = vmatpush1.msra.mxu0 %v159
    %1777 = vmatprep.subr.mxu0 %v164
    %1778 = vmatpush1.msra.mxu0 %v163
    %1779 = vmatprep.subr.mxu0 %v168
    %1780 = vmatpush1.msra.mxu0 %v167
    %1781 = vmatprep.subr.mxu0 %v172
    %1782 = vmatpush1.msra.mxu0 %v171
    %1783 = vmatprep.subr.mxu0 %v176
    %1784 = vmatpush1.msra.mxu0 %v175
    %1785 = vmatprep.subr.mxu0 %v180
    %1786 = vmatpush1.msra.mxu0 %v179
    %1787 = vmatprep.subr.mxu0 %v184
    %1788 = vmatpush1.msra.mxu0 %v183
    %1789 = vmatprep.subr.mxu0 %v188
    %1790 = vmatpush1.msra.mxu0 %v187
    %1791 = vmatprep.subr.mxu0 %v192
    %1792 = vmatpush1.msra.mxu0 %v191
    %1793 = vmatprep.subr.mxu0 %v196
    %1794 = vmatpush1.msra.mxu0 %v195
    %1795 = vmatprep.subr.mxu0 %v200
    %1796 = vmatpush1.msra.mxu0 %v199
    %1797 = vmatprep.subr.mxu0 %v204
    %1798 = vmatpush1.msra.mxu0 %v203
    %1799 = vmatprep.subr.mxu0 %v208
    %1800 = vmatpush1.msra.mxu0 %v207
    %1801 = vmatprep.subr.mxu0 %v212
    %1802 = vmatpush1.msra.mxu0 %v211
    %1803 = vmatprep.subr.mxu0 %v216
    %1804 = vmatpush1.msra.mxu0 %v215
    %1805 = vmatprep.subr.mxu0 %v220
    %1806 = vmatpush1.msra.mxu0 %v219
    %1807 = vmatprep.subr.mxu0 %v224
    %1808 = vmatpush1.msra.mxu0 %v223
    %1809 = vmatprep.subr.mxu0 %v228
    %1810 = vmatpush1.msra.mxu0 %v227
    %1811 = vmatprep.subr.mxu0 %v232
    %1812 = vmatpush1.msra.mxu0 %v231
    %1813 = vmatprep.subr.mxu0 %v236
    %1814 = vmatpush1.msra.mxu0 %v235
    %1815 = vmatprep.subr.mxu0 %v240
    %1816 = vmatpush1.msra.mxu0 %v239
    %1817 = vmatprep.subr.mxu0 %v244
    %1818 = vmatpush1.msra.mxu0 %v243
    %1819 = vmatprep.subr.mxu0 %v248
    %1820 = vmatpush1.msra.mxu0 %v247
    %1821 = vmatprep.mubr.f32.mxu0 %v1587
    %1822 = vmatmul.mubr.f32.gmra.mrb[0].mxu0 %v1756
    %v1823 = vpop.f32.mrb[0].mxu0
    %v1824 = vadd.f32 %v256, %v1823
    %v1825 = vpop.f32.mrb[0].mxu0
    %v1826 = vadd.f32 %v260, %v1825
    %1827 = vdwg.mxu0
    %1828 = vmatprep.subr.mxu0 %v126
    %1829 = vmatpush1.msra.mxu0 %v125
    %1830 = vmatprep.subr.mxu0 %v130
    %1831 = vmatpush1.msra.mxu0 %v129
    %1832 = vmatprep.subr.mxu0 %v134
    %1833 = vmatpush1.msra.mxu0 %v133
    %1834 = vmatprep.subr.mxu0 %v138
    %1835 = vmatpush1.msra.mxu0 %v137
    %1836 = vmatprep.subr.mxu0 %v142
    %1837 = vmatpush1.msra.mxu0 %v141
    %1838 = vmatprep.subr.mxu0 %v146
    %1839 = vmatpush1.msra.mxu0 %v145
    %1840 = vmatprep.subr.mxu0 %v150
    %1841 = vmatpush1.msra.mxu0 %v149
    %1842 = vmatprep.subr.mxu0 %v154
    %1843 = vmatpush1.msra.mxu0 %v153
    %1844 = vmatprep.subr.mxu0 %v158
    %1845 = vmatpush1.msra.mxu0 %v157
    %1846 = vmatprep.subr.mxu0 %v162
    %1847 = vmatpush1.msra.mxu0 %v161
    %1848 = vmatprep.subr.mxu0 %v166
    %1849 = vmatpush1.msra.mxu0 %v165
    %1850 = vmatprep.subr.mxu0 %v170
    %1851 = vmatpush1.msra.mxu0 %v169
    %1852 = vmatprep.subr.mxu0 %v174
    %1853 = vmatpush1.msra.mxu0 %v173
    %1854 = vmatprep.subr.mxu0 %v178
    %1855 = vmatpush1.msra.mxu0 %v177
    %1856 = vmatprep.subr.mxu0 %v182
    %1857 = vmatpush1.msra.mxu0 %v181
    %1858 = vmatprep.subr.mxu0 %v186
    %1859 = vmatpush1.msra.mxu0 %v185
    %1860 = vmatprep.subr.mxu0 %v190
    %1861 = vmatpush1.msra.mxu0 %v189
    %1862 = vmatprep.subr.mxu0 %v194
    %1863 = vmatpush1.msra.mxu0 %v193
    %1864 = vmatprep.subr.mxu0 %v198
    %1865 = vmatpush1.msra.mxu0 %v197
    %1866 = vmatprep.subr.mxu0 %v202
    %1867 = vmatpush1.msra.mxu0 %v201
    %1868 = vmatprep.subr.mxu0 %v206
    %1869 = vmatpush1.msra.mxu0 %v205
    %1870 = vmatprep.subr.mxu0 %v210
    %1871 = vmatpush1.msra.mxu0 %v209
    %1872 = vmatprep.subr.mxu0 %v214
    %1873 = vmatpush1.msra.mxu0 %v213
    %1874 = vmatprep.subr.mxu0 %v218
    %1875 = vmatpush1.msra.mxu0 %v217
    %1876 = vmatprep.subr.mxu0 %v222
    %1877 = vmatpush1.msra.mxu0 %v221
    %1878 = vmatprep.subr.mxu0 %v226
    %1879 = vmatpush1.msra.mxu0 %v225
    %1880 = vmatprep.subr.mxu0 %v230
    %1881 = vmatpush1.msra.mxu0 %v229
    %1882 = vmatprep.subr.mxu0 %v234
    %1883 = vmatpush1.msra.mxu0 %v233
    %1884 = vmatprep.subr.mxu0 %v238
    %1885 = vmatpush1.msra.mxu0 %v237
    %1886 = vmatprep.subr.mxu0 %v242
    %1887 = vmatpush1.msra.mxu0 %v241
    %1888 = vmatprep.subr.mxu0 %v246
    %1889 = vmatpush1.msra.mxu0 %v245
    %1890 = vmatprep.subr.mxu0 %v250
    %1891 = vmatpush1.msra.mxu0 %v249
    %1892 = vmatprep.mubr.f32.mxu0 %v1587
    %1893 = vmatmul.mubr.f32.gmra.mrb[0].mxu0 %v1756
    %v1894 = vpop.f32.mrb[0].mxu0
    %v1895 = vadd.f32 %v264, %v1894
    %v1896 = vpop.f32.mrb[0].mxu0
    %v1897 = vadd.f32 %v268, %v1896
    %1898 = vdwg.mxu0
    %v1899 = vmul.f32 %v1824, 0.5
    %v1900 = vtanh.pop %v1899
    %v1901 = vadd.f32 %v1900, 1.0
    %v1902 = vmul.f32 %v1901, 0.5
    %v1903 = vmul.f32 %v1826, 0.5
    %v1904 = vtanh.pop %v1903
    %v1905 = vadd.f32 %v1904, 1.0
    %v1906 = vmul.f32 %v1905, 0.5
    %v1907 = vtanh.pop %v1895
    %v1908 = vmul.f32 %v1897, 0.5
    %v1909 = vtanh.pop %v1908
    %v1910 = vadd.f32 %v1909, 1.0
    %v1911 = vmul.f32 %v1910, 0.5
    %v1912 = vmul.f32 %v1906, %v1585
    %v1913 = vmul.f32 %v1902, %v1907
    %v1914 = vadd.f32 %v1912, %v1913
    %v1915 = vtanh.pop %v1914
    %v1916 = vmul.f32 %v1911, %v1915
    %s1917 = scalar_lea.vmem [#allocation2], 160
    %v1918 = vld [vmem:[%s1917] sm:$0xff]
    %v1919 = vld [vmem:[%s1917 + $0x8] sm:$0xff]
    %v1920 = vld [vmem:[%s1917 + $0x10] sm:$0xff]
    %v1921 = vld [vmem:[%s1917 + $0x18] sm:$0xff]
    %1922 = vmatprep.subr.mxu0 %v60
    %1923 = vmatpush1.msra.mxu0 %v59
    %1924 = vmatprep.subr.mxu0 %v64
    %1925 = vmatpush1.msra.mxu0 %v63
    %1926 = vmatprep.subr.mxu0 %v68
    %1927 = vmatpush1.msra.mxu0 %v67
    %1928 = vmatprep.subr.mxu0 %v72
    %1929 = vmatpush1.msra.mxu0 %v71
    %1930 = vmatprep.subr.mxu0 %v76
    %1931 = vmatpush1.msra.mxu0 %v75
    %1932 = vmatprep.subr.mxu0 %v80
    %1933 = vmatpush1.msra.mxu0 %v79
    %1934 = vmatprep.subr.mxu0 %v84
    %1935 = vmatpush1.msra.mxu0 %v83
    %1936 = vmatprep.subr.mxu0 %v88
    %1937 = vmatpush1.msra.mxu0 %v87
    %1938 = vmatprep.subr.mxu0 %v92
    %1939 = vmatpush1.msra.mxu0 %v91
    %1940 = vmatprep.subr.mxu0 %v96
    %1941 = vmatpush1.msra.mxu0 %v95
    %1942 = vmatprep.subr.mxu0 %v100
    %1943 = vmatpush1.msra.mxu0 %v99
    %1944 = vmatprep.subr.mxu0 %v104
    %1945 = vmatpush1.msra.mxu0 %v103
    %1946 = vmatprep.subr.mxu0 %v108
    %1947 = vmatpush1.msra.mxu0 %v107
    %1948 = vmatprep.subr.mxu0 %v112
    %1949 = vmatpush1.msra.mxu0 %v111
    %1950 = vmatprep.subr.mxu0 %v116
    %1951 = vmatpush1.msra.mxu0 %v115
    %1952 = vmatprep.subr.mxu0 %v120
    %1953 = vmatpush1.msra.mxu0 %v119
    %1954 = vmatprep.subr.mxu0 0.0
    %1955 = vmatpush1.msra.mxu0 0.0
    %1956 = vmatprep.subr.mxu0 0.0
    %1957 = vmatpush1.msra.mxu0 0.0
    %1958 = vmatprep.subr.mxu0 0.0
    %1959 = vmatpush1.msra.mxu0 0.0
    %1960 = vmatprep.subr.mxu0 0.0
    %1961 = vmatpush1.msra.mxu0 0.0
    %1962 = vmatprep.subr.mxu0 0.0
    %1963 = vmatpush1.msra.mxu0 0.0
    %1964 = vmatprep.subr.mxu0 0.0
    %1965 = vmatpush1.msra.mxu0 0.0
    %1966 = vmatprep.subr.mxu0 0.0
    %1967 = vmatpush1.msra.mxu0 0.0
    %1968 = vmatprep.subr.mxu0 0.0
    %1969 = vmatpush1.msra.mxu0 0.0
    %1970 = vmatprep.subr.mxu0 0.0
    %1971 = vmatpush1.msra.mxu0 0.0
    %1972 = vmatprep.subr.mxu0 0.0
    %1973 = vmatpush1.msra.mxu0 0.0
    %1974 = vmatprep.subr.mxu0 0.0
    %1975 = vmatpush1.msra.mxu0 0.0
    %1976 = vmatprep.subr.mxu0 0.0
    %1977 = vmatpush1.msra.mxu0 0.0
    %1978 = vmatprep.subr.mxu0 0.0
    %1979 = vmatpush1.msra.mxu0 0.0
    %1980 = vmatprep.subr.mxu0 0.0
    %1981 = vmatpush1.msra.mxu0 0.0
    %1982 = vmatprep.subr.mxu0 0.0
    %1983 = vmatpush1.msra.mxu0 0.0
    %1984 = vmatprep.subr.mxu0 0.0
    %1985 = vmatpush1.msra.mxu0 0.0
    %1986 = vmatprep.mubr.f32.mxu0 0.0
    %1987 = vmatmul.mubr.f32.gmra.mrb[0].mxu0 %v1756
    %v1988 = vpop.f32.mrb[0].mxu0
    %v1989 = vadd.f32 0.0, %v1988
    %v1990 = vpop.f32.mrb[0].mxu0
    %v1991 = vadd.f32 0.0, %v1990
    %1992 = vdwg.mxu0
    %1993 = vmatprep.subr.mxu0 %v62
    %1994 = vmatpush1.msra.mxu0 %v61
    %1995 = vmatprep.subr.mxu0 %v66
    %1996 = vmatpush1.msra.mxu0 %v65
    %1997 = vmatprep.subr.mxu0 %v70
    %1998 = vmatpush1.msra.mxu0 %v69
    %1999 = vmatprep.subr.mxu0 %v74
    %2000 = vmatpush1.msra.mxu0 %v73
    %2001 = vmatprep.subr.mxu0 %v78
    %2002 = vmatpush1.msra.mxu0 %v77
    %2003 = vmatprep.subr.mxu0 %v82
    %2004 = vmatpush1.msra.mxu0 %v81
    %2005 = vmatprep.subr.mxu0 %v86
    %2006 = vmatpush1.msra.mxu0 %v85
    %2007 = vmatprep.subr.mxu0 %v90
    %2008 = vmatpush1.msra.mxu0 %v89
    %2009 = vmatprep.subr.mxu0 %v94
    %2010 = vmatpush1.msra.mxu0 %v93
    %2011 = vmatprep.subr.mxu0 %v98
    %2012 = vmatpush1.msra.mxu0 %v97
    %2013 = vmatprep.subr.mxu0 %v102
    %2014 = vmatpush1.msra.mxu0 %v101
    %2015 = vmatprep.subr.mxu0 %v106
    %2016 = vmatpush1.msra.mxu0 %v105
    %2017 = vmatprep.subr.mxu0 %v110
    %2018 = vmatpush1.msra.mxu0 %v109
    %2019 = vmatprep.subr.mxu0 %v114
    %2020 = vmatpush1.msra.mxu0 %v113
    %2021 = vmatprep.subr.mxu0 %v118
    %2022 = vmatpush1.msra.mxu0 %v117
    %2023 = vmatprep.subr.mxu0 %v122
    %2024 = vmatpush1.msra.mxu0 %v121
    %2025 = vmatprep.subr.mxu0 0.0
    %2026 = vmatpush1.msra.mxu0 0.0
    %2027 = vmatprep.subr.mxu0 0.0
    %2028 = vmatpush1.msra.mxu0 0.0
    %2029 = vmatprep.subr.mxu0 0.0
    %2030 = vmatpush1.msra.mxu0 0.0
    %2031 = vmatprep.subr.mxu0 0.0
    %2032 = vmatpush1.msra.mxu0 0.0
    %2033 = vmatprep.subr.mxu0 0.0
    %2034 = vmatpush1.msra.mxu0 0.0
    %2035 = vmatprep.subr.mxu0 0.0
    %2036 = vmatpush1.msra.mxu0 0.0
    %2037 = vmatprep.subr.mxu0 0.0
    %2038 = vmatpush1.msra.mxu0 0.0
    %2039 = vmatprep.subr.mxu0 0.0
    %2040 = vmatpush1.msra.mxu0 0.0
    %2041 = vmatprep.subr.mxu0 0.0
    %2042 = vmatpush1.msra.mxu0 0.0
    %2043 = vmatprep.subr.mxu0 0.0
    %2044 = vmatpush1.msra.mxu0 0.0
    %2045 = vmatprep.subr.mxu0 0.0
    %2046 = vmatpush1.msra.mxu0 0.0
    %2047 = vmatprep.subr.mxu0 0.0
    %2048 = vmatpush1.msra.mxu0 0.0
    %2049 = vmatprep.subr.mxu0 0.0
    %2050 = vmatpush1.msra.mxu0 0.0
    %2051 = vmatprep.subr.mxu0 0.0
    %2052 = vmatpush1.msra.mxu0 0.0
    %2053 = vmatprep.subr.mxu0 0.0
    %2054 = vmatpush1.msra.mxu0 0.0
    %2055 = vmatprep.subr.mxu0 0.0
    %2056 = vmatpush1.msra.mxu0 0.0
    %2057 = vmatprep.mubr.f32.mxu0 0.0
    %2058 = vmatmul.mubr.f32.gmra.mrb[0].mxu0 %v1756
    %v2059 = vpop.f32.mrb[0].mxu0
    %v2060 = vadd.f32 0.0, %v2059
    %v2061 = vpop.f32.mrb[0].mxu0
    %v2062 = vadd.f32 0.0, %v2061
    %2063 = vdwg.mxu0
    %v2064 = vadd.f32 %v1918, %v1989
    %v2065 = vadd.f32 %v1919, %v1991
    %v2066 = vadd.f32 %v1920, %v2060
    %v2067 = vadd.f32 %v1921, %v2062
    %v2068 = vmul.f32 %v2064, 0.5
    %v2069 = vtanh.pop %v2068
    %v2070 = vadd.f32 %v2069, 1.0
    %v2071 = vmul.f32 %v2070, 0.5
    %v2072 = vmul.f32 %v2065, 0.5
    %v2073 = vtanh.pop %v2072
    %v2074 = vadd.f32 %v2073, 1.0
    %v2075 = vmul.f32 %v2074, 0.5
    %v2076 = vtanh.pop %v2066
    %v2077 = vmul.f32 %v2067, 0.5
    %v2078 = vtanh.pop %v2077
    %v2079 = vadd.f32 %v2078, 1.0
    %v2080 = vmul.f32 %v2079, 0.5
    %v2081 = vmul.f32 %v2075, %v1754
    %v2082 = vmul.f32 %v2071, %v2076
    %v2083 = vadd.f32 %v2081, %v2082
    %v2084 = vtanh.pop %v2083
    %v2085 = vmul.f32 %v2080, %v2084
    %2086 = vmatprep.subr.mxu0 %v124
    %2087 = vmatpush1.msra.mxu0 %v123
    %2088 = vmatprep.subr.mxu0 %v128
    %2089 = vmatpush1.msra.mxu0 %v127
    %2090 = vmatprep.subr.mxu0 %v132
    %2091 = vmatpush1.msra.mxu0 %v131
    %2092 = vmatprep.subr.mxu0 %v136
    %2093 = vmatpush1.msra.mxu0 %v135
    %2094 = vmatprep.subr.mxu0 %v140
    %2095 = vmatpush1.msra.mxu0 %v139
    %2096 = vmatprep.subr.mxu0 %v144
    %2097 = vmatpush1.msra.mxu0 %v143
    %2098 = vmatprep.subr.mxu0 %v148
    %2099 = vmatpush1.msra.mxu0 %v147
    %2100 = vmatprep.subr.mxu0 %v152
    %2101 = vmatpush1.msra.mxu0 %v151
    %2102 = vmatprep.subr.mxu0 %v156
    %2103 = vmatpush1.msra.mxu0 %v155
    %2104 = vmatprep.subr.mxu0 %v160
    %2105 = vmatpush1.msra.mxu0 %v159
    %2106 = vmatprep.subr.mxu0 %v164
    %2107 = vmatpush1.msra.mxu0 %v163
    %2108 = vmatprep.subr.mxu0 %v168
    %2109 = vmatpush1.msra.mxu0 %v167
    %2110 = vmatprep.subr.mxu0 %v172
    %2111 = vmatpush1.msra.mxu0 %v171
    %2112 = vmatprep.subr.mxu0 %v176
    %2113 = vmatpush1.msra.mxu0 %v175
    %2114 = vmatprep.subr.mxu0 %v180
    %2115 = vmatpush1.msra.mxu0 %v179
    %2116 = vmatprep.subr.mxu0 %v184
    %2117 = vmatpush1.msra.mxu0 %v183
    %2118 = vmatprep.subr.mxu0 %v188
    %2119 = vmatpush1.msra.mxu0 %v187
    %2120 = vmatprep.subr.mxu0 %v192
    %2121 = vmatpush1.msra.mxu0 %v191
    %2122 = vmatprep.subr.mxu0 %v196
    %2123 = vmatpush1.msra.mxu0 %v195
    %2124 = vmatprep.subr.mxu0 %v200
    %2125 = vmatpush1.msra.mxu0 %v199
    %2126 = vmatprep.subr.mxu0 %v204
    %2127 = vmatpush1.msra.mxu0 %v203
    %2128 = vmatprep.subr.mxu0 %v208
    %2129 = vmatpush1.msra.mxu0 %v207
    %2130 = vmatprep.subr.mxu0 %v212
    %2131 = vmatpush1.msra.mxu0 %v211
    %2132 = vmatprep.subr.mxu0 %v216
    %2133 = vmatpush1.msra.mxu0 %v215
    %2134 = vmatprep.subr.mxu0 %v220
    %2135 = vmatpush1.msra.mxu0 %v219
    %2136 = vmatprep.subr.mxu0 %v224
    %2137 = vmatpush1.msra.mxu0 %v223
    %2138 = vmatprep.subr.mxu0 %v228
    %2139 = vmatpush1.msra.mxu0 %v227
    %2140 = vmatprep.subr.mxu0 %v232
    %2141 = vmatpush1.msra.mxu0 %v231
    %2142 = vmatprep.subr.mxu0 %v236
    %2143 = vmatpush1.msra.mxu0 %v235
    %2144 = vmatprep.subr.mxu0 %v240
    %2145 = vmatpush1.msra.mxu0 %v239
    %2146 = vmatprep.subr.mxu0 %v244
    %2147 = vmatpush1.msra.mxu0 %v243
    %2148 = vmatprep.subr.mxu0 %v248
    %2149 = vmatpush1.msra.mxu0 %v247
    %2150 = vmatprep.mubr.f32.mxu0 %v1916
    %2151 = vmatmul.mubr.f32.gmra.mrb[0].mxu0 %v2085
    %v2152 = vpop.f32.mrb[0].mxu0
    %v2153 = vadd.f32 %v256, %v2152
    %v2154 = vpop.f32.mrb[0].mxu0
    %v2155 = vadd.f32 %v260, %v2154
    %2156 = vdwg.mxu0
    %2157 = vmatprep.subr.mxu0 %v126
    %2158 = vmatpush1.msra.mxu0 %v125
    %2159 = vmatprep.subr.mxu0 %v130
    %2160 = vmatpush1.msra.mxu0 %v129
    %2161 = vmatprep.subr.mxu0 %v134
    %2162 = vmatpush1.msra.mxu0 %v133
    %2163 = vmatprep.subr.mxu0 %v138
    %2164 = vmatpush1.msra.mxu0 %v137
    %2165 = vmatprep.subr.mxu0 %v142
    %2166 = vmatpush1.msra.mxu0 %v141
    %2167 = vmatprep.subr.mxu0 %v146
    %2168 = vmatpush1.msra.mxu0 %v145
    %2169 = vmatprep.subr.mxu0 %v150
    %2170 = vmatpush1.msra.mxu0 %v149
    %2171 = vmatprep.subr.mxu0 %v154
    %2172 = vmatpush1.msra.mxu0 %v153
    %2173 = vmatprep.subr.mxu0 %v158
    %2174 = vmatpush1.msra.mxu0 %v157
    %2175 = vmatprep.subr.mxu0 %v162
    %2176 = vmatpush1.msra.mxu0 %v161
    %2177 = vmatprep.subr.mxu0 %v166
    %2178 = vmatpush1.msra.mxu0 %v165
    %2179 = vmatprep.subr.mxu0 %v170
    %2180 = vmatpush1.msra.mxu0 %v169
    %2181 = vmatprep.subr.mxu0 %v174
    %2182 = vmatpush1.msra.mxu0 %v173
    %2183 = vmatprep.subr.mxu0 %v178
    %2184 = vmatpush1.msra.mxu0 %v177
    %2185 = vmatprep.subr.mxu0 %v182
    %2186 = vmatpush1.msra.mxu0 %v181
    %2187 = vmatprep.subr.mxu0 %v186
    %2188 = vmatpush1.msra.mxu0 %v185
    %2189 = vmatprep.subr.mxu0 %v190
    %2190 = vmatpush1.msra.mxu0 %v189
    %2191 = vmatprep.subr.mxu0 %v194
    %2192 = vmatpush1.msra.mxu0 %v193
    %2193 = vmatprep.subr.mxu0 %v198
    %2194 = vmatpush1.msra.mxu0 %v197
    %2195 = vmatprep.subr.mxu0 %v202
    %2196 = vmatpush1.msra.mxu0 %v201
    %2197 = vmatprep.subr.mxu0 %v206
    %2198 = vmatpush1.msra.mxu0 %v205
    %2199 = vmatprep.subr.mxu0 %v210
    %2200 = vmatpush1.msra.mxu0 %v209
    %2201 = vmatprep.subr.mxu0 %v214
    %2202 = vmatpush1.msra.mxu0 %v213
    %2203 = vmatprep.subr.mxu0 %v218
    %2204 = vmatpush1.msra.mxu0 %v217
    %2205 = vmatprep.subr.mxu0 %v222
    %2206 = vmatpush1.msra.mxu0 %v221
    %2207 = vmatprep.subr.mxu0 %v226
    %2208 = vmatpush1.msra.mxu0 %v225
    %2209 = vmatprep.subr.mxu0 %v230
    %2210 = vmatpush1.msra.mxu0 %v229
    %2211 = vmatprep.subr.mxu0 %v234
    %2212 = vmatpush1.msra.mxu0 %v233
    %2213 = vmatprep.subr.mxu0 %v238
    %2214 = vmatpush1.msra.mxu0 %v237
    %2215 = vmatprep.subr.mxu0 %v242
    %2216 = vmatpush1.msra.mxu0 %v241
    %2217 = vmatprep.subr.mxu0 %v246
    %2218 = vmatpush1.msra.mxu0 %v245
    %2219 = vmatprep.subr.mxu0 %v250
    %2220 = vmatpush1.msra.mxu0 %v249
    %2221 = vmatprep.mubr.f32.mxu0 %v1916
    %2222 = vmatmul.mubr.f32.gmra.mrb[0].mxu0 %v2085
    %v2223 = vpop.f32.mrb[0].mxu0
    %v2224 = vadd.f32 %v264, %v2223
    %v2225 = vpop.f32.mrb[0].mxu0
    %v2226 = vadd.f32 %v268, %v2225
    %2227 = vdwg.mxu0
    %v2228 = vmul.f32 %v2153, 0.5
    %v2229 = vtanh.pop %v2228
    %v2230 = vadd.f32 %v2229, 1.0
    %v2231 = vmul.f32 %v2230, 0.5
    %v2232 = vmul.f32 %v2155, 0.5
    %v2233 = vtanh.pop %v2232
    %v2234 = vadd.f32 %v2233, 1.0
    %v2235 = vmul.f32 %v2234, 0.5
    %v2236 = vtanh.pop %v2224
    %v2237 = vmul.f32 %v2226, 0.5
    %v2238 = vtanh.pop %v2237
    %v2239 = vadd.f32 %v2238, 1.0
    %v2240 = vmul.f32 %v2239, 0.5
    %v2241 = vmul.f32 %v2235, %v1914
    %v2242 = vmul.f32 %v2231, %v2236
    %v2243 = vadd.f32 %v2241, %v2242
    %v2244 = vtanh.pop %v2243
    %v2245 = vmul.f32 %v2240, %v2244
    %s2246 = scalar_lea.vmem [#allocation2], 192
    %v2247 = vld [vmem:[%s2246] sm:$0xff]
    %v2248 = vld [vmem:[%s2246 + $0x8] sm:$0xff]
    %v2249 = vld [vmem:[%s2246 + $0x10] sm:$0xff]
    %v2250 = vld [vmem:[%s2246 + $0x18] sm:$0xff]
    %2251 = vmatprep.subr.mxu0 %v60
    %2252 = vmatpush1.msra.mxu0 %v59
    %2253 = vmatprep.subr.mxu0 %v64
    %2254 = vmatpush1.msra.mxu0 %v63
    %2255 = vmatprep.subr.mxu0 %v68
    %2256 = vmatpush1.msra.mxu0 %v67
    %2257 = vmatprep.subr.mxu0 %v72
    %2258 = vmatpush1.msra.mxu0 %v71
    %2259 = vmatprep.subr.mxu0 %v76
    %2260 = vmatpush1.msra.mxu0 %v75
    %2261 = vmatprep.subr.mxu0 %v80
    %2262 = vmatpush1.msra.mxu0 %v79
    %2263 = vmatprep.subr.mxu0 %v84
    %2264 = vmatpush1.msra.mxu0 %v83
    %2265 = vmatprep.subr.mxu0 %v88
    %2266 = vmatpush1.msra.mxu0 %v87
    %2267 = vmatprep.subr.mxu0 %v92
    %2268 = vmatpush1.msra.mxu0 %v91
    %2269 = vmatprep.subr.mxu0 %v96
    %2270 = vmatpush1.msra.mxu0 %v95
    %2271 = vmatprep.subr.mxu0 %v100
    %2272 = vmatpush1.msra.mxu0 %v99
    %2273 = vmatprep.subr.mxu0 %v104
    %2274 = vmatpush1.msra.mxu0 %v103
    %2275 = vmatprep.subr.mxu0 %v108
    %2276 = vmatpush1.msra.mxu0 %v107
    %2277 = vmatprep.subr.mxu0 %v112
    %2278 = vmatpush1.msra.mxu0 %v111
    %2279 = vmatprep.subr.mxu0 %v116
    %2280 = vmatpush1.msra.mxu0 %v115
    %2281 = vmatprep.subr.mxu0 %v120
    %2282 = vmatpush1.msra.mxu0 %v119
    %2283 = vmatprep.subr.mxu0 0.0
    %2284 = vmatpush1.msra.mxu0 0.0
    %2285 = vmatprep.subr.mxu0 0.0
    %2286 = vmatpush1.msra.mxu0 0.0
    %2287 = vmatprep.subr.mxu0 0.0
    %2288 = vmatpush1.msra.mxu0 0.0
    %2289 = vmatprep.subr.mxu0 0.0
    %2290 = vmatpush1.msra.mxu0 0.0
    %2291 = vmatprep.subr.mxu0 0.0
    %2292 = vmatpush1.msra.mxu0 0.0
    %2293 = vmatprep.subr.mxu0 0.0
    %2294 = vmatpush1.msra.mxu0 0.0
    %2295 = vmatprep.subr.mxu0 0.0
    %2296 = vmatpush1.msra.mxu0 0.0
    %2297 = vmatprep.subr.mxu0 0.0
    %2298 = vmatpush1.msra.mxu0 0.0
    %2299 = vmatprep.subr.mxu0 0.0
    %2300 = vmatpush1.msra.mxu0 0.0
    %2301 = vmatprep.subr.mxu0 0.0
    %2302 = vmatpush1.msra.mxu0 0.0
    %2303 = vmatprep.subr.mxu0 0.0
    %2304 = vmatpush1.msra.mxu0 0.0
    %2305 = vmatprep.subr.mxu0 0.0
    %2306 = vmatpush1.msra.mxu0 0.0
    %2307 = vmatprep.subr.mxu0 0.0
    %2308 = vmatpush1.msra.mxu0 0.0
    %2309 = vmatprep.subr.mxu0 0.0
    %2310 = vmatpush1.msra.mxu0 0.0
    %2311 = vmatprep.subr.mxu0 0.0
    %2312 = vmatpush1.msra.mxu0 0.0
    %2313 = vmatprep.subr.mxu0 0.0
    %2314 = vmatpush1.msra.mxu0 0.0
    %2315 = vmatprep.mubr.f32.mxu0 0.0
    %2316 = vmatmul.mubr.f32.gmra.mrb[0].mxu0 %v2085
    %v2317 = vpop.f32.mrb[0].mxu0
    %v2318 = vadd.f32 0.0, %v2317
    %v2319 = vpop.f32.mrb[0].mxu0
    %v2320 = vadd.f32 0.0, %v2319
    %2321 = vdwg.mxu0
    %2322 = vmatprep.subr.mxu0 %v62
    %2323 = vmatpush1.msra.mxu0 %v61
    %2324 = vmatprep.subr.mxu0 %v66
    %2325 = vmatpush1.msra.mxu0 %v65
    %2326 = vmatprep.subr.mxu0 %v70
    %2327 = vmatpush1.msra.mxu0 %v69
    %2328 = vmatprep.subr.mxu0 %v74
    %2329 = vmatpush1.msra.mxu0 %v73
    %2330 = vmatprep.subr.mxu0 %v78
    %2331 = vmatpush1.msra.mxu0 %v77
    %2332 = vmatprep.subr.mxu0 %v82
    %2333 = vmatpush1.msra.mxu0 %v81
    %2334 = vmatprep.subr.mxu0 %v86
    %2335 = vmatpush1.msra.mxu0 %v85
    %2336 = vmatprep.subr.mxu0 %v90
    %2337 = vmatpush1.msra.mxu0 %v89
    %2338 = vmatprep.subr.mxu0 %v94
    %2339 = vmatpush1.msra.mxu0 %v93
    %2340 = vmatprep.subr.mxu0 %v98
    %2341 = vmatpush1.msra.mxu0 %v97
    %2342 = vmatprep.subr.mxu0 %v102
    %2343 = vmatpush1.msra.mxu0 %v101
    %2344 = vmatprep.subr.mxu0 %v106
    %2345 = vmatpush1.msra.mxu0 %v105
    %2346 = vmatprep.subr.mxu0 %v110
    %2347 = vmatpush1.msra.mxu0 %v109
    %2348 = vmatprep.subr.mxu0 %v114
    %2349 = vmatpush1.msra.mxu0 %v113
    %2350 = vmatprep.subr.mxu0 %v118
    %2351 = vmatpush1.msra.mxu0 %v117
    %2352 = vmatprep.subr.mxu0 %v122
    %2353 = vmatpush1.msra.mxu0 %v121
    %2354 = vmatprep.subr.mxu0 0.0
    %2355 = vmatpush1.msra.mxu0 0.0
    %2356 = vmatprep.subr.mxu0 0.0
    %2357 = vmatpush1.msra.mxu0 0.0
    %2358 = vmatprep.subr.mxu0 0.0
    %2359 = vmatpush1.msra.mxu0 0.0
    %2360 = vmatprep.subr.mxu0 0.0
    %2361 = vmatpush1.msra.mxu0 0.0
    %2362 = vmatprep.subr.mxu0 0.0
    %2363 = vmatpush1.msra.mxu0 0.0
    %2364 = vmatprep.subr.mxu0 0.0
    %2365 = vmatpush1.msra.mxu0 0.0
    %2366 = vmatprep.subr.mxu0 0.0
    %2367 = vmatpush1.msra.mxu0 0.0
    %2368 = vmatprep.subr.mxu0 0.0
    %2369 = vmatpush1.msra.mxu0 0.0
    %2370 = vmatprep.subr.mxu0 0.0
    %2371 = vmatpush1.msra.mxu0 0.0
    %2372 = vmatprep.subr.mxu0 0.0
    %2373 = vmatpush1.msra.mxu0 0.0
    %2374 = vmatprep.subr.mxu0 0.0
    %2375 = vmatpush1.msra.mxu0 0.0
    %2376 = vmatprep.subr.mxu0 0.0
    %2377 = vmatpush1.msra.mxu0 0.0
    %2378 = vmatprep.subr.mxu0 0.0
    %2379 = vmatpush1.msra.mxu0 0.0
    %2380 = vmatprep.subr.mxu0 0.0
    %2381 = vmatpush1.msra.mxu0 0.0
    %2382 = vmatprep.subr.mxu0 0.0
    %2383 = vmatpush1.msra.mxu0 0.0
    %2384 = vmatprep.subr.mxu0 0.0
    %2385 = vmatpush1.msra.mxu0 0.0
    %2386 = vmatprep.mubr.f32.mxu0 0.0
    %2387 = vmatmul.mubr.f32.gmra.mrb[0].mxu0 %v2085
    %v2388 = vpop.f32.mrb[0].mxu0
    %v2389 = vadd.f32 0.0, %v2388
    %v2390 = vpop.f32.mrb[0].mxu0
    %v2391 = vadd.f32 0.0, %v2390
    %2392 = vdwg.mxu0
    %v2393 = vadd.f32 %v2247, %v2318
    %v2394 = vadd.f32 %v2248, %v2320
    %v2395 = vadd.f32 %v2249, %v2389
    %v2396 = vadd.f32 %v2250, %v2391
    %v2397 = vmul.f32 %v2393, 0.5
    %v2398 = vtanh.pop %v2397
    %v2399 = vadd.f32 %v2398, 1.0
    %v2400 = vmul.f32 %v2399, 0.5
    %v2401 = vmul.f32 %v2394, 0.5
    %v2402 = vtanh.pop %v2401
    %v2403 = vadd.f32 %v2402, 1.0
    %v2404 = vmul.f32 %v2403, 0.5
    %v2405 = vtanh.pop %v2395
    %v2406 = vmul.f32 %v2396, 0.5
    %v2407 = vtanh.pop %v2406
    %v2408 = vadd.f32 %v2407, 1.0
    %v2409 = vmul.f32 %v2408, 0.5
    %v2410 = vmul.f32 %v2404, %v2083
    %v2411 = vmul.f32 %v2400, %v2405
    %v2412 = vadd.f32 %v2410, %v2411
    %v2413 = vtanh.pop %v2412
    %v2414 = vmul.f32 %v2409, %v2413
    %2415 = vmatprep.subr.mxu0 %v124
    %2416 = vmatpush1.msra.mxu0 %v123
    %2417 = vmatprep.subr.mxu0 %v128
    %2418 = vmatpush1.msra.mxu0 %v127
    %2419 = vmatprep.subr.mxu0 %v132
    %2420 = vmatpush1.msra.mxu0 %v131
    %2421 = vmatprep.subr.mxu0 %v136
    %2422 = vmatpush1.msra.mxu0 %v135
    %2423 = vmatprep.subr.mxu0 %v140
    %2424 = vmatpush1.msra.mxu0 %v139
    %2425 = vmatprep.subr.mxu0 %v144
    %2426 = vmatpush1.msra.mxu0 %v143
    %2427 = vmatprep.subr.mxu0 %v148
    %2428 = vmatpush1.msra.mxu0 %v147
    %2429 = vmatprep.subr.mxu0 %v152
    %2430 = vmatpush1.msra.mxu0 %v151
    %2431 = vmatprep.subr.mxu0 %v156
    %2432 = vmatpush1.msra.mxu0 %v155
    %2433 = vmatprep.subr.mxu0 %v160
    %2434 = vmatpush1.msra.mxu0 %v159
    %2435 = vmatprep.subr.mxu0 %v164
    %2436 = vmatpush1.msra.mxu0 %v163
    %2437 = vmatprep.subr.mxu0 %v168
    %2438 = vmatpush1.msra.mxu0 %v167
    %2439 = vmatprep.subr.mxu0 %v172
    %2440 = vmatpush1.msra.mxu0 %v171
    %2441 = vmatprep.subr.mxu0 %v176
    %2442 = vmatpush1.msra.mxu0 %v175
    %2443 = vmatprep.subr.mxu0 %v180
    %2444 = vmatpush1.msra.mxu0 %v179
    %2445 = vmatprep.subr.mxu0 %v184
    %2446 = vmatpush1.msra.mxu0 %v183
    %2447 = vmatprep.subr.mxu0 %v188
    %2448 = vmatpush1.msra.mxu0 %v187
    %2449 = vmatprep.subr.mxu0 %v192
    %2450 = vmatpush1.msra.mxu0 %v191
    %2451 = vmatprep.subr.mxu0 %v196
    %2452 = vmatpush1.msra.mxu0 %v195
    %2453 = vmatprep.subr.mxu0 %v200
    %2454 = vmatpush1.msra.mxu0 %v199
    %2455 = vmatprep.subr.mxu0 %v204
    %2456 = vmatpush1.msra.mxu0 %v203
    %2457 = vmatprep.subr.mxu0 %v208
    %2458 = vmatpush1.msra.mxu0 %v207
    %2459 = vmatprep.subr.mxu0 %v212
    %2460 = vmatpush1.msra.mxu0 %v211
    %2461 = vmatprep.subr.mxu0 %v216
    %2462 = vmatpush1.msra.mxu0 %v215
    %2463 = vmatprep.subr.mxu0 %v220
    %2464 = vmatpush1.msra.mxu0 %v219
    %2465 = vmatprep.subr.mxu0 %v224
    %2466 = vmatpush1.msra.mxu0 %v223
    %2467 = vmatprep.subr.mxu0 %v228
    %2468 = vmatpush1.msra.mxu0 %v227
    %2469 = vmatprep.subr.mxu0 %v232
    %2470 = vmatpush1.msra.mxu0 %v231
    %2471 = vmatprep.subr.mxu0 %v236
    %2472 = vmatpush1.msra.mxu0 %v235
    %2473 = vmatprep.subr.mxu0 %v240
    %2474 = vmatpush1.msra.mxu0 %v239
    %2475 = vmatprep.subr.mxu0 %v244
    %2476 = vmatpush1.msra.mxu0 %v243
    %2477 = vmatprep.subr.mxu0 %v248
    %2478 = vmatpush1.msra.mxu0 %v247
    %2479 = vmatprep.mubr.f32.mxu0 %v2245
    %2480 = vmatmul.mubr.f32.gmra.mrb[0].mxu0 %v2414
    %v2481 = vpop.f32.mrb[0].mxu0
    %v2482 = vadd.f32 %v256, %v2481
    %v2483 = vpop.f32.mrb[0].mxu0
    %v2484 = vadd.f32 %v260, %v2483
    %2485 = vdwg.mxu0
    %2486 = vmatprep.subr.mxu0 %v126
    %2487 = vmatpush1.msra.mxu0 %v125
    %2488 = vmatprep.subr.mxu0 %v130
    %2489 = vmatpush1.msra.mxu0 %v129
    %2490 = vmatprep.subr.mxu0 %v134
    %2491 = vmatpush1.msra.mxu0 %v133
    %2492 = vmatprep.subr.mxu0 %v138
    %2493 = vmatpush1.msra.mxu0 %v137
    %2494 = vmatprep.subr.mxu0 %v142
    %2495 = vmatpush1.msra.mxu0 %v141
    %2496 = vmatprep.subr.mxu0 %v146
    %2497 = vmatpush1.msra.mxu0 %v145
    %2498 = vmatprep.subr.mxu0 %v150
    %2499 = vmatpush1.msra.mxu0 %v149
    %2500 = vmatprep.subr.mxu0 %v154
    %2501 = vmatpush1.msra.mxu0 %v153
    %2502 = vmatprep.subr.mxu0 %v158
    %2503 = vmatpush1.msra.mxu0 %v157
    %2504 = vmatprep.subr.mxu0 %v162
    %2505 = vmatpush1.msra.mxu0 %v161
    %2506 = vmatprep.subr.mxu0 %v166
    %2507 = vmatpush1.msra.mxu0 %v165
    %2508 = vmatprep.subr.mxu0 %v170
    %2509 = vmatpush1.msra.mxu0 %v169
    %2510 = vmatprep.subr.mxu0 %v174
    %2511 = vmatpush1.msra.mxu0 %v173
    %2512 = vmatprep.subr.mxu0 %v178
    %2513 = vmatpush1.msra.mxu0 %v177
    %2514 = vmatprep.subr.mxu0 %v182
    %2515 = vmatpush1.msra.mxu0 %v181
    %2516 = vmatprep.subr.mxu0 %v186
    %2517 = vmatpush1.msra.mxu0 %v185
    %2518 = vmatprep.subr.mxu0 %v190
    %2519 = vmatpush1.msra.mxu0 %v189
    %2520 = vmatprep.subr.mxu0 %v194
    %2521 = vmatpush1.msra.mxu0 %v193
    %2522 = vmatprep.subr.mxu0 %v198
    %2523 = vmatpush1.msra.mxu0 %v197
    %2524 = vmatprep.subr.mxu0 %v202
    %2525 = vmatpush1.msra.mxu0 %v201
    %2526 = vmatprep.subr.mxu0 %v206
    %2527 = vmatpush1.msra.mxu0 %v205
    %2528 = vmatprep.subr.mxu0 %v210
    %2529 = vmatpush1.msra.mxu0 %v209
    %2530 = vmatprep.subr.mxu0 %v214
    %2531 = vmatpush1.msra.mxu0 %v213
    %2532 = vmatprep.subr.mxu0 %v218
    %2533 = vmatpush1.msra.mxu0 %v217
    %2534 = vmatprep.subr.mxu0 %v222
    %2535 = vmatpush1.msra.mxu0 %v221
    %2536 = vmatprep.subr.mxu0 %v226
    %2537 = vmatpush1.msra.mxu0 %v225
    %2538 = vmatprep.subr.mxu0 %v230
    %2539 = vmatpush1.msra.mxu0 %v229
    %2540 = vmatprep.subr.mxu0 %v234
    %2541 = vmatpush1.msra.mxu0 %v233
    %2542 = vmatprep.subr.mxu0 %v238
    %2543 = vmatpush1.msra.mxu0 %v237
    %2544 = vmatprep.subr.mxu0 %v242
    %2545 = vmatpush1.msra.mxu0 %v241
    %2546 = vmatprep.subr.mxu0 %v246
    %2547 = vmatpush1.msra.mxu0 %v245
    %2548 = vmatprep.subr.mxu0 %v250
    %2549 = vmatpush1.msra.mxu0 %v249
    %2550 = vmatprep.mubr.f32.mxu0 %v2245
    %2551 = vmatmul.mubr.f32.gmra.mrb[0].mxu0 %v2414
    %v2552 = vpop.f32.mrb[0].mxu0
    %v2553 = vadd.f32 %v264, %v2552
    %v2554 = vpop.f32.mrb[0].mxu0
    %v2555 = vadd.f32 %v268, %v2554
    %2556 = vdwg.mxu0
    %v2557 = vmul.f32 %v2482, 0.5
    %v2558 = vtanh.pop %v2557
    %v2559 = vadd.f32 %v2558, 1.0
    %v2560 = vmul.f32 %v2559, 0.5
    %v2561 = vmul.f32 %v2484, 0.5
    %v2562 = vtanh.pop %v2561
    %v2563 = vadd.f32 %v2562, 1.0
    %v2564 = vmul.f32 %v2563, 0.5
    %v2565 = vtanh.pop %v2553
    %v2566 = vmul.f32 %v2555, 0.5
    %v2567 = vtanh.pop %v2566
    %v2568 = vadd.f32 %v2567, 1.0
    %v2569 = vmul.f32 %v2568, 0.5
    %v2570 = vmul.f32 %v2564, %v2243
    %v2571 = vmul.f32 %v2560, %v2565
    %v2572 = vadd.f32 %v2570, %v2571
    %v2573 = vtanh.pop %v2572
    %v2574 = vmul.f32 %v2569, %v2573
    %s2575 = scalar_lea.vmem [#allocation2], 224
    %v2576 = vld [vmem:[%s2575] sm:$0xff]
    %v2577 = vld [vmem:[%s2575 + $0x8] sm:$0xff]
    %v2578 = vld [vmem:[%s2575 + $0x10] sm:$0xff]
    %v2579 = vld [vmem:[%s2575 + $0x18] sm:$0xff]
    %2580 = vmatprep.subr.mxu0 %v60
    %2581 = vmatpush1.msra.mxu0 %v59
    %2582 = vmatprep.subr.mxu0 %v64
    %2583 = vmatpush1.msra.mxu0 %v63
    %2584 = vmatprep.subr.mxu0 %v68
    %2585 = vmatpush1.msra.mxu0 %v67
    %2586 = vmatprep.subr.mxu0 %v72
    %2587 = vmatpush1.msra.mxu0 %v71
    %2588 = vmatprep.subr.mxu0 %v76
    %2589 = vmatpush1.msra.mxu0 %v75
    %2590 = vmatprep.subr.mxu0 %v80
    %2591 = vmatpush1.msra.mxu0 %v79
    %2592 = vmatprep.subr.mxu0 %v84
    %2593 = vmatpush1.msra.mxu0 %v83
    %2594 = vmatprep.subr.mxu0 %v88
    %2595 = vmatpush1.msra.mxu0 %v87
    %2596 = vmatprep.subr.mxu0 %v92
    %2597 = vmatpush1.msra.mxu0 %v91
    %2598 = vmatprep.subr.mxu0 %v96
    %2599 = vmatpush1.msra.mxu0 %v95
    %2600 = vmatprep.subr.mxu0 %v100
    %2601 = vmatpush1.msra.mxu0 %v99
    %2602 = vmatprep.subr.mxu0 %v104
    %2603 = vmatpush1.msra.mxu0 %v103
    %2604 = vmatprep.subr.mxu0 %v108
    %2605 = vmatpush1.msra.mxu0 %v107
    %2606 = vmatprep.subr.mxu0 %v112
    %2607 = vmatpush1.msra.mxu0 %v111
    %2608 = vmatprep.subr.mxu0 %v116
    %2609 = vmatpush1.msra.mxu0 %v115
    %2610 = vmatprep.subr.mxu0 %v120
    %2611 = vmatpush1.msra.mxu0 %v119
    %2612 = vmatprep.subr.mxu0 0.0
    %2613 = vmatpush1.msra.mxu0 0.0
    %2614 = vmatprep.subr.mxu0 0.0
    %2615 = vmatpush1.msra.mxu0 0.0
    %2616 = vmatprep.subr.mxu0 0.0
    %2617 = vmatpush1.msra.mxu0 0.0
    %2618 = vmatprep.subr.mxu0 0.0
    %2619 = vmatpush1.msra.mxu0 0.0
    %2620 = vmatprep.subr.mxu0 0.0
    %2621 = vmatpush1.msra.mxu0 0.0
    %2622 = vmatprep.subr.mxu0 0.0
    %2623 = vmatpush1.msra.mxu0 0.0
    %2624 = vmatprep.subr.mxu0 0.0
    %2625 = vmatpush1.msra.mxu0 0.0
    %2626 = vmatprep.subr.mxu0 0.0
    %2627 = vmatpush1.msra.mxu0 0.0
    %2628 = vmatprep.subr.mxu0 0.0
    %2629 = vmatpush1.msra.mxu0 0.0
    %2630 = vmatprep.subr.mxu0 0.0
    %2631 = vmatpush1.msra.mxu0 0.0
    %2632 = vmatprep.subr.mxu0 0.0
    %2633 = vmatpush1.msra.mxu0 0.0
    %2634 = vmatprep.subr.mxu0 0.0
    %2635 = vmatpush1.msra.mxu0 0.0
    %2636 = vmatprep.subr.mxu0 0.0
    %2637 = vmatpush1.msra.mxu0 0.0
    %2638 = vmatprep.subr.mxu0 0.0
    %2639 = vmatpush1.msra.mxu0 0.0
    %2640 = vmatprep.subr.mxu0 0.0
    %2641 = vmatpush1.msra.mxu0 0.0
    %2642 = vmatprep.subr.mxu0 0.0
    %2643 = vmatpush1.msra.mxu0 0.0
    %2644 = vmatprep.mubr.f32.mxu0 0.0
    %2645 = vmatmul.mubr.f32.gmra.mrb[0].mxu0 %v2414
    %v2646 = vpop.f32.mrb[0].mxu0
    %v2647 = vadd.f32 0.0, %v2646
    %v2648 = vpop.f32.mrb[0].mxu0
    %v2649 = vadd.f32 0.0, %v2648
    %2650 = vdwg.mxu0
    %2651 = vmatprep.subr.mxu0 %v62
    %2652 = vmatpush1.msra.mxu0 %v61
    %2653 = vmatprep.subr.mxu0 %v66
    %2654 = vmatpush1.msra.mxu0 %v65
    %2655 = vmatprep.subr.mxu0 %v70
    %2656 = vmatpush1.msra.mxu0 %v69
    %2657 = vmatprep.subr.mxu0 %v74
    %2658 = vmatpush1.msra.mxu0 %v73
    %2659 = vmatprep.subr.mxu0 %v78
    %2660 = vmatpush1.msra.mxu0 %v77
    %2661 = vmatprep.subr.mxu0 %v82
    %2662 = vmatpush1.msra.mxu0 %v81
    %2663 = vmatprep.subr.mxu0 %v86
    %2664 = vmatpush1.msra.mxu0 %v85
    %2665 = vmatprep.subr.mxu0 %v90
    %2666 = vmatpush1.msra.mxu0 %v89
    %2667 = vmatprep.subr.mxu0 %v94
    %2668 = vmatpush1.msra.mxu0 %v93
    %2669 = vmatprep.subr.mxu0 %v98
    %2670 = vmatpush1.msra.mxu0 %v97
    %2671 = vmatprep.subr.mxu0 %v102
    %2672 = vmatpush1.msra.mxu0 %v101
    %2673 = vmatprep.subr.mxu0 %v106
    %2674 = vmatpush1.msra.mxu0 %v105
    %2675 = vmatprep.subr.mxu0 %v110
    %2676 = vmatpush1.msra.mxu0 %v109
    %2677 = vmatprep.subr.mxu0 %v114
    %2678 = vmatpush1.msra.mxu0 %v113
    %2679 = vmatprep.subr.mxu0 %v118
    %2680 = vmatpush1.msra.mxu0 %v117
    %2681 = vmatprep.subr.mxu0 %v122
    %2682 = vmatpush1.msra.mxu0 %v121
    %2683 = vmatprep.subr.mxu0 0.0
    %2684 = vmatpush1.msra.mxu0 0.0
    %2685 = vmatprep.subr.mxu0 0.0
    %2686 = vmatpush1.msra.mxu0 0.0
    %2687 = vmatprep.subr.mxu0 0.0
    %2688 = vmatpush1.msra.mxu0 0.0
    %2689 = vmatprep.subr.mxu0 0.0
    %2690 = vmatpush1.msra.mxu0 0.0
    %2691 = vmatprep.subr.mxu0 0.0
    %2692 = vmatpush1.msra.mxu0 0.0
    %2693 = vmatprep.subr.mxu0 0.0
    %2694 = vmatpush1.msra.mxu0 0.0
    %2695 = vmatprep.subr.mxu0 0.0
    %2696 = vmatpush1.msra.mxu0 0.0
    %2697 = vmatprep.subr.mxu0 0.0
    %2698 = vmatpush1.msra.mxu0 0.0
    %2699 = vmatprep.subr.mxu0 0.0
    %2700 = vmatpush1.msra.mxu0 0.0
    %2701 = vmatprep.subr.mxu0 0.0
    %2702 = vmatpush1.msra.mxu0 0.0
    %2703 = vmatprep.subr.mxu0 0.0
    %2704 = vmatpush1.msra.mxu0 0.0
    %2705 = vmatprep.subr.mxu0 0.0
    %2706 = vmatpush1.msra.mxu0 0.0
    %2707 = vmatprep.subr.mxu0 0.0
    %2708 = vmatpush1.msra.mxu0 0.0
    %2709 = vmatprep.subr.mxu0 0.0
    %2710 = vmatpush1.msra.mxu0 0.0
    %2711 = vmatprep.subr.mxu0 0.0
    %2712 = vmatpush1.msra.mxu0 0.0
    %2713 = vmatprep.subr.mxu0 0.0
    %2714 = vmatpush1.msra.mxu0 0.0
    %2715 = vmatprep.mubr.f32.mxu0 0.0
    %2716 = vmatmul.mubr.f32.gmra.mrb[0].mxu0 %v2414
    %v2717 = vpop.f32.mrb[0].mxu0
    %v2718 = vadd.f32 0.0, %v2717
    %v2719 = vpop.f32.mrb[0].mxu0
    %v2720 = vadd.f32 0.0, %v2719
    %2721 = vdwg.mxu0
    %v2722 = vadd.f32 %v2576, %v2647
    %v2723 = vadd.f32 %v2577, %v2649
    %v2724 = vadd.f32 %v2578, %v2718
    %v2725 = vadd.f32 %v2579, %v2720
    %v2726 = vmul.f32 %v2722, 0.5
    %v2727 = vtanh.pop %v2726
    %v2728 = vadd.f32 %v2727, 1.0
    %v2729 = vmul.f32 %v2728, 0.5
    %v2730 = vmul.f32 %v2723, 0.5
    %v2731 = vtanh.pop %v2730
    %v2732 = vadd.f32 %v2731, 1.0
    %v2733 = vmul.f32 %v2732, 0.5
    %v2734 = vtanh.pop %v2724
    %v2735 = vmul.f32 %v2725, 0.5
    %v2736 = vtanh.pop %v2735
    %v2737 = vadd.f32 %v2736, 1.0
    %v2738 = vmul.f32 %v2737, 0.5
    %v2739 = vmul.f32 %v2733, %v2412
    %v2740 = vmul.f32 %v2729, %v2734
    %v2741 = vadd.f32 %v2739, %v2740
    %v2742 = vtanh.pop %v2741
    %v2743 = vmul.f32 %v2738, %v2742
    %2744 = vmatprep.subr.mxu0 %v124
    %2745 = vmatpush1.msra.mxu0 %v123
    %2746 = vmatprep.subr.mxu0 %v128
    %2747 = vmatpush1.msra.mxu0 %v127
    %2748 = vmatprep.subr.mxu0 %v132
    %2749 = vmatpush1.msra.mxu0 %v131
    %2750 = vmatprep.subr.mxu0 %v136
    %2751 = vmatpush1.msra.mxu0 %v135
    %2752 = vmatprep.subr.mxu0 %v140
    %2753 = vmatpush1.msra.mxu0 %v139
    %2754 = vmatprep.subr.mxu0 %v144
    %2755 = vmatpush1.msra.mxu0 %v143
    %2756 = vmatprep.subr.mxu0 %v148
    %2757 = vmatpush1.msra.mxu0 %v147
    %2758 = vmatprep.subr.mxu0 %v152
    %2759 = vmatpush1.msra.mxu0 %v151
    %2760 = vmatprep.subr.mxu0 %v156
    %2761 = vmatpush1.msra.mxu0 %v155
    %2762 = vmatprep.subr.mxu0 %v160
    %2763 = vmatpush1.msra.mxu0 %v159
    %2764 = vmatprep.subr.mxu0 %v164
    %2765 = vmatpush1.msra.mxu0 %v163
    %2766 = vmatprep.subr.mxu0 %v168
    %2767 = vmatpush1.msra.mxu0 %v167
    %2768 = vmatprep.subr.mxu0 %v172
    %2769 = vmatpush1.msra.mxu0 %v171
    %2770 = vmatprep.subr.mxu0 %v176
    %2771 = vmatpush1.msra.mxu0 %v175
    %2772 = vmatprep.subr.mxu0 %v180
    %2773 = vmatpush1.msra.mxu0 %v179
    %2774 = vmatprep.subr.mxu0 %v184
    %2775 = vmatpush1.msra.mxu0 %v183
    %2776 = vmatprep.subr.mxu0 %v188
    %2777 = vmatpush1.msra.mxu0 %v187
    %2778 = vmatprep.subr.mxu0 %v192
    %2779 = vmatpush1.msra.mxu0 %v191
    %2780 = vmatprep.subr.mxu0 %v196
    %2781 = vmatpush1.msra.mxu0 %v195
    %2782 = vmatprep.subr.mxu0 %v200
    %2783 = vmatpush1.msra.mxu0 %v199
    %2784 = vmatprep.subr.mxu0 %v204
    %2785 = vmatpush1.msra.mxu0 %v203
    %2786 = vmatprep.subr.mxu0 %v208
    %2787 = vmatpush1.msra.mxu0 %v207
    %2788 = vmatprep.subr.mxu0 %v212
    %2789 = vmatpush1.msra.mxu0 %v211
    %2790 = vmatprep.subr.mxu0 %v216
    %2791 = vmatpush1.msra.mxu0 %v215
    %2792 = vmatprep.subr.mxu0 %v220
    %2793 = vmatpush1.msra.mxu0 %v219
    %2794 = vmatprep.subr.mxu0 %v224
    %2795 = vmatpush1.msra.mxu0 %v223
    %2796 = vmatprep.subr.mxu0 %v228
    %2797 = vmatpush1.msra.mxu0 %v227
    %2798 = vmatprep.subr.mxu0 %v232
    %2799 = vmatpush1.msra.mxu0 %v231
    %2800 = vmatprep.subr.mxu0 %v236
    %2801 = vmatpush1.msra.mxu0 %v235
    %2802 = vmatprep.subr.mxu0 %v240
    %2803 = vmatpush1.msra.mxu0 %v239
    %2804 = vmatprep.subr.mxu0 %v244
    %2805 = vmatpush1.msra.mxu0 %v243
    %2806 = vmatprep.subr.mxu0 %v248
    %2807 = vmatpush1.msra.mxu0 %v247
    %2808 = vmatprep.mubr.f32.mxu0 %v2574
    %2809 = vmatmul.mubr.f32.gmra.mrb[0].mxu0 %v2743
    %v2810 = vpop.f32.mrb[0].mxu0
    %v2811 = vadd.f32 %v256, %v2810
    %v2812 = vpop.f32.mrb[0].mxu0
    %v2813 = vadd.f32 %v260, %v2812
    %2814 = vdwg.mxu0
    %2815 = vmatprep.subr.mxu0 %v126
    %2816 = vmatpush1.msra.mxu0 %v125
    %2817 = vmatprep.subr.mxu0 %v130
    %2818 = vmatpush1.msra.mxu0 %v129
    %2819 = vmatprep.subr.mxu0 %v134
    %2820 = vmatpush1.msra.mxu0 %v133
    %2821 = vmatprep.subr.mxu0 %v138
    %2822 = vmatpush1.msra.mxu0 %v137
    %2823 = vmatprep.subr.mxu0 %v142
    %2824 = vmatpush1.msra.mxu0 %v141
    %2825 = vmatprep.subr.mxu0 %v146
    %2826 = vmatpush1.msra.mxu0 %v145
    %2827 = vmatprep.subr.mxu0 %v150
    %2828 = vmatpush1.msra.mxu0 %v149
    %2829 = vmatprep.subr.mxu0 %v154
    %2830 = vmatpush1.msra.mxu0 %v153
    %2831 = vmatprep.subr.mxu0 %v158
    %2832 = vmatpush1.msra.mxu0 %v157
    %2833 = vmatprep.subr.mxu0 %v162
    %2834 = vmatpush1.msra.mxu0 %v161
    %2835 = vmatprep.subr.mxu0 %v166
    %2836 = vmatpush1.msra.mxu0 %v165
    %2837 = vmatprep.subr.mxu0 %v170
    %2838 = vmatpush1.msra.mxu0 %v169
    %2839 = vmatprep.subr.mxu0 %v174
    %2840 = vmatpush1.msra.mxu0 %v173
    %2841 = vmatprep.subr.mxu0 %v178
    %2842 = vmatpush1.msra.mxu0 %v177
    %2843 = vmatprep.subr.mxu0 %v182
    %2844 = vmatpush1.msra.mxu0 %v181
    %2845 = vmatprep.subr.mxu0 %v186
    %2846 = vmatpush1.msra.mxu0 %v185
    %2847 = vmatprep.subr.mxu0 %v190
    %2848 = vmatpush1.msra.mxu0 %v189
    %2849 = vmatprep.subr.mxu0 %v194
    %2850 = vmatpush1.msra.mxu0 %v193
    %2851 = vmatprep.subr.mxu0 %v198
    %2852 = vmatpush1.msra.mxu0 %v197
    %2853 = vmatprep.subr.mxu0 %v202
    %2854 = vmatpush1.msra.mxu0 %v201
    %2855 = vmatprep.subr.mxu0 %v206
    %2856 = vmatpush1.msra.mxu0 %v205
    %2857 = vmatprep.subr.mxu0 %v210
    %2858 = vmatpush1.msra.mxu0 %v209
    %2859 = vmatprep.subr.mxu0 %v214
    %2860 = vmatpush1.msra.mxu0 %v213
    %2861 = vmatprep.subr.mxu0 %v218
    %2862 = vmatpush1.msra.mxu0 %v217
    %2863 = vmatprep.subr.mxu0 %v222
    %2864 = vmatpush1.msra.mxu0 %v221
    %2865 = vmatprep.subr.mxu0 %v226
    %2866 = vmatpush1.msra.mxu0 %v225
    %2867 = vmatprep.subr.mxu0 %v230
    %2868 = vmatpush1.msra.mxu0 %v229
    %2869 = vmatprep.subr.mxu0 %v234
    %2870 = vmatpush1.msra.mxu0 %v233
    %2871 = vmatprep.subr.mxu0 %v238
    %2872 = vmatpush1.msra.mxu0 %v237
    %2873 = vmatprep.subr.mxu0 %v242
    %2874 = vmatpush1.msra.mxu0 %v241
    %2875 = vmatprep.subr.mxu0 %v246
    %2876 = vmatpush1.msra.mxu0 %v245
    %2877 = vmatprep.subr.mxu0 %v250
    %2878 = vmatpush1.msra.mxu0 %v249
    %2879 = vmatprep.mubr.f32.mxu0 %v2574
    %2880 = vmatmul.mubr.f32.gmra.mrb[0].mxu0 %v2743
    %v2881 = vpop.f32.mrb[0].mxu0
    %v2882 = vadd.f32 %v264, %v2881
    %v2883 = vpop.f32.mrb[0].mxu0
    %v2884 = vadd.f32 %v268, %v2883
    %2885 = vdwg.mxu0
    %v2886 = vmul.f32 %v2811, 0.5
    %v2887 = vtanh.pop %v2886
    %v2888 = vadd.f32 %v2887, 1.0
    %v2889 = vmul.f32 %v2888, 0.5
    %v2890 = vmul.f32 %v2813, 0.5
    %v2891 = vtanh.pop %v2890
    %v2892 = vadd.f32 %v2891, 1.0
    %v2893 = vmul.f32 %v2892, 0.5
    %v2894 = vtanh.pop %v2882
    %v2895 = vmul.f32 %v2884, 0.5
    %v2896 = vtanh.pop %v2895
    %v2897 = vadd.f32 %v2896, 1.0
    %v2898 = vmul.f32 %v2897, 0.5
    %v2899 = vmul.f32 %v2893, %v2572
    %v2900 = vmul.f32 %v2889, %v2894
    %v2901 = vadd.f32 %v2899, %v2900
    %v2902 = vtanh.pop %v2901
    %v2903 = vmul.f32 %v2898, %v2902
    %2904 = vst [vmem:[#allocation8] sm:$0xff] %v2903
    // Predicated region
    $region30: #{tpu_custom_call.1} parent=1 // pred_check
      _
    $region31: #{tpu_custom_call.1} parent=1 // pred_check_branch
      %2906 = sbr.rel (0) target = $region33
    $region32: #{tpu_custom_call.1} parent=1 // pred_region
      %s2908 = ssub.s32 128, 128
      %2909 = vsyncadd [#allocation4], %s2908
      %s2911 = sshll.u32 [#allocation8], 4
      %s2912 = int_to_ptr.vmem [resolvable:$true] %s2911
      %2914 = dma.vmem_to_hbm [thread:$0]  %s2912, 128, %s4, [#allocation4]
    $region33: #{tpu_custom_call.1} parent=1 // pred_fallthru
      _
    // Predicated region
    $region34: #{tpu_custom_call.1} parent=1 // pred_check
      _
    $region35: #{tpu_custom_call.1} parent=1 // pred_check_branch
      %2916 = sbr.rel (0) target = $region37
    $region36: #{tpu_custom_call.1} parent=1 // pred_region
      %2917 = dma.done [#allocation4], 128
    $region37: #{tpu_custom_call.1} parent=1 // pred_fallthru
      _
    %2918 = vsyncpa [#allocation3], 1
    %2919 = vsyncpa [#allocation6], 1
    %2920 = vsyncpa [#allocation4], 1

</llo_original>
